<compile_context>
chip_gen: v5e
topology: v5e:2x2
jax: 0.10.0
libtpu: 0.0.40
codegen_flags: <defaults>
</compile_context>

<pallas_src>
import numpy as np

import jax
import jax.numpy as jnp
from jax.experimental import pallas as pl
from jax.experimental.pallas import tpu as pltpu

_BN_EPS = 1e-5
_NEG = -1e30
_LANE = 128
_VMEM = pl.BlockSpec(memory_space=pltpu.MemorySpace.VMEM)


def _round_up(x, m):
    return (x + m - 1) // m * m


# ---------------------------------------------------------------------------
# Host-side packing of all static operands into two flat buffers
# ---------------------------------------------------------------------------
class _Packer:
    """Packs many small 2-D arrays into one (rows, width) buffer with
    tile-aligned row offsets so the kernel needs ONE input DMA per dtype."""

    def __init__(self, width, row_align, dtype):
        self.width = width
        self.row_align = row_align
        self.dtype = dtype
        self.pieces = []
        self.rows = 0

    def add(self, arr):
        arr = np.asarray(arr, dtype=np.float32)
        if arr.ndim == 1:
            arr = arr[None, :]
        r, c = arr.shape
        assert c <= self.width, (c, self.width)
        off = self.rows
        self.pieces.append((off, arr))
        self.rows = _round_up(off + r, self.row_align)
        return off

    def finalize(self):
        total = max(_round_up(self.rows, self.row_align), self.row_align)
        buf = np.zeros((total, self.width), dtype=np.float32)
        for off, a in self.pieces:
            buf[off:off + a.shape[0], :a.shape[1]] = a
        return jnp.asarray(buf, self.dtype)


def _conv_taps(B, Lin, Lout, K, stride, pad):
    """Per-tap (B*Lout, B*Lin) 0/1 selection matrices (stride, zero padding and
    per-batch boundaries baked in) and per-tap row validity flags."""
    sels, valid = [], []
    for k in range(K):
        S = np.zeros((B * Lout, B * Lin), np.float32)
        V = np.zeros((B * Lout,), np.float32)
        for b in range(B):
            for o in range(Lout):
                src = stride * o + k - pad
                if 0 <= src < Lin:
                    S[b * Lout + o, b * Lin + src] = 1.0
                    V[b * Lout + o] = 1.0
        sels.append(S)
        valid.append(V)
    return sels, valid


# ---------------------------------------------------------------------------
# Fused whole-network kernel, generated from a static plan
# ---------------------------------------------------------------------------
def _make_kernel(plan, out_cols):
    def kernel(x_ref, w_ref, v_ref, o_ref):
        env = {'h': x_ref[...].astype(jnp.float32)}   # activations: (B*L, C) slabs
        for st in plan:
            kind = st['kind']
            if kind == 'conv_bn':
                h16 = env[st['src']].astype(jnp.bfloat16)
                if st['taps'] is None:                # k=1, stride=1 -> plain matmul
                    slab = h16
                else:
                    parts = []
                    for (soff, rout, rin) in st['taps']:
                        sel = w_ref[soff:soff + rout, 0:rin]
                        tap = jnp.dot(sel, h16, preferred_element_type=jnp.float32)
                        # exact 0/1 selection of bf16 values -> lossless downcast
                        parts.append(tap.astype(jnp.bfloat16))
                    slab = parts[0] if len(parts) == 1 else jnp.concatenate(parts, axis=1)
                w = w_ref[st['woff']:st['woff'] + st['wrows'], 0:st['cout']]
                y = jnp.dot(slab, w, preferred_element_type=jnp.float32)
                # Training-mode BatchNorm1d: biased batch stats over all rows.
                gb = v_ref[st['bnoff']:st['bnoff'] + 2, 0:st['cout']]
                mean = jnp.mean(y, axis=0, keepdims=True)
                var = jnp.mean(jnp.square(y - mean), axis=0, keepdims=True)
                y = (y - mean) * jax.lax.rsqrt(var + _BN_EPS) * gb[0:1, :] + gb[1:2, :]
                if st['res'] is not None:
                    y = y + env[st['res']]
                if st['tanh']:
                    y = jnp.tanh(y)
                env[st['dst']] = y
            elif kind == 'maxpool':
                h16 = env[st['src']].astype(jnp.bfloat16)
                bias = v_ref[st['boff']:st['boff'] + st['rout'], 0:st['K']]
                out = None
                for k, (soff, rout, rin) in enumerate(st['taps']):
                    sel = w_ref[soff:soff + rout, 0:rin]
                    tap = jnp.dot(sel, h16, preferred_element_type=jnp.float32)
                    tap = tap + bias[:, k:k + 1]      # 0 (valid) or -1e30 (padded)
                    out = tap if out is None else jnp.maximum(out, tap)
                env[st['dst']] = out
            elif kind == 'alias':
                env[st['dst']] = env[st['src']]
            elif kind == 'head':
                h = env[st['src']]
                if st['pool'] is not None:            # only if feature length > 1
                    poff, prow, pcol = st['pool']
                    pool = w_ref[poff:poff + prow, 0:pcol]
                    h = jnp.dot(pool, h.astype(jnp.bfloat16),
                                preferred_element_type=jnp.float32)
                w = w_ref[st['woff']:st['woff'] + st['wrows'], 0:out_cols]
                b = v_ref[st['boff']:st['boff'] + 1, 0:out_cols]
                logits = jnp.dot(h.astype(jnp.bfloat16), w,
                                 preferred_element_type=jnp.float32) + b
                o_ref[...] = jnp.tanh(logits)
    return kernel


# ---------------------------------------------------------------------------
# Build: pack parameters + static selection matrices, emit the fused kernel
# ---------------------------------------------------------------------------
def build_encoder(params, B, L, n_feature):
    num_hidden = int(np.asarray(params['out_w']).shape[0])
    hpad = _round_up(num_hidden, _LANE)

    wpack = _Packer(width=512, row_align=16, dtype=jnp.bfloat16)  # MXU operands
    vpack = _Packer(width=512, row_align=8, dtype=jnp.float32)    # VPU operands
    plan = []

    def add_conv_bn(src, dst, w, bn, K, stride, pad, Lin, tanh=True, res=None):
        w = np.asarray(w, np.float32)                 # PyTorch layout (Cout, Cin, K)
        cout, cin, _ = w.shape
        Lout = (Lin + 2 * pad - K) // stride + 1
        w_im2col = np.transpose(w, (2, 1, 0)).reshape(K * cin, cout)
        woff = wpack.add(w_im2col)
        taps = None
        if K > 1 or stride > 1:
            sels, _ = _conv_taps(B, Lin, Lout, K, stride, pad)
            taps = [(wpack.add(S), B * Lout, B * Lin) for S in sels]
        gamma = np.asarray(bn[0], np.float32)
        beta = np.asarray(bn[1], np.float32)
        bnoff = vpack.add(np.stack([gamma, beta], axis=0))
        plan.append(dict(kind='conv_bn', src=src, dst=dst, taps=taps,
                         woff=woff, wrows=K * cin, cout=cout, bnoff=bnoff,
                         tanh=tanh, res=res))
        return Lout

    # --- stem: emb1/BN1/tanh, emb2/BN2/tanh, emb3/BN3/tanh, MaxPool1d ---
    Lc = L
    Lc = add_conv_bn('h', 'h', params['emb1_w'], params['bn1'], 1, 1, 0, Lc)
    Lc = add_conv_bn('h', 'h', params['emb2_w'], params['bn2'], 3, 1, 1, Lc)
    Lc = add_conv_bn('h', 'h', params['emb3_w'], params['bn3'], 7, 2, 3, Lc)

    K, stride, pad = 3, 2, 1
    Lout = (Lc + 2 * pad - K) // stride + 1
    sels, valid = _conv_taps(B, Lc, Lout, K, stride, pad)
    taps = [(wpack.add(S), B * Lout, B * Lc) for S in sels]
    bias = np.stack([np.where(v > 0, 0.0, _NEG) for v in valid], axis=1)
    boff = vpack.add(bias)
    plan.append(dict(kind='maxpool', src='h', dst='h', taps=taps, boff=boff,
                     rout=B * Lout, K=K))
    Lc = Lout

    # --- bottleneck layers ---
    for layer_blocks in params['layers']:
        for bi, blk in enumerate(layer_blocks):
            stride = 2 if bi == 0 else 1
            if 'ds_w' in blk:     # downsample: Conv1d(k=1, stride) + BN, no tanh
                add_conv_bn('h', 'identity', blk['ds_w'], blk['ds_bn'],
                            1, stride, 0, Lc, tanh=False)
            else:
                plan.append(dict(kind='alias', src='h', dst='identity'))
            L1 = add_conv_bn('h', 'h', blk['c1_w'], blk['c1_bn'], 1, 1, 0, Lc)
            L2 = add_conv_bn('h', 'h', blk['c2_w'], blk['c2_bn'], 3, stride, 1, L1)
            Lc = add_conv_bn('h', 'h', blk['c3_w'], blk['c3_bn'], 1, 1, 0, L2,
                             tanh=True, res='identity')

    # --- head: AdaptiveAvgPool1d(1) + Linear + tanh (output padded to 128 lanes) ---
    cfeat = int(np.asarray(params['out_w']).shape[1])
    w_head = np.zeros((cfeat, hpad), np.float32)
    w_head[:, :num_hidden] = np.transpose(np.asarray(params['out_w'], np.float32))
    woff = wpack.add(w_head)
    b_head = np.zeros((hpad,), np.float32)
    b_head[:num_hidden] = np.asarray(params['out_b'], np.float32)
    boff = vpack.add(b_head)
    pool = None
    if Lc > 1:                                        # not taken at these shapes
        P = np.zeros((B, B * Lc), np.float32)
        for b in range(B):
            P[b, b * Lc:(b + 1) * Lc] = 1.0 / Lc
        pool = (wpack.add(P), B, B * Lc)
    plan.append(dict(kind='head', src='h', pool=pool, woff=woff, wrows=cfeat,
                     boff=boff))

    w_packed = wpack.finalize()
    v_packed = vpack.finalize()
    kernel = _make_kernel(plan, hpad)
    out_shape = jax.ShapeDtypeStruct((B, hpad), jnp.float32)

    def forward(x, w_buf, v_buf):
        # PyTorch permutes (B, L, F) -> (B, F, L); working channels-last with
        # rows = batch*length and lanes = channels is numerically equivalent.
        xr = x.reshape(B * L, n_feature)
        out = pl.pallas_call(
            kernel,
            out_shape=out_shape,
            in_specs=[_VMEM, _VMEM, _VMEM],
            out_specs=_VMEM,
            compiler_params=pltpu.CompilerParams(vmem_limit_bytes=32 * 1024 * 1024),
        )(xr, w_buf, v_buf)
        return out[:, :num_hidden]

    return forward, w_packed, v_packed


# ---------------------------------------------------------------------------
# Parameter construction (mirrors the PyTorch module structure)
# ---------------------------------------------------------------------------
def init_params(key, n_feature, embedding_size, num_hidden, blocks_num):
    expansion = 4
    keys = iter(jax.random.split(key, 256))

    def conv_w(cout, cin, k):
        return 0.1 * jax.random.normal(next(keys), (cout, cin, k), jnp.float32)

    def bn_p(c):
        gamma = 1.0 + 0.1 * jax.random.normal(next(keys), (c,), jnp.float32)
        beta = 0.05 * jax.random.normal(next(keys), (c,), jnp.float32)
        return (gamma, beta)

    E = embedding_size
    p = {
        'emb1_w': conv_w(E, n_feature, 1), 'bn1': bn_p(E),
        'emb2_w': conv_w(E, E, 3), 'bn2': bn_p(E),
        'emb3_w': conv_w(E, E, 7), 'bn3': bn_p(E),
    }
    in_ch = E
    layers = []
    for channel, nblocks in zip((64, 128), blocks_num):
        blocks = []
        for b in range(nblocks):
            blk = {}
            if b == 0:
                blk['ds_w'] = conv_w(channel * expansion, in_ch, 1)
                blk['ds_bn'] = bn_p(channel * expansion)
            blk['c1_w'] = conv_w(channel, in_ch, 1)
            blk['c1_bn'] = bn_p(channel)
            blk['c2_w'] = conv_w(channel, channel, 3)
            blk['c2_bn'] = bn_p(channel)
            blk['c3_w'] = conv_w(channel * expansion, channel, 1)
            blk['c3_bn'] = bn_p(channel * expansion)
            blocks.append(blk)
            in_ch = channel * expansion
        layers.append(blocks)
    p['layers'] = layers
    p['out_w'] = 0.1 * jax.random.normal(next(keys), (num_hidden, 128 * expansion),
                                         jnp.float32)
    p['out_b'] = 0.05 * jax.random.normal(next(keys), (num_hidden,), jnp.float32)
    return p


if __name__ == "__main__":
    key = jax.random.PRNGKey(0)
    k_x, k_p = jax.random.split(key)

    # ResNet_Encoder(blocks_num=[1,1], n_feature=4, embedding_size=16, num_hidden=32)
    B, L, n_feature = 2, 16, 4
    embedding_size, num_hidden = 16, 32
    blocks_num = [1, 1]

    x = jax.random.normal(k_x, (B, L, n_feature), jnp.float32)
    params = init_params(k_p, n_feature, embedding_size, num_hidden, blocks_num)

    fwd, w_packed, v_packed = build_encoder(params, B, L, n_feature)
    fwd = jax.jit(fwd)
    out = fwd(x, w_packed, v_packed)
    jax.block_until_ready(out)

    assert out.shape == (B, num_hidden), out.shape
    assert bool(jnp.all(jnp.isfinite(out)))
    print("KERNEL_OK")
</pallas_src>

<mosaic_0001>
module attributes {stable_mosaic.version = 11 : i64} {
  func.func @kernel(%arg0: memref<32x4xf32, #tpu.memory_space<vmem>>, %arg1: memref<2384x512xbf16, #tpu.memory_space<vmem>>, %arg2: memref<104x512xf32, #tpu.memory_space<vmem>>, %arg3: memref<2x128xf32, #tpu.memory_space<vmem>>) attributes {dimension_semantics = [], scalar_prefetch = 0 : i64, scratch_operands = 0 : i64, tpu.core_type = #tpu.core_type<tc>} {
    %c0 = arith.constant 0 : index
    %c0_0 = arith.constant 0 : index
    %0 = vector.load %arg0[%c0, %c0_0] : memref<32x4xf32, #tpu.memory_space<vmem>>, vector<32x4xf32>
    %1 = arith.truncf %0 : vector<32x4xf32> to vector<32x4xbf16>
    %c0_1 = arith.constant 0 : index
    %c0_2 = arith.constant 0 : index
    %2 = vector.load %arg1[%c0_1, %c0_2] : memref<2384x512xbf16, #tpu.memory_space<vmem>>, vector<4x16xbf16>
    %cst = arith.constant dense<0.000000e+00> : vector<32x16xf32>
    %3 = tpu.matmul %1, %2, %cst {dimension_numbers = #tpu.dot_dimension_numbers<[1], [0], [0], [1], [0, 0, 1, 1], [], []>} : vector<32x4xbf16>, vector<4x16xbf16>, vector<32x16xf32> -> vector<32x16xf32>
    %c0_3 = arith.constant 0 : index
    %c0_4 = arith.constant 0 : index
    %4 = vector.load %arg2[%c0_3, %c0_4] : memref<104x512xf32, #tpu.memory_space<vmem>>, vector<2x16xf32>
    %cst_5 = arith.constant dense<0.000000e+00> : vector<16xf32>
    %5 = vector.multi_reduction <add>, %3, %cst_5 [0] : vector<32x16xf32> to vector<16xf32>
    %6 = vector.shape_cast %5 : vector<16xf32> to vector<1x16xf32>
    %cst_6 = arith.constant 3.200000e+01 : f32
    %7 = vector.broadcast %cst_6 : f32 to vector<1x16xf32>
    %8 = arith.divf %6, %7 : vector<1x16xf32>
    %9 = vector.broadcast %8 : vector<1x16xf32> to vector<32x16xf32>
    %10 = arith.subf %3, %9 : vector<32x16xf32>
    %11 = arith.mulf %10, %10 : vector<32x16xf32>
    %cst_7 = arith.constant dense<0.000000e+00> : vector<16xf32>
    %12 = vector.multi_reduction <add>, %11, %cst_7 [0] : vector<32x16xf32> to vector<16xf32>
    %13 = vector.shape_cast %12 : vector<16xf32> to vector<1x16xf32>
    %cst_8 = arith.constant 3.200000e+01 : f32
    %14 = vector.broadcast %cst_8 : f32 to vector<1x16xf32>
    %15 = arith.divf %13, %14 : vector<1x16xf32>
    %16 = vector.broadcast %8 : vector<1x16xf32> to vector<32x16xf32>
    %17 = arith.subf %3, %16 : vector<32x16xf32>
    %cst_9 = arith.constant 9.99999974E-6 : f32
    %18 = vector.broadcast %cst_9 : f32 to vector<1x16xf32>
    %19 = arith.addf %15, %18 : vector<1x16xf32>
    %20 = math.rsqrt %19 : vector<1x16xf32>
    %21 = vector.broadcast %20 : vector<1x16xf32> to vector<32x16xf32>
    %22 = arith.mulf %17, %21 : vector<32x16xf32>
    %23 = vector.extract_strided_slice %4 {offsets = [0, 0], sizes = [1, 16], strides = [1, 1]} : vector<2x16xf32> to vector<1x16xf32>
    %24 = vector.broadcast %23 : vector<1x16xf32> to vector<32x16xf32>
    %25 = arith.mulf %22, %24 : vector<32x16xf32>
    %26 = vector.extract_strided_slice %4 {offsets = [1, 0], sizes = [1, 16], strides = [1, 1]} : vector<2x16xf32> to vector<1x16xf32>
    %27 = vector.broadcast %26 : vector<1x16xf32> to vector<32x16xf32>
    %28 = arith.addf %25, %27 : vector<32x16xf32>
    %29 = math.tanh %28 : vector<32x16xf32>
    %30 = arith.truncf %29 : vector<32x16xf32> to vector<32x16xbf16>
    %c64 = arith.constant 64 : index
    %c0_10 = arith.constant 0 : index
    %31 = vector.load %arg1[%c64, %c0_10] : memref<2384x512xbf16, #tpu.memory_space<vmem>>, vector<32x32xbf16>
    %cst_11 = arith.constant dense<0.000000e+00> : vector<32x16xf32>
    %32 = tpu.matmul %31, %30, %cst_11 {dimension_numbers = #tpu.dot_dimension_numbers<[1], [0], [0], [1], [0, 0, 1, 1], [], []>} : vector<32x32xbf16>, vector<32x16xbf16>, vector<32x16xf32> -> vector<32x16xf32>
    %33 = arith.truncf %32 : vector<32x16xf32> to vector<32x16xbf16>
    %c96 = arith.constant 96 : index
    %c0_12 = arith.constant 0 : index
    %34 = vector.load %arg1[%c96, %c0_12] : memref<2384x512xbf16, #tpu.memory_space<vmem>>, vector<32x32xbf16>
    %cst_13 = arith.constant dense<0.000000e+00> : vector<32x16xf32>
    %35 = tpu.matmul %34, %30, %cst_13 {dimension_numbers = #tpu.dot_dimension_numbers<[1], [0], [0], [1], [0, 0, 1, 1], [], []>} : vector<32x32xbf16>, vector<32x16xbf16>, vector<32x16xf32> -> vector<32x16xf32>
    %36 = arith.truncf %35 : vector<32x16xf32> to vector<32x16xbf16>
    %c128 = arith.constant 128 : index
    %c0_14 = arith.constant 0 : index
    %37 = vector.load %arg1[%c128, %c0_14] : memref<2384x512xbf16, #tpu.memory_space<vmem>>, vector<32x32xbf16>
    %cst_15 = arith.constant dense<0.000000e+00> : vector<32x16xf32>
    %38 = tpu.matmul %37, %30, %cst_15 {dimension_numbers = #tpu.dot_dimension_numbers<[1], [0], [0], [1], [0, 0, 1, 1], [], []>} : vector<32x32xbf16>, vector<32x16xbf16>, vector<32x16xf32> -> vector<32x16xf32>
    %39 = arith.truncf %38 : vector<32x16xf32> to vector<32x16xbf16>
    %40 = tpu.concatenate %33, %36, %39 in 1 : vector<32x16xbf16>, vector<32x16xbf16>, vector<32x16xbf16> -> vector<32x48xbf16>
    %c16 = arith.constant 16 : index
    %c0_16 = arith.constant 0 : index
    %41 = vector.load %arg1[%c16, %c0_16] : memref<2384x512xbf16, #tpu.memory_space<vmem>>, vector<48x16xbf16>
    %cst_17 = arith.constant dense<0.000000e+00> : vector<32x16xf32>
    %42 = tpu.matmul %40, %41, %cst_17 {dimension_numbers = #tpu.dot_dimension_numbers<[1], [0], [0], [1], [0, 0, 1, 1], [], []>} : vector<32x48xbf16>, vector<48x16xbf16>, vector<32x16xf32> -> vector<32x16xf32>
    %c8 = arith.constant 8 : index
    %c0_18 = arith.constant 0 : index
    %43 = vector.load %arg2[%c8, %c0_18] : memref<104x512xf32, #tpu.memory_space<vmem>>, vector<2x16xf32>
    %cst_19 = arith.constant dense<0.000000e+00> : vector<16xf32>
    %44 = vector.multi_reduction <add>, %42, %cst_19 [0] : vector<32x16xf32> to vector<16xf32>
    %45 = vector.shape_cast %44 : vector<16xf32> to vector<1x16xf32>
    %cst_20 = arith.constant 3.200000e+01 : f32
    %46 = vector.broadcast %cst_20 : f32 to vector<1x16xf32>
    %47 = arith.divf %45, %46 : vector<1x16xf32>
    %48 = vector.broadcast %47 : vector<1x16xf32> to vector<32x16xf32>
    %49 = arith.subf %42, %48 : vector<32x16xf32>
    %50 = arith.mulf %49, %49 : vector<32x16xf32>
    %cst_21 = arith.constant dense<0.000000e+00> : vector<16xf32>
    %51 = vector.multi_reduction <add>, %50, %cst_21 [0] : vector<32x16xf32> to vector<16xf32>
    %52 = vector.shape_cast %51 : vector<16xf32> to vector<1x16xf32>
    %cst_22 = arith.constant 3.200000e+01 : f32
    %53 = vector.broadcast %cst_22 : f32 to vector<1x16xf32>
    %54 = arith.divf %52, %53 : vector<1x16xf32>
    %55 = vector.broadcast %47 : vector<1x16xf32> to vector<32x16xf32>
    %56 = arith.subf %42, %55 : vector<32x16xf32>
    %cst_23 = arith.constant 9.99999974E-6 : f32
    %57 = vector.broadcast %cst_23 : f32 to vector<1x16xf32>
    %58 = arith.addf %54, %57 : vector<1x16xf32>
    %59 = math.rsqrt %58 : vector<1x16xf32>
    %60 = vector.broadcast %59 : vector<1x16xf32> to vector<32x16xf32>
    %61 = arith.mulf %56, %60 : vector<32x16xf32>
    %62 = vector.extract_strided_slice %43 {offsets = [0, 0], sizes = [1, 16], strides = [1, 1]} : vector<2x16xf32> to vector<1x16xf32>
    %63 = vector.broadcast %62 : vector<1x16xf32> to vector<32x16xf32>
    %64 = arith.mulf %61, %63 : vector<32x16xf32>
    %65 = vector.extract_strided_slice %43 {offsets = [1, 0], sizes = [1, 16], strides = [1, 1]} : vector<2x16xf32> to vector<1x16xf32>
    %66 = vector.broadcast %65 : vector<1x16xf32> to vector<32x16xf32>
    %67 = arith.addf %64, %66 : vector<32x16xf32>
    %68 = math.tanh %67 : vector<32x16xf32>
    %69 = arith.truncf %68 : vector<32x16xf32> to vector<32x16xbf16>
    %c272 = arith.constant 272 : index
    %c0_24 = arith.constant 0 : index
    %70 = vector.load %arg1[%c272, %c0_24] : memref<2384x512xbf16, #tpu.memory_space<vmem>>, vector<16x32xbf16>
    %cst_25 = arith.constant dense<0.000000e+00> : vector<16x16xf32>
    %71 = tpu.matmul %70, %69, %cst_25 {dimension_numbers = #tpu.dot_dimension_numbers<[1], [0], [0], [1], [0, 0, 1, 1], [], []>} : vector<16x32xbf16>, vector<32x16xbf16>, vector<16x16xf32> -> vector<16x16xf32>
    %72 = arith.truncf %71 : vector<16x16xf32> to vector<16x16xbf16>
    %c288 = arith.constant 288 : index
    %c0_26 = arith.constant 0 : index
    %73 = vector.load %arg1[%c288, %c0_26] : memref<2384x512xbf16, #tpu.memory_space<vmem>>, vector<16x32xbf16>
    %cst_27 = arith.constant dense<0.000000e+00> : vector<16x16xf32>
    %74 = tpu.matmul %73, %69, %cst_27 {dimension_numbers = #tpu.dot_dimension_numbers<[1], [0], [0], [1], [0, 0, 1, 1], [], []>} : vector<16x32xbf16>, vector<32x16xbf16>, vector<16x16xf32> -> vector<16x16xf32>
    %75 = arith.truncf %74 : vector<16x16xf32> to vector<16x16xbf16>
    %c304 = arith.constant 304 : index
    %c0_28 = arith.constant 0 : index
    %76 = vector.load %arg1[%c304, %c0_28] : memref<2384x512xbf16, #tpu.memory_space<vmem>>, vector<16x32xbf16>
    %cst_29 = arith.constant dense<0.000000e+00> : vector<16x16xf32>
    %77 = tpu.matmul %76, %69, %cst_29 {dimension_numbers = #tpu.dot_dimension_numbers<[1], [0], [0], [1], [0, 0, 1, 1], [], []>} : vector<16x32xbf16>, vector<32x16xbf16>, vector<16x16xf32> -> vector<16x16xf32>
    %78 = arith.truncf %77 : vector<16x16xf32> to vector<16x16xbf16>
    %c320 = arith.constant 320 : index
    %c0_30 = arith.constant 0 : index
    %79 = vector.load %arg1[%c320, %c0_30] : memref<2384x512xbf16, #tpu.memory_space<vmem>>, vector<16x32xbf16>
    %cst_31 = arith.constant dense<0.000000e+00> : vector<16x16xf32>
    %80 = tpu.matmul %79, %69, %cst_31 {dimension_numbers = #tpu.dot_dimension_numbers<[1], [0], [0], [1], [0, 0, 1, 1], [], []>} : vector<16x32xbf16>, vector<32x16xbf16>, vector<16x16xf32> -> vector<16x16xf32>
    %81 = arith.truncf %80 : vector<16x16xf32> to vector<16x16xbf16>
    %c336 = arith.constant 336 : index
    %c0_32 = arith.constant 0 : index
    %82 = vector.load %arg1[%c336, %c0_32] : memref<2384x512xbf16, #tpu.memory_space<vmem>>, vector<16x32xbf16>
    %cst_33 = arith.constant dense<0.000000e+00> : vector<16x16xf32>
    %83 = tpu.matmul %82, %69, %cst_33 {dimension_numbers = #tpu.dot_dimension_numbers<[1], [0], [0], [1], [0, 0, 1, 1], [], []>} : vector<16x32xbf16>, vector<32x16xbf16>, vector<16x16xf32> -> vector<16x16xf32>
    %84 = arith.truncf %83 : vector<16x16xf32> to vector<16x16xbf16>
    %c352 = arith.constant 352 : index
    %c0_34 = arith.constant 0 : index
    %85 = vector.load %arg1[%c352, %c0_34] : memref<2384x512xbf16, #tpu.memory_space<vmem>>, vector<16x32xbf16>
    %cst_35 = arith.constant dense<0.000000e+00> : vector<16x16xf32>
    %86 = tpu.matmul %85, %69, %cst_35 {dimension_numbers = #tpu.dot_dimension_numbers<[1], [0], [0], [1], [0, 0, 1, 1], [], []>} : vector<16x32xbf16>, vector<32x16xbf16>, vector<16x16xf32> -> vector<16x16xf32>
    %87 = arith.truncf %86 : vector<16x16xf32> to vector<16x16xbf16>
    %c368 = arith.constant 368 : index
    %c0_36 = arith.constant 0 : index
    %88 = vector.load %arg1[%c368, %c0_36] : memref<2384x512xbf16, #tpu.memory_space<vmem>>, vector<16x32xbf16>
    %cst_37 = arith.constant dense<0.000000e+00> : vector<16x16xf32>
    %89 = tpu.matmul %88, %69, %cst_37 {dimension_numbers = #tpu.dot_dimension_numbers<[1], [0], [0], [1], [0, 0, 1, 1], [], []>} : vector<16x32xbf16>, vector<32x16xbf16>, vector<16x16xf32> -> vector<16x16xf32>
    %90 = arith.truncf %89 : vector<16x16xf32> to vector<16x16xbf16>
    %91 = tpu.concatenate %72, %75, %78, %81, %84, %87, %90 in 1 : vector<16x16xbf16>, vector<16x16xbf16>, vector<16x16xbf16>, vector<16x16xbf16>, vector<16x16xbf16>, vector<16x16xbf16>, vector<16x16xbf16> -> vector<16x112xbf16>
    %c160 = arith.constant 160 : index
    %c0_38 = arith.constant 0 : index
    %92 = vector.load %arg1[%c160, %c0_38] : memref<2384x512xbf16, #tpu.memory_space<vmem>>, vector<112x16xbf16>
    %cst_39 = arith.constant dense<0.000000e+00> : vector<16x16xf32>
    %93 = tpu.matmul %91, %92, %cst_39 {dimension_numbers = #tpu.dot_dimension_numbers<[1], [0], [0], [1], [0, 0, 1, 1], [], []>} : vector<16x112xbf16>, vector<112x16xbf16>, vector<16x16xf32> -> vector<16x16xf32>
    %c16_40 = arith.constant 16 : index
    %c0_41 = arith.constant 0 : index
    %94 = vector.load %arg2[%c16_40, %c0_41] : memref<104x512xf32, #tpu.memory_space<vmem>>, vector<2x16xf32>
    %cst_42 = arith.constant dense<0.000000e+00> : vector<16xf32>
    %95 = vector.multi_reduction <add>, %93, %cst_42 [0] : vector<16x16xf32> to vector<16xf32>
    %96 = vector.shape_cast %95 : vector<16xf32> to vector<1x16xf32>
    %cst_43 = arith.constant 1.600000e+01 : f32
    %97 = vector.broadcast %cst_43 : f32 to vector<1x16xf32>
    %98 = arith.divf %96, %97 : vector<1x16xf32>
    %99 = vector.broadcast %98 : vector<1x16xf32> to vector<16x16xf32>
    %100 = arith.subf %93, %99 : vector<16x16xf32>
    %101 = arith.mulf %100, %100 : vector<16x16xf32>
    %cst_44 = arith.constant dense<0.000000e+00> : vector<16xf32>
    %102 = vector.multi_reduction <add>, %101, %cst_44 [0] : vector<16x16xf32> to vector<16xf32>
    %103 = vector.shape_cast %102 : vector<16xf32> to vector<1x16xf32>
    %cst_45 = arith.constant 1.600000e+01 : f32
    %104 = vector.broadcast %cst_45 : f32 to vector<1x16xf32>
    %105 = arith.divf %103, %104 : vector<1x16xf32>
    %106 = vector.broadcast %98 : vector<1x16xf32> to vector<16x16xf32>
    %107 = arith.subf %93, %106 : vector<16x16xf32>
    %cst_46 = arith.constant 9.99999974E-6 : f32
    %108 = vector.broadcast %cst_46 : f32 to vector<1x16xf32>
    %109 = arith.addf %105, %108 : vector<1x16xf32>
    %110 = math.rsqrt %109 : vector<1x16xf32>
    %111 = vector.broadcast %110 : vector<1x16xf32> to vector<16x16xf32>
    %112 = arith.mulf %107, %111 : vector<16x16xf32>
    %113 = vector.extract_strided_slice %94 {offsets = [0, 0], sizes = [1, 16], strides = [1, 1]} : vector<2x16xf32> to vector<1x16xf32>
    %114 = vector.broadcast %113 : vector<1x16xf32> to vector<16x16xf32>
    %115 = arith.mulf %112, %114 : vector<16x16xf32>
    %116 = vector.extract_strided_slice %94 {offsets = [1, 0], sizes = [1, 16], strides = [1, 1]} : vector<2x16xf32> to vector<1x16xf32>
    %117 = vector.broadcast %116 : vector<1x16xf32> to vector<16x16xf32>
    %118 = arith.addf %115, %117 : vector<16x16xf32>
    %119 = math.tanh %118 : vector<16x16xf32>
    %120 = arith.truncf %119 : vector<16x16xf32> to vector<16x16xbf16>
    %c24 = arith.constant 24 : index
    %c0_47 = arith.constant 0 : index
    %121 = vector.load %arg2[%c24, %c0_47] : memref<104x512xf32, #tpu.memory_space<vmem>>, vector<8x3xf32>
    %c384 = arith.constant 384 : index
    %c0_48 = arith.constant 0 : index
    %122 = vector.load %arg1[%c384, %c0_48] : memref<2384x512xbf16, #tpu.memory_space<vmem>>, vector<8x16xbf16>
    %cst_49 = arith.constant dense<0.000000e+00> : vector<8x16xf32>
    %123 = tpu.matmul %122, %120, %cst_49 {dimension_numbers = #tpu.dot_dimension_numbers<[1], [0], [0], [1], [0, 0, 1, 1], [], []>} : vector<8x16xbf16>, vector<16x16xbf16>, vector<8x16xf32> -> vector<8x16xf32>
    %124 = vector.extract_strided_slice %121 {offsets = [0, 0], sizes = [8, 1], strides = [1, 1]} : vector<8x3xf32> to vector<8x1xf32>
    %125 = vector.broadcast %124 : vector<8x1xf32> to vector<8x16xf32>
    %126 = arith.addf %123, %125 : vector<8x16xf32>
    %c400 = arith.constant 400 : index
    %c0_50 = arith.constant 0 : index
    %127 = vector.load %arg1[%c400, %c0_50] : memref<2384x512xbf16, #tpu.memory_space<vmem>>, vector<8x16xbf16>
    %cst_51 = arith.constant dense<0.000000e+00> : vector<8x16xf32>
    %128 = tpu.matmul %127, %120, %cst_51 {dimension_numbers = #tpu.dot_dimension_numbers<[1], [0], [0], [1], [0, 0, 1, 1], [], []>} : vector<8x16xbf16>, vector<16x16xbf16>, vector<8x16xf32> -> vector<8x16xf32>
    %129 = vector.extract_strided_slice %121 {offsets = [0, 1], sizes = [8, 1], strides = [1, 1]} : vector<8x3xf32> to vector<8x1xf32>
    %130 = vector.broadcast %129 : vector<8x1xf32> to vector<8x16xf32>
    %131 = arith.addf %128, %130 : vector<8x16xf32>
    %132 = arith.maximumf %126, %131 : vector<8x16xf32>
    %c416 = arith.constant 416 : index
    %c0_52 = arith.constant 0 : index
    %133 = vector.load %arg1[%c416, %c0_52] : memref<2384x512xbf16, #tpu.memory_space<vmem>>, vector<8x16xbf16>
    %cst_53 = arith.constant dense<0.000000e+00> : vector<8x16xf32>
    %134 = tpu.matmul %133, %120, %cst_53 {dimension_numbers = #tpu.dot_dimension_numbers<[1], [0], [0], [1], [0, 0, 1, 1], [], []>} : vector<8x16xbf16>, vector<16x16xbf16>, vector<8x16xf32> -> vector<8x16xf32>
    %135 = vector.extract_strided_slice %121 {offsets = [0, 2], sizes = [8, 1], strides = [1, 1]} : vector<8x3xf32> to vector<8x1xf32>
    %136 = vector.broadcast %135 : vector<8x1xf32> to vector<8x16xf32>
    %137 = arith.addf %134, %136 : vector<8x16xf32>
    %138 = arith.maximumf %132, %137 : vector<8x16xf32>
    %139 = arith.truncf %138 : vector<8x16xf32> to vector<8x16xbf16>
    %c448 = arith.constant 448 : index
    %c0_54 = arith.constant 0 : index
    %140 = vector.load %arg1[%c448, %c0_54] : memref<2384x512xbf16, #tpu.memory_space<vmem>>, vector<4x8xbf16>
    %cst_55 = arith.constant dense<0.000000e+00> : vector<4x16xf32>
    %141 = tpu.matmul %140, %139, %cst_55 {dimension_numbers = #tpu.dot_dimension_numbers<[1], [0], [0], [1], [0, 0, 1, 1], [], []>} : vector<4x8xbf16>, vector<8x16xbf16>, vector<4x16xf32> -> vector<4x16xf32>
    %142 = arith.truncf %141 : vector<4x16xf32> to vector<4x16xbf16>
    %c432 = arith.constant 432 : index
    %c0_56 = arith.constant 0 : index
    %143 = vector.load %arg1[%c432, %c0_56] : memref<2384x512xbf16, #tpu.memory_space<vmem>>, vector<16x256xbf16>
    %cst_57 = arith.constant dense<0.000000e+00> : vector<4x256xf32>
    %144 = tpu.matmul %142, %143, %cst_57 {dimension_numbers = #tpu.dot_dimension_numbers<[1], [0], [0], [1], [0, 0, 1, 1], [], []>} : vector<4x16xbf16>, vector<16x256xbf16>, vector<4x256xf32> -> vector<4x256xf32>
    %c32 = arith.constant 32 : index
    %c0_58 = arith.constant 0 : index
    %145 = vector.load %arg2[%c32, %c0_58] : memref<104x512xf32, #tpu.memory_space<vmem>>, vector<2x256xf32>
    %cst_59 = arith.constant dense<0.000000e+00> : vector<256xf32>
    %146 = vector.multi_reduction <add>, %144, %cst_59 [0] : vector<4x256xf32> to vector<256xf32>
    %147 = vector.shape_cast %146 : vector<256xf32> to vector<1x256xf32>
    %cst_60 = arith.constant 4.000000e+00 : f32
    %148 = vector.broadcast %cst_60 : f32 to vector<1x256xf32>
    %149 = arith.divf %147, %148 : vector<1x256xf32>
    %150 = vector.broadcast %149 : vector<1x256xf32> to vector<4x256xf32>
    %151 = arith.subf %144, %150 : vector<4x256xf32>
    %152 = arith.mulf %151, %151 : vector<4x256xf32>
    %cst_61 = arith.constant dense<0.000000e+00> : vector<256xf32>
    %153 = vector.multi_reduction <add>, %152, %cst_61 [0] : vector<4x256xf32> to vector<256xf32>
    %154 = vector.shape_cast %153 : vector<256xf32> to vector<1x256xf32>
    %cst_62 = arith.constant 4.000000e+00 : f32
    %155 = vector.broadcast %cst_62 : f32 to vector<1x256xf32>
    %156 = arith.divf %154, %155 : vector<1x256xf32>
    %157 = vector.broadcast %149 : vector<1x256xf32> to vector<4x256xf32>
    %158 = arith.subf %144, %157 : vector<4x256xf32>
    %cst_63 = arith.constant 9.99999974E-6 : f32
    %159 = vector.broadcast %cst_63 : f32 to vector<1x256xf32>
    %160 = arith.addf %156, %159 : vector<1x256xf32>
    %161 = math.rsqrt %160 : vector<1x256xf32>
    %162 = vector.broadcast %161 : vector<1x256xf32> to vector<4x256xf32>
    %163 = arith.mulf %158, %162 : vector<4x256xf32>
    %164 = vector.extract_strided_slice %145 {offsets = [0, 0], sizes = [1, 256], strides = [1, 1]} : vector<2x256xf32> to vector<1x256xf32>
    %165 = vector.broadcast %164 : vector<1x256xf32> to vector<4x256xf32>
    %166 = arith.mulf %163, %165 : vector<4x256xf32>
    %167 = vector.extract_strided_slice %145 {offsets = [1, 0], sizes = [1, 256], strides = [1, 1]} : vector<2x256xf32> to vector<1x256xf32>
    %168 = vector.broadcast %167 : vector<1x256xf32> to vector<4x256xf32>
    %169 = arith.addf %166, %168 : vector<4x256xf32>
    %170 = arith.truncf %138 : vector<8x16xf32> to vector<8x16xbf16>
    %c464 = arith.constant 464 : index
    %c0_64 = arith.constant 0 : index
    %171 = vector.load %arg1[%c464, %c0_64] : memref<2384x512xbf16, #tpu.memory_space<vmem>>, vector<16x64xbf16>
    %cst_65 = arith.constant dense<0.000000e+00> : vector<8x64xf32>
    %172 = tpu.matmul %170, %171, %cst_65 {dimension_numbers = #tpu.dot_dimension_numbers<[1], [0], [0], [1], [0, 0, 1, 1], [], []>} : vector<8x16xbf16>, vector<16x64xbf16>, vector<8x64xf32> -> vector<8x64xf32>
    %c40 = arith.constant 40 : index
    %c0_66 = arith.constant 0 : index
    %173 = vector.load %arg2[%c40, %c0_66] : memref<104x512xf32, #tpu.memory_space<vmem>>, vector<2x64xf32>
    %cst_67 = arith.constant dense<0.000000e+00> : vector<64xf32>
    %174 = vector.multi_reduction <add>, %172, %cst_67 [0] : vector<8x64xf32> to vector<64xf32>
    %175 = vector.shape_cast %174 : vector<64xf32> to vector<1x64xf32>
    %cst_68 = arith.constant 8.000000e+00 : f32
    %176 = vector.broadcast %cst_68 : f32 to vector<1x64xf32>
    %177 = arith.divf %175, %176 : vector<1x64xf32>
    %178 = vector.broadcast %177 : vector<1x64xf32> to vector<8x64xf32>
    %179 = arith.subf %172, %178 : vector<8x64xf32>
    %180 = arith.mulf %179, %179 : vector<8x64xf32>
    %cst_69 = arith.constant dense<0.000000e+00> : vector<64xf32>
    %181 = vector.multi_reduction <add>, %180, %cst_69 [0] : vector<8x64xf32> to vector<64xf32>
    %182 = vector.shape_cast %181 : vector<64xf32> to vector<1x64xf32>
    %cst_70 = arith.constant 8.000000e+00 : f32
    %183 = vector.broadcast %cst_70 : f32 to vector<1x64xf32>
    %184 = arith.divf %182, %183 : vector<1x64xf32>
    %185 = vector.broadcast %177 : vector<1x64xf32> to vector<8x64xf32>
    %186 = arith.subf %172, %185 : vector<8x64xf32>
    %cst_71 = arith.constant 9.99999974E-6 : f32
    %187 = vector.broadcast %cst_71 : f32 to vector<1x64xf32>
    %188 = arith.addf %184, %187 : vector<1x64xf32>
    %189 = math.rsqrt %188 : vector<1x64xf32>
    %190 = vector.broadcast %189 : vector<1x64xf32> to vector<8x64xf32>
    %191 = arith.mulf %186, %190 : vector<8x64xf32>
    %192 = vector.extract_strided_slice %173 {offsets = [0, 0], sizes = [1, 64], strides = [1, 1]} : vector<2x64xf32> to vector<1x64xf32>
    %193 = vector.broadcast %192 : vector<1x64xf32> to vector<8x64xf32>
    %194 = arith.mulf %191, %193 : vector<8x64xf32>
    %195 = vector.extract_strided_slice %173 {offsets = [1, 0], sizes = [1, 64], strides = [1, 1]} : vector<2x64xf32> to vector<1x64xf32>
    %196 = vector.broadcast %195 : vector<1x64xf32> to vector<8x64xf32>
    %197 = arith.addf %194, %196 : vector<8x64xf32>
    %198 = math.tanh %197 : vector<8x64xf32>
    %199 = arith.truncf %198 : vector<8x64xf32> to vector<8x64xbf16>
    %c672 = arith.constant 672 : index
    %c0_72 = arith.constant 0 : index
    %200 = vector.load %arg1[%c672, %c0_72] : memref<2384x512xbf16, #tpu.memory_space<vmem>>, vector<4x8xbf16>
    %cst_73 = arith.constant dense<0.000000e+00> : vector<4x64xf32>
    %201 = tpu.matmul %200, %199, %cst_73 {dimension_numbers = #tpu.dot_dimension_numbers<[1], [0], [0], [1], [0, 0, 1, 1], [], []>} : vector<4x8xbf16>, vector<8x64xbf16>, vector<4x64xf32> -> vector<4x64xf32>
    %202 = arith.truncf %201 : vector<4x64xf32> to vector<4x64xbf16>
    %c688 = arith.constant 688 : index
    %c0_74 = arith.constant 0 : index
    %203 = vector.load %arg1[%c688, %c0_74] : memref<2384x512xbf16, #tpu.memory_space<vmem>>, vector<4x8xbf16>
    %cst_75 = arith.constant dense<0.000000e+00> : vector<4x64xf32>
    %204 = tpu.matmul %203, %199, %cst_75 {dimension_numbers = #tpu.dot_dimension_numbers<[1], [0], [0], [1], [0, 0, 1, 1], [], []>} : vector<4x8xbf16>, vector<8x64xbf16>, vector<4x64xf32> -> vector<4x64xf32>
    %205 = arith.truncf %204 : vector<4x64xf32> to vector<4x64xbf16>
    %c704 = arith.constant 704 : index
    %c0_76 = arith.constant 0 : index
    %206 = vector.load %arg1[%c704, %c0_76] : memref<2384x512xbf16, #tpu.memory_space<vmem>>, vector<4x8xbf16>
    %cst_77 = arith.constant dense<0.000000e+00> : vector<4x64xf32>
    %207 = tpu.matmul %206, %199, %cst_77 {dimension_numbers = #tpu.dot_dimension_numbers<[1], [0], [0], [1], [0, 0, 1, 1], [], []>} : vector<4x8xbf16>, vector<8x64xbf16>, vector<4x64xf32> -> vector<4x64xf32>
    %208 = arith.truncf %207 : vector<4x64xf32> to vector<4x64xbf16>
    %209 = tpu.concatenate %202, %205, %208 in 1 : vector<4x64xbf16>, vector<4x64xbf16>, vector<4x64xbf16> -> vector<4x192xbf16>
    %c480 = arith.constant 480 : index
    %c0_78 = arith.constant 0 : index
    %210 = vector.load %arg1[%c480, %c0_78] : memref<2384x512xbf16, #tpu.memory_space<vmem>>, vector<192x64xbf16>
    %cst_79 = arith.constant dense<0.000000e+00> : vector<4x64xf32>
    %211 = tpu.matmul %209, %210, %cst_79 {dimension_numbers = #tpu.dot_dimension_numbers<[1], [0], [0], [1], [0, 0, 1, 1], [], []>} : vector<4x192xbf16>, vector<192x64xbf16>, vector<4x64xf32> -> vector<4x64xf32>
    %c48 = arith.constant 48 : index
    %c0_80 = arith.constant 0 : index
    %212 = vector.load %arg2[%c48, %c0_80] : memref<104x512xf32, #tpu.memory_space<vmem>>, vector<2x64xf32>
    %cst_81 = arith.constant dense<0.000000e+00> : vector<64xf32>
    %213 = vector.multi_reduction <add>, %211, %cst_81 [0] : vector<4x64xf32> to vector<64xf32>
    %214 = vector.shape_cast %213 : vector<64xf32> to vector<1x64xf32>
    %cst_82 = arith.constant 4.000000e+00 : f32
    %215 = vector.broadcast %cst_82 : f32 to vector<1x64xf32>
    %216 = arith.divf %214, %215 : vector<1x64xf32>
    %217 = vector.broadcast %216 : vector<1x64xf32> to vector<4x64xf32>
    %218 = arith.subf %211, %217 : vector<4x64xf32>
    %219 = arith.mulf %218, %218 : vector<4x64xf32>
    %cst_83 = arith.constant dense<0.000000e+00> : vector<64xf32>
    %220 = vector.multi_reduction <add>, %219, %cst_83 [0] : vector<4x64xf32> to vector<64xf32>
    %221 = vector.shape_cast %220 : vector<64xf32> to vector<1x64xf32>
    %cst_84 = arith.constant 4.000000e+00 : f32
    %222 = vector.broadcast %cst_84 : f32 to vector<1x64xf32>
    %223 = arith.divf %221, %222 : vector<1x64xf32>
    %224 = vector.broadcast %216 : vector<1x64xf32> to vector<4x64xf32>
    %225 = arith.subf %211, %224 : vector<4x64xf32>
    %cst_85 = arith.constant 9.99999974E-6 : f32
    %226 = vector.broadcast %cst_85 : f32 to vector<1x64xf32>
    %227 = arith.addf %223, %226 : vector<1x64xf32>
    %228 = math.rsqrt %227 : vector<1x64xf32>
    %229 = vector.broadcast %228 : vector<1x64xf32> to vector<4x64xf32>
    %230 = arith.mulf %225, %229 : vector<4x64xf32>
    %231 = vector.extract_strided_slice %212 {offsets = [0, 0], sizes = [1, 64], strides = [1, 1]} : vector<2x64xf32> to vector<1x64xf32>
    %232 = vector.broadcast %231 : vector<1x64xf32> to vector<4x64xf32>
    %233 = arith.mulf %230, %232 : vector<4x64xf32>
    %234 = vector.extract_strided_slice %212 {offsets = [1, 0], sizes = [1, 64], strides = [1, 1]} : vector<2x64xf32> to vector<1x64xf32>
    %235 = vector.broadcast %234 : vector<1x64xf32> to vector<4x64xf32>
    %236 = arith.addf %233, %235 : vector<4x64xf32>
    %237 = math.tanh %236 : vector<4x64xf32>
    %238 = arith.truncf %237 : vector<4x64xf32> to vector<4x64xbf16>
    %c720 = arith.constant 720 : index
    %c0_86 = arith.constant 0 : index
    %239 = vector.load %arg1[%c720, %c0_86] : memref<2384x512xbf16, #tpu.memory_space<vmem>>, vector<64x256xbf16>
    %cst_87 = arith.constant dense<0.000000e+00> : vector<4x256xf32>
    %240 = tpu.matmul %238, %239, %cst_87 {dimension_numbers = #tpu.dot_dimension_numbers<[1], [0], [0], [1], [0, 0, 1, 1], [], []>} : vector<4x64xbf16>, vector<64x256xbf16>, vector<4x256xf32> -> vector<4x256xf32>
    %c56 = arith.constant 56 : index
    %c0_88 = arith.constant 0 : index
    %241 = vector.load %arg2[%c56, %c0_88] : memref<104x512xf32, #tpu.memory_space<vmem>>, vector<2x256xf32>
    %cst_89 = arith.constant dense<0.000000e+00> : vector<256xf32>
    %242 = vector.multi_reduction <add>, %240, %cst_89 [0] : vector<4x256xf32> to vector<256xf32>
    %243 = vector.shape_cast %242 : vector<256xf32> to vector<1x256xf32>
    %cst_90 = arith.constant 4.000000e+00 : f32
    %244 = vector.broadcast %cst_90 : f32 to vector<1x256xf32>
    %245 = arith.divf %243, %244 : vector<1x256xf32>
    %246 = vector.broadcast %245 : vector<1x256xf32> to vector<4x256xf32>
    %247 = arith.subf %240, %246 : vector<4x256xf32>
    %248 = arith.mulf %247, %247 : vector<4x256xf32>
    %cst_91 = arith.constant dense<0.000000e+00> : vector<256xf32>
    %249 = vector.multi_reduction <add>, %248, %cst_91 [0] : vector<4x256xf32> to vector<256xf32>
    %250 = vector.shape_cast %249 : vector<256xf32> to vector<1x256xf32>
    %cst_92 = arith.constant 4.000000e+00 : f32
    %251 = vector.broadcast %cst_92 : f32 to vector<1x256xf32>
    %252 = arith.divf %250, %251 : vector<1x256xf32>
    %253 = vector.broadcast %245 : vector<1x256xf32> to vector<4x256xf32>
    %254 = arith.subf %240, %253 : vector<4x256xf32>
    %cst_93 = arith.constant 9.99999974E-6 : f32
    %255 = vector.broadcast %cst_93 : f32 to vector<1x256xf32>
    %256 = arith.addf %252, %255 : vector<1x256xf32>
    %257 = math.rsqrt %256 : vector<1x256xf32>
    %258 = vector.broadcast %257 : vector<1x256xf32> to vector<4x256xf32>
    %259 = arith.mulf %254, %258 : vector<4x256xf32>
    %260 = vector.extract_strided_slice %241 {offsets = [0, 0], sizes = [1, 256], strides = [1, 1]} : vector<2x256xf32> to vector<1x256xf32>
    %261 = vector.broadcast %260 : vector<1x256xf32> to vector<4x256xf32>
    %262 = arith.mulf %259, %261 : vector<4x256xf32>
    %263 = vector.extract_strided_slice %241 {offsets = [1, 0], sizes = [1, 256], strides = [1, 1]} : vector<2x256xf32> to vector<1x256xf32>
    %264 = vector.broadcast %263 : vector<1x256xf32> to vector<4x256xf32>
    %265 = arith.addf %262, %264 : vector<4x256xf32>
    %266 = arith.addf %265, %169 : vector<4x256xf32>
    %267 = math.tanh %266 : vector<4x256xf32>
    %268 = arith.truncf %267 : vector<4x256xf32> to vector<4x256xbf16>
    %c1040 = arith.constant 1040 : index
    %c0_94 = arith.constant 0 : index
    %269 = vector.load %arg1[%c1040, %c0_94] : memref<2384x512xbf16, #tpu.memory_space<vmem>>, vector<2x4xbf16>
    %cst_95 = arith.constant dense<0.000000e+00> : vector<2x256xf32>
    %270 = tpu.matmul %269, %268, %cst_95 {dimension_numbers = #tpu.dot_dimension_numbers<[1], [0], [0], [1], [0, 0, 1, 1], [], []>} : vector<2x4xbf16>, vector<4x256xbf16>, vector<2x256xf32> -> vector<2x256xf32>
    %271 = arith.truncf %270 : vector<2x256xf32> to vector<2x256xbf16>
    %c784 = arith.constant 784 : index
    %c0_96 = arith.constant 0 : index
    %272 = vector.load %arg1[%c784, %c0_96] : memref<2384x512xbf16, #tpu.memory_space<vmem>>, vector<256x512xbf16>
    %cst_97 = arith.constant dense<0.000000e+00> : vector<2x512xf32>
    %273 = tpu.matmul %271, %272, %cst_97 {dimension_numbers = #tpu.dot_dimension_numbers<[1], [0], [0], [1], [0, 0, 1, 1], [], []>} : vector<2x256xbf16>, vector<256x512xbf16>, vector<2x512xf32> -> vector<2x512xf32>
    %c64_98 = arith.constant 64 : index
    %c0_99 = arith.constant 0 : index
    %274 = vector.load %arg2[%c64_98, %c0_99] : memref<104x512xf32, #tpu.memory_space<vmem>>, vector<2x512xf32>
    %cst_100 = arith.constant dense<0.000000e+00> : vector<512xf32>
    %275 = vector.multi_reduction <add>, %273, %cst_100 [0] : vector<2x512xf32> to vector<512xf32>
    %276 = vector.shape_cast %275 : vector<512xf32> to vector<1x512xf32>
    %cst_101 = arith.constant 2.000000e+00 : f32
    %277 = vector.broadcast %cst_101 : f32 to vector<1x512xf32>
    %278 = arith.divf %276, %277 : vector<1x512xf32>
    %279 = vector.broadcast %278 : vector<1x512xf32> to vector<2x512xf32>
    %280 = arith.subf %273, %279 : vector<2x512xf32>
    %281 = arith.mulf %280, %280 : vector<2x512xf32>
    %cst_102 = arith.constant dense<0.000000e+00> : vector<512xf32>
    %282 = vector.multi_reduction <add>, %281, %cst_102 [0] : vector<2x512xf32> to vector<512xf32>
    %283 = vector.shape_cast %282 : vector<512xf32> to vector<1x512xf32>
    %cst_103 = arith.constant 2.000000e+00 : f32
    %284 = vector.broadcast %cst_103 : f32 to vector<1x512xf32>
    %285 = arith.divf %283, %284 : vector<1x512xf32>
    %286 = vector.broadcast %278 : vector<1x512xf32> to vector<2x512xf32>
    %287 = arith.subf %273, %286 : vector<2x512xf32>
    %cst_104 = arith.constant 9.99999974E-6 : f32
    %288 = vector.broadcast %cst_104 : f32 to vector<1x512xf32>
    %289 = arith.addf %285, %288 : vector<1x512xf32>
    %290 = math.rsqrt %289 : vector<1x512xf32>
    %291 = vector.broadcast %290 : vector<1x512xf32> to vector<2x512xf32>
    %292 = arith.mulf %287, %291 : vector<2x512xf32>
    %293 = vector.extract_strided_slice %274 {offsets = [0, 0], sizes = [1, 512], strides = [1, 1]} : vector<2x512xf32> to vector<1x512xf32>
    %294 = vector.broadcast %293 : vector<1x512xf32> to vector<2x512xf32>
    %295 = arith.mulf %292, %294 : vector<2x512xf32>
    %296 = vector.extract_strided_slice %274 {offsets = [1, 0], sizes = [1, 512], strides = [1, 1]} : vector<2x512xf32> to vector<1x512xf32>
    %297 = vector.broadcast %296 : vector<1x512xf32> to vector<2x512xf32>
    %298 = arith.addf %295, %297 : vector<2x512xf32>
    %299 = arith.truncf %267 : vector<4x256xf32> to vector<4x256xbf16>
    %c1056 = arith.constant 1056 : index
    %c0_105 = arith.constant 0 : index
    %300 = vector.load %arg1[%c1056, %c0_105] : memref<2384x512xbf16, #tpu.memory_space<vmem>>, vector<256x128xbf16>
    %cst_106 = arith.constant dense<0.000000e+00> : vector<4x128xf32>
    %301 = tpu.matmul %299, %300, %cst_106 {dimension_numbers = #tpu.dot_dimension_numbers<[1], [0], [0], [1], [0, 0, 1, 1], [], []>} : vector<4x256xbf16>, vector<256x128xbf16>, vector<4x128xf32> -> vector<4x128xf32>
    %c72 = arith.constant 72 : index
    %c0_107 = arith.constant 0 : index
    %302 = vector.load %arg2[%c72, %c0_107] : memref<104x512xf32, #tpu.memory_space<vmem>>, vector<2x128xf32>
    %cst_108 = arith.constant dense<0.000000e+00> : vector<128xf32>
    %303 = vector.multi_reduction <add>, %301, %cst_108 [0] : vector<4x128xf32> to vector<128xf32>
    %304 = vector.shape_cast %303 : vector<128xf32> to vector<1x128xf32>
    %cst_109 = arith.constant 4.000000e+00 : f32
    %305 = vector.broadcast %cst_109 : f32 to vector<1x128xf32>
    %306 = arith.divf %304, %305 : vector<1x128xf32>
    %307 = vector.broadcast %306 : vector<1x128xf32> to vector<4x128xf32>
    %308 = arith.subf %301, %307 : vector<4x128xf32>
    %309 = arith.mulf %308, %308 : vector<4x128xf32>
    %cst_110 = arith.constant dense<0.000000e+00> : vector<128xf32>
    %310 = vector.multi_reduction <add>, %309, %cst_110 [0] : vector<4x128xf32> to vector<128xf32>
    %311 = vector.shape_cast %310 : vector<128xf32> to vector<1x128xf32>
    %cst_111 = arith.constant 4.000000e+00 : f32
    %312 = vector.broadcast %cst_111 : f32 to vector<1x128xf32>
    %313 = arith.divf %311, %312 : vector<1x128xf32>
    %314 = vector.broadcast %306 : vector<1x128xf32> to vector<4x128xf32>
    %315 = arith.subf %301, %314 : vector<4x128xf32>
    %cst_112 = arith.constant 9.99999974E-6 : f32
    %316 = vector.broadcast %cst_112 : f32 to vector<1x128xf32>
    %317 = arith.addf %313, %316 : vector<1x128xf32>
    %318 = math.rsqrt %317 : vector<1x128xf32>
    %319 = vector.broadcast %318 : vector<1x128xf32> to vector<4x128xf32>
    %320 = arith.mulf %315, %319 : vector<4x128xf32>
    %321 = vector.extract_strided_slice %302 {offsets = [0, 0], sizes = [1, 128], strides = [1, 1]} : vector<2x128xf32> to vector<1x128xf32>
    %322 = vector.broadcast %321 : vector<1x128xf32> to vector<4x128xf32>
    %323 = arith.mulf %320, %322 : vector<4x128xf32>
    %324 = vector.extract_strided_slice %302 {offsets = [1, 0], sizes = [1, 128], strides = [1, 1]} : vector<2x128xf32> to vector<1x128xf32>
    %325 = vector.broadcast %324 : vector<1x128xf32> to vector<4x128xf32>
    %326 = arith.addf %323, %325 : vector<4x128xf32>
    %327 = math.tanh %326 : vector<4x128xf32>
    %328 = arith.truncf %327 : vector<4x128xf32> to vector<4x128xbf16>
    %c1696 = arith.constant 1696 : index
    %c0_113 = arith.constant 0 : index
    %329 = vector.load %arg1[%c1696, %c0_113] : memref<2384x512xbf16, #tpu.memory_space<vmem>>, vector<2x4xbf16>
    %cst_114 = arith.constant dense<0.000000e+00> : vector<2x128xf32>
    %330 = tpu.matmul %329, %328, %cst_114 {dimension_numbers = #tpu.dot_dimension_numbers<[1], [0], [0], [1], [0, 0, 1, 1], [], []>} : vector<2x4xbf16>, vector<4x128xbf16>, vector<2x128xf32> -> vector<2x128xf32>
    %331 = arith.truncf %330 : vector<2x128xf32> to vector<2x128xbf16>
    %c1712 = arith.constant 1712 : index
    %c0_115 = arith.constant 0 : index
    %332 = vector.load %arg1[%c1712, %c0_115] : memref<2384x512xbf16, #tpu.memory_space<vmem>>, vector<2x4xbf16>
    %cst_116 = arith.constant dense<0.000000e+00> : vector<2x128xf32>
    %333 = tpu.matmul %332, %328, %cst_116 {dimension_numbers = #tpu.dot_dimension_numbers<[1], [0], [0], [1], [0, 0, 1, 1], [], []>} : vector<2x4xbf16>, vector<4x128xbf16>, vector<2x128xf32> -> vector<2x128xf32>
    %334 = arith.truncf %333 : vector<2x128xf32> to vector<2x128xbf16>
    %c1728 = arith.constant 1728 : index
    %c0_117 = arith.constant 0 : index
    %335 = vector.load %arg1[%c1728, %c0_117] : memref<2384x512xbf16, #tpu.memory_space<vmem>>, vector<2x4xbf16>
    %cst_118 = arith.constant dense<0.000000e+00> : vector<2x128xf32>
    %336 = tpu.matmul %335, %328, %cst_118 {dimension_numbers = #tpu.dot_dimension_numbers<[1], [0], [0], [1], [0, 0, 1, 1], [], []>} : vector<2x4xbf16>, vector<4x128xbf16>, vector<2x128xf32> -> vector<2x128xf32>
    %337 = arith.truncf %336 : vector<2x128xf32> to vector<2x128xbf16>
    %338 = tpu.concatenate %331, %334, %337 in 1 : vector<2x128xbf16>, vector<2x128xbf16>, vector<2x128xbf16> -> vector<2x384xbf16>
    %c1312 = arith.constant 1312 : index
    %c0_119 = arith.constant 0 : index
    %339 = vector.load %arg1[%c1312, %c0_119] : memref<2384x512xbf16, #tpu.memory_space<vmem>>, vector<384x128xbf16>
    %cst_120 = arith.constant dense<0.000000e+00> : vector<2x128xf32>
    %340 = tpu.matmul %338, %339, %cst_120 {dimension_numbers = #tpu.dot_dimension_numbers<[1], [0], [0], [1], [0, 0, 1, 1], [], []>} : vector<2x384xbf16>, vector<384x128xbf16>, vector<2x128xf32> -> vector<2x128xf32>
    %c80 = arith.constant 80 : index
    %c0_121 = arith.constant 0 : index
    %341 = vector.load %arg2[%c80, %c0_121] : memref<104x512xf32, #tpu.memory_space<vmem>>, vector<2x128xf32>
    %cst_122 = arith.constant dense<0.000000e+00> : vector<128xf32>
    %342 = vector.multi_reduction <add>, %340, %cst_122 [0] : vector<2x128xf32> to vector<128xf32>
    %343 = vector.shape_cast %342 : vector<128xf32> to vector<1x128xf32>
    %cst_123 = arith.constant 2.000000e+00 : f32
    %344 = vector.broadcast %cst_123 : f32 to vector<1x128xf32>
    %345 = arith.divf %343, %344 : vector<1x128xf32>
    %346 = vector.broadcast %345 : vector<1x128xf32> to vector<2x128xf32>
    %347 = arith.subf %340, %346 : vector<2x128xf32>
    %348 = arith.mulf %347, %347 : vector<2x128xf32>
    %cst_124 = arith.constant dense<0.000000e+00> : vector<128xf32>
    %349 = vector.multi_reduction <add>, %348, %cst_124 [0] : vector<2x128xf32> to vector<128xf32>
    %350 = vector.shape_cast %349 : vector<128xf32> to vector<1x128xf32>
    %cst_125 = arith.constant 2.000000e+00 : f32
    %351 = vector.broadcast %cst_125 : f32 to vector<1x128xf32>
    %352 = arith.divf %350, %351 : vector<1x128xf32>
    %353 = vector.broadcast %345 : vector<1x128xf32> to vector<2x128xf32>
    %354 = arith.subf %340, %353 : vector<2x128xf32>
    %cst_126 = arith.constant 9.99999974E-6 : f32
    %355 = vector.broadcast %cst_126 : f32 to vector<1x128xf32>
    %356 = arith.addf %352, %355 : vector<1x128xf32>
    %357 = math.rsqrt %356 : vector<1x128xf32>
    %358 = vector.broadcast %357 : vector<1x128xf32> to vector<2x128xf32>
    %359 = arith.mulf %354, %358 : vector<2x128xf32>
    %360 = vector.extract_strided_slice %341 {offsets = [0, 0], sizes = [1, 128], strides = [1, 1]} : vector<2x128xf32> to vector<1x128xf32>
    %361 = vector.broadcast %360 : vector<1x128xf32> to vector<2x128xf32>
    %362 = arith.mulf %359, %361 : vector<2x128xf32>
    %363 = vector.extract_strided_slice %341 {offsets = [1, 0], sizes = [1, 128], strides = [1, 1]} : vector<2x128xf32> to vector<1x128xf32>
    %364 = vector.broadcast %363 : vector<1x128xf32> to vector<2x128xf32>
    %365 = arith.addf %362, %364 : vector<2x128xf32>
    %366 = math.tanh %365 : vector<2x128xf32>
    %367 = arith.truncf %366 : vector<2x128xf32> to vector<2x128xbf16>
    %c1744 = arith.constant 1744 : index
    %c0_127 = arith.constant 0 : index
    %368 = vector.load %arg1[%c1744, %c0_127] : memref<2384x512xbf16, #tpu.memory_space<vmem>>, vector<128x512xbf16>
    %cst_128 = arith.constant dense<0.000000e+00> : vector<2x512xf32>
    %369 = tpu.matmul %367, %368, %cst_128 {dimension_numbers = #tpu.dot_dimension_numbers<[1], [0], [0], [1], [0, 0, 1, 1], [], []>} : vector<2x128xbf16>, vector<128x512xbf16>, vector<2x512xf32> -> vector<2x512xf32>
    %c88 = arith.constant 88 : index
    %c0_129 = arith.constant 0 : index
    %370 = vector.load %arg2[%c88, %c0_129] : memref<104x512xf32, #tpu.memory_space<vmem>>, vector<2x512xf32>
    %cst_130 = arith.constant dense<0.000000e+00> : vector<512xf32>
    %371 = vector.multi_reduction <add>, %369, %cst_130 [0] : vector<2x512xf32> to vector<512xf32>
    %372 = vector.shape_cast %371 : vector<512xf32> to vector<1x512xf32>
    %cst_131 = arith.constant 2.000000e+00 : f32
    %373 = vector.broadcast %cst_131 : f32 to vector<1x512xf32>
    %374 = arith.divf %372, %373 : vector<1x512xf32>
    %375 = vector.broadcast %374 : vector<1x512xf32> to vector<2x512xf32>
    %376 = arith.subf %369, %375 : vector<2x512xf32>
    %377 = arith.mulf %376, %376 : vector<2x512xf32>
    %cst_132 = arith.constant dense<0.000000e+00> : vector<512xf32>
    %378 = vector.multi_reduction <add>, %377, %cst_132 [0] : vector<2x512xf32> to vector<512xf32>
    %379 = vector.shape_cast %378 : vector<512xf32> to vector<1x512xf32>
    %cst_133 = arith.constant 2.000000e+00 : f32
    %380 = vector.broadcast %cst_133 : f32 to vector<1x512xf32>
    %381 = arith.divf %379, %380 : vector<1x512xf32>
    %382 = vector.broadcast %374 : vector<1x512xf32> to vector<2x512xf32>
    %383 = arith.subf %369, %382 : vector<2x512xf32>
    %cst_134 = arith.constant 9.99999974E-6 : f32
    %384 = vector.broadcast %cst_134 : f32 to vector<1x512xf32>
    %385 = arith.addf %381, %384 : vector<1x512xf32>
    %386 = math.rsqrt %385 : vector<1x512xf32>
    %387 = vector.broadcast %386 : vector<1x512xf32> to vector<2x512xf32>
    %388 = arith.mulf %383, %387 : vector<2x512xf32>
    %389 = vector.extract_strided_slice %370 {offsets = [0, 0], sizes = [1, 512], strides = [1, 1]} : vector<2x512xf32> to vector<1x512xf32>
    %390 = vector.broadcast %389 : vector<1x512xf32> to vector<2x512xf32>
    %391 = arith.mulf %388, %390 : vector<2x512xf32>
    %392 = vector.extract_strided_slice %370 {offsets = [1, 0], sizes = [1, 512], strides = [1, 1]} : vector<2x512xf32> to vector<1x512xf32>
    %393 = vector.broadcast %392 : vector<1x512xf32> to vector<2x512xf32>
    %394 = arith.addf %391, %393 : vector<2x512xf32>
    %395 = arith.addf %394, %298 : vector<2x512xf32>
    %396 = math.tanh %395 : vector<2x512xf32>
    %c1872 = arith.constant 1872 : index
    %c0_135 = arith.constant 0 : index
    %397 = vector.load %arg1[%c1872, %c0_135] : memref<2384x512xbf16, #tpu.memory_space<vmem>>, vector<512x128xbf16>
    %c96_136 = arith.constant 96 : index
    %c0_137 = arith.constant 0 : index
    %398 = vector.load %arg2[%c96_136, %c0_137] : memref<104x512xf32, #tpu.memory_space<vmem>>, vector<1x128xf32>
    %399 = arith.truncf %396 : vector<2x512xf32> to vector<2x512xbf16>
    %cst_138 = arith.constant dense<0.000000e+00> : vector<2x128xf32>
    %400 = tpu.matmul %399, %397, %cst_138 {dimension_numbers = #tpu.dot_dimension_numbers<[1], [0], [0], [1], [0, 0, 1, 1], [], []>} : vector<2x512xbf16>, vector<512x128xbf16>, vector<2x128xf32> -> vector<2x128xf32>
    %401 = vector.broadcast %398 : vector<1x128xf32> to vector<2x128xf32>
    %402 = arith.addf %400, %401 : vector<2x128xf32>
    %403 = math.tanh %402 : vector<2x128xf32>
    %c0_139 = arith.constant 0 : index
    %c0_140 = arith.constant 0 : index
    %404 = vector.load %arg3[%c0_139, %c0_140] : memref<2x128xf32, #tpu.memory_space<vmem>>, vector<2x128xf32>
    tpu.vector_store %arg3[%c0_139, %c0_140], %403 {strides = array<i32>} : memref<2x128xf32, #tpu.memory_space<vmem>>, vector<2x128xf32>,
    return
  }
}

</mosaic_0001>

<llo_original>
// kernel: forward.1
$region0: #{forward.1}
  #allocation0 [shape = 'u32[]', space=smem, size = 0x4, offset = 0x4, fixed_abs, tag = 'smem constant byte address 0x4 - core index']
  #allocation1 [shape = 'u32[72,128]{1,0:T(1,128)}', space=vmem, size = 0x9000, scoped, tag = 'internal scratch']
  %s0 = inlined_call_operand.vmem [shape: f32[32,4], index: 0, kind: input, shape index: {}]
  %s1 = inlined_call_operand.hbm [shape: bf16[2384,512], index: 1, kind: input, shape index: {}]
  %s2 = inlined_call_operand.hbm [shape: f32[104,512], index: 2, kind: input, shape index: {}]
  %s3 = inlined_call_operand.hbm [shape: f32[2,128], index: 3, kind: output, shape index: {}]
  %s4 = sld [smem:[#allocation0]]
  $region30: #{forward.1} parent=0
    _
  %s6 = ssub.s32 1, %s4
  %s7 = scalar_select 0, %s6, %s4
  $region1: #{forward.1} parent=0
    #allocation2 [shape = 'u8[2441216]{0}', space=vmem, size = 0x254000, scoped, tag = 'input window, operand 1, single buffered']
    #allocation3 [shape = 's32[1]{0}', space=sflag, size = 0x4, scoped, tag = 'scoped memory for forward.1']
    #allocation4 [shape = 's32[1]{0}', space=sflag, size = 0x4, scoped, tag = 'scoped memory for forward.1']
    #allocation5 [shape = 'u8[212992]{0}', space=vmem, size = 0x34000, scoped, tag = 'input window, operand 2, single buffered']
    #allocation6 [shape = 's32[1]{0}', space=sflag, size = 0x4, scoped, tag = 'scoped memory for forward.1']
    #allocation7 [shape = 'u8[1024]{0}', space=vmem, size = 0x400, scoped, tag = 'output window, operand 0, single buffered']
    %8 = vsyncpa [#allocation3], 0
    %9 = vsyncpa [#allocation6], 0
    %10 = vsyncpa [#allocation4], 0
    // Predicated region
    $region2: #{forward.1} parent=1 // pred_check
      _
    $region3: #{forward.1} parent=1 // pred_check_branch
      %12 = sbr.rel (0) target = $region5
    $region4: #{forward.1} parent=1 // pred_region
      _
    $region5: #{forward.1} parent=1 // pred_fallthru
      _
    // Predicated region
    $region6: #{forward.1} parent=1 // pred_check
      _
    $region7: #{forward.1} parent=1 // pred_check_branch
      %14 = sbr.rel (0) target = $region9
    $region8: #{forward.1} parent=1 // pred_region
      %16 = vsyncadd [#allocation3], 0
      %s17 = sshll.u32 %s1, 4
      %s18 = int_to_ptr.hbm [resolvable:$true] %s17
      %s19 = sshll.u32 [#allocation2], 4
      %s20 = int_to_ptr.vmem [resolvable:$true] %s19
      %25 = dma.hbm_to_vmem [thread:$0]  %s18, 76288, %s20, [#allocation3], 256, 256, 16
    $region9: #{forward.1} parent=1 // pred_fallthru
      _
    // Predicated region
    $region10: #{forward.1} parent=1 // pred_check
      _
    $region11: #{forward.1} parent=1 // pred_check_branch
      %27 = sbr.rel (0) target = $region13
    $region12: #{forward.1} parent=1 // pred_region
      %29 = vsyncadd [#allocation6], 0
      %s30 = sshll.u32 %s2, 4
      %s31 = int_to_ptr.hbm [resolvable:$true] %s30
      %s32 = sshll.u32 [#allocation5], 4
      %s33 = int_to_ptr.vmem [resolvable:$true] %s32
      %38 = dma.hbm_to_vmem [thread:$0]  %s31, 6656, %s33, [#allocation6], 512, 512, 32
    $region13: #{forward.1} parent=1 // pred_fallthru
      _
    // Predicated region
    $region14: #{forward.1} parent=1 // pred_check
      _
    $region15: #{forward.1} parent=1 // pred_check_branch
      %40 = sbr.rel (0) target = $region17
    $region16: #{forward.1} parent=1 // pred_region
      %42 = dma.done [#allocation3], 76288
    $region17: #{forward.1} parent=1 // pred_fallthru
      _
    // Predicated region
    $region18: #{forward.1} parent=1 // pred_check
      _
    $region19: #{forward.1} parent=1 // pred_check_branch
      %44 = sbr.rel (0) target = $region21
    $region20: #{forward.1} parent=1 // pred_region
      %46 = dma.done [#allocation6], 6656
    $region21: #{forward.1} parent=1 // pred_fallthru
      _
    %v48 = vld [vmem:[%s0] sm:$0xff]
    %v49 = vld [vmem:[%s0 + $0x8] sm:$0xff]
    %v50 = vld [vmem:[%s0 + $0x10] sm:$0xff]
    %v51 = vld [vmem:[%s0 + $0x18] sm:$0xff]
    %v52 = vpack.c.bf16 %v49, %v48
    %v53 = vpack.c.bf16 %v51, %v50
    %v54 = vld [vmem:[#allocation2] sm:$0x3]
    %vm55 = vcmask 31744
    %v57 = vsel %vm55, %v52, 0
    %v60 = vsel %vm55, %v53, 0
    %vm62 = vcmask 1041408
    %v64 = vsel %vm62, %v54, 0
    %66 = vmatpush.bf16.msra.mxu0 0
    %67 = vmatpush.bf16.msra.mxu0 0
    %68 = vmatpush.bf16.msra.mxu0 0
    %69 = vmatpush.bf16.msra.mxu0 0
    %70 = vmatpush.bf16.msra.mxu0 0
    %71 = vmatpush.bf16.msra.mxu0 0
    %72 = vmatpush.bf16.msra.mxu0 0
    %73 = vmatpush.bf16.msra.mxu0 %v64
    %74 = vmatmul.bf16.gmra.mxu0 %v57
    %v75 = vpop.f32.mrf.mxu0
    %v76 = vadd.f32 0.0, %v75
    %v77 = vpop.f32.mrf.mxu0
    %v78 = vadd.f32 0.0, %v77
    %79 = vmatmul.bf16.gmra.mxu0 %v60
    %v80 = vpop.f32.mrf.mxu0
    %v81 = vadd.f32 0.0, %v80
    %v82 = vpop.f32.mrf.mxu0
    %v83 = vadd.f32 0.0, %v82
    %84 = vdwg.mxu0
    %v85 = vld [vmem:[#allocation5] sm:$0x3]
    %vm86 = vcmask 130048
    %v87 = vsel %vm86, %v76, 0.0
    %v88 = vsel %vm86, %v78, 0.0
    %v89 = vadd.f32 %v87, %v88
    %v90 = vsel %vm86, %v81, 0.0
    %v91 = vadd.f32 %v89, %v90
    %v92 = vsel %vm86, %v83, 0.0
    %v93 = vadd.f32 %v91, %v92
    %v94 = vrot.slane %v93, 4
    %v95 = vadd.f32 %v93, %v94
    %v96 = vrot.slane %v95, 2
    %v97 = vadd.f32 %v95, %v96
    %v98 = vrot.slane %v97, 1
    %v99 = vadd.f32 %v97, %v98
    %v100 = vrcp.pop 32.0
    %v101 = vmul.f32 32.0, %v100
    %v102 = vsub.f32 1.0, %v101
    %v103 = vmul.f32 %v100, %v102
    %v104 = vadd.f32 %v100, %v103
    %vm105 = vweird.f32 %v100
    %v106 = vsel %vm105, %v100, %v104
    %v107 = vmul.f32 %v99, %v106
    %v108 = vsub.f32 %v76, %v107
    %v109 = vsub.f32 %v78, %v107
    %v110 = vsub.f32 %v81, %v107
    %v111 = vsub.f32 %v83, %v107
    %v112 = vmul.f32 %v108, %v108
    %v113 = vmul.f32 %v109, %v109
    %v114 = vmul.f32 %v110, %v110
    %v115 = vmul.f32 %v111, %v111
    %v116 = vsel %vm86, %v112, 0.0
    %v117 = vsel %vm86, %v113, 0.0
    %v118 = vadd.f32 %v116, %v117
    %v119 = vsel %vm86, %v114, 0.0
    %v120 = vadd.f32 %v118, %v119
    %v121 = vsel %vm86, %v115, 0.0
    %v122 = vadd.f32 %v120, %v121
    %v123 = vrot.slane %v122, 4
    %v124 = vadd.f32 %v122, %v123
    %v125 = vrot.slane %v124, 2
    %v126 = vadd.f32 %v124, %v125
    %v127 = vrot.slane %v126, 1
    %v128 = vadd.f32 %v126, %v127
    %v129 = vmul.f32 %v128, %v106
    %v130 = vadd.f32 %v129, 1e-05
    %v131 = vrsqrt.pop %v130
    %v132 = vmul.f32 %v131, %v130
    %v133 = vmul.f32 %v132, %v131
    %v134 = vmul.f32 0.5, %v133
    %v135 = vsub.f32 1.5, %v134
    %v136 = vmul.f32 %v131, %v135
    %vm137 = vweird.f32 %v130
    %vm138 = vweird.f32 %v131
    %vm139 = vmor %vm137, %vm138
    %v140 = vsel %vm139, %v131, %v136
    %v141 = vmul.f32 %v108, %v140
    %v142 = vmul.f32 %v109, %v140
    %v143 = vmul.f32 %v110, %v140
    %v144 = vmul.f32 %v111, %v140
    %v145 = vperm.slane %v85, 0
    %v146 = vmul.f32 %v141, %v145
    %v147 = vmul.f32 %v142, %v145
    %v148 = vmul.f32 %v143, %v145
    %v149 = vmul.f32 %v144, %v145
    %v150 = vperm.slane %v85, 1
    %v151 = vadd.f32 %v146, %v150
    %v152 = vadd.f32 %v147, %v150
    %v153 = vadd.f32 %v148, %v150
    %v154 = vadd.f32 %v149, %v150
    %v155 = vtanh.pop %v151
    %v156 = vtanh.pop %v152
    %v157 = vtanh.pop %v153
    %v158 = vtanh.pop %v154
    %v159 = vpack.c.bf16 %v156, %v155
    %v160 = vpack.c.bf16 %v158, %v157
    %v161 = vld [vmem:[#allocation2 + $0x80] sm:$0xf]
    %v162 = vld [vmem:[#allocation2 + $0x90] sm:$0xf]
    %v163 = vld [vmem:[#allocation2 + $0xa0] sm:$0xf]
    %v164 = vld [vmem:[#allocation2 + $0xb0] sm:$0xf]
    %v169 = vunpack.c.l.b16 %v161
    %v170 = vunpack.c.l.b16 %v162
    %v171 = vunpack.c.l.b16 %v163
    %v172 = vunpack.c.l.b16 %v164
    %v173 = vpack.c.b16 %v170, %v169
    %v174 = vpack.c.b16 %v172, %v171
    %vm175 = vcmask 261120
    %v177 = vsel %vm175, %v173, 0
    %v180 = vsel %vm175, %v174, 0
    %182 = vmatpush.bf16.msra.mxu0 0
    %183 = vmatpush.bf16.msra.mxu0 0
    %184 = vmatpush.bf16.msra.mxu0 0
    %185 = vmatpush.bf16.msra.mxu0 0
    %186 = vmatpush.bf16.msra.mxu0 0
    %187 = vmatpush.bf16.msra.mxu0 0
    %188 = vmatpush.bf16.msra.mxu0 %v160
    %189 = vmatpush.bf16.msra.mxu0 %v159
    %190 = vmatmul.bf16.gmra.mxu0 %v177
    %v191 = vpop.f32.mrf.mxu0
    %v192 = vadd.f32 0.0, %v191
    %v193 = vpop.f32.mrf.mxu0
    %v194 = vadd.f32 0.0, %v193
    %195 = vmatmul.bf16.gmra.mxu0 %v180
    %v196 = vpop.f32.mrf.mxu0
    %v197 = vadd.f32 0.0, %v196
    %v198 = vpop.f32.mrf.mxu0
    %v199 = vadd.f32 0.0, %v198
    %200 = vdwg.mxu0
    %v201 = vpack.c.bf16 %v192, %v192
    %v202 = vpack.c.bf16 %v194, %v194
    %v203 = vpack.c.bf16 %v197, %v197
    %v204 = vpack.c.bf16 %v199, %v199
    %v205 = vld [vmem:[#allocation2 + $0xc0] sm:$0xf]
    %v206 = vld [vmem:[#allocation2 + $0xd0] sm:$0xf]
    %v207 = vld [vmem:[#allocation2 + $0xe0] sm:$0xf]
    %v208 = vld [vmem:[#allocation2 + $0xf0] sm:$0xf]
    %v213 = vunpack.c.l.b16 %v205
    %v214 = vunpack.c.l.b16 %v206
    %v215 = vunpack.c.l.b16 %v207
    %v216 = vunpack.c.l.b16 %v208
    %v217 = vpack.c.b16 %v214, %v213
    %v218 = vpack.c.b16 %v216, %v215
    %v220 = vsel %vm175, %v217, 0
    %v223 = vsel %vm175, %v218, 0
    %225 = vmatpush.bf16.msra.mxu0 0
    %226 = vmatpush.bf16.msra.mxu0 0
    %227 = vmatpush.bf16.msra.mxu0 0
    %228 = vmatpush.bf16.msra.mxu0 0
    %229 = vmatpush.bf16.msra.mxu0 0
    %230 = vmatpush.bf16.msra.mxu0 0
    %231 = vmatpush.bf16.msra.mxu0 %v160
    %232 = vmatpush.bf16.msra.mxu0 %v159
    %233 = vmatmul.bf16.gmra.mxu0 %v220
    %v234 = vpop.f32.mrf.mxu0
    %v235 = vadd.f32 0.0, %v234
    %v236 = vpop.f32.mrf.mxu0
    %v237 = vadd.f32 0.0, %v236
    %238 = vmatmul.bf16.gmra.mxu0 %v223
    %v239 = vpop.f32.mrf.mxu0
    %v240 = vadd.f32 0.0, %v239
    %v241 = vpop.f32.mrf.mxu0
    %v242 = vadd.f32 0.0, %v241
    %243 = vdwg.mxu0
    %v244 = vpack.c.bf16 %v235, %v235
    %v245 = vpack.c.bf16 %v237, %v237
    %v246 = vpack.c.bf16 %v240, %v240
    %v247 = vpack.c.bf16 %v242, %v242
    %v248 = vld [vmem:[#allocation2 + $0x100] sm:$0xf]
    %v249 = vld [vmem:[#allocation2 + $0x110] sm:$0xf]
    %v250 = vld [vmem:[#allocation2 + $0x120] sm:$0xf]
    %v251 = vld [vmem:[#allocation2 + $0x130] sm:$0xf]
    %v256 = vunpack.c.l.b16 %v248
    %v257 = vunpack.c.l.b16 %v249
    %v258 = vunpack.c.l.b16 %v250
    %v259 = vunpack.c.l.b16 %v251
    %v260 = vpack.c.b16 %v257, %v256
    %v261 = vpack.c.b16 %v259, %v258
    %v263 = vsel %vm175, %v260, 0
    %v266 = vsel %vm175, %v261, 0
    %268 = vmatpush.bf16.msra.mxu0 0
    %269 = vmatpush.bf16.msra.mxu0 0
    %270 = vmatpush.bf16.msra.mxu0 0
    %271 = vmatpush.bf16.msra.mxu0 0
    %272 = vmatpush.bf16.msra.mxu0 0
    %273 = vmatpush.bf16.msra.mxu0 0
    %274 = vmatpush.bf16.msra.mxu0 %v160
    %275 = vmatpush.bf16.msra.mxu0 %v159
    %276 = vmatmul.bf16.gmra.mxu0 %v263
    %v277 = vpop.f32.mrf.mxu0
    %v278 = vadd.f32 0.0, %v277
    %v279 = vpop.f32.mrf.mxu0
    %v280 = vadd.f32 0.0, %v279
    %281 = vmatmul.bf16.gmra.mxu0 %v266
    %v282 = vpop.f32.mrf.mxu0
    %v283 = vadd.f32 0.0, %v282
    %v284 = vpop.f32.mrf.mxu0
    %v285 = vadd.f32 0.0, %v284
    %286 = vdwg.mxu0
    %v287 = vpack.c.bf16 %v278, %v278
    %v288 = vpack.c.bf16 %v280, %v280
    %v289 = vpack.c.bf16 %v283, %v283
    %v290 = vpack.c.bf16 %v285, %v285
    %v295 = vunpack.c.l.b16 %v201
    %v296 = vunpack.c.l.b16 %v202
    %v297 = vunpack.c.l.b16 %v203
    %v298 = vunpack.c.l.b16 %v204
    %v299 = vpack.c.b16 %v296, %v295
    %v300 = vpack.c.b16 %v298, %v297
    %v305 = vunpack.c.l.b16 %v244
    %v306 = vunpack.c.l.b16 %v245
    %v307 = vunpack.c.l.b16 %v246
    %v308 = vunpack.c.l.b16 %v247
    %v309 = vpack.c.b16 %v306, %v305
    %v310 = vpack.c.b16 %v308, %v307
    %311 = vrot.lane.b32.xlu0 %v309, 16
    %v312 = vpop.permute.xlu0 %311
    %313 = vrot.lane.b32.xlu0 %v310, 16
    %v314 = vpop.permute.xlu0 %313
    %v319 = vunpack.c.l.b16 %v287
    %v320 = vunpack.c.l.b16 %v288
    %v321 = vunpack.c.l.b16 %v289
    %v322 = vunpack.c.l.b16 %v290
    %v323 = vpack.c.b16 %v320, %v319
    %v324 = vpack.c.b16 %v322, %v321
    %325 = vrot.lane.b32.xlu0 %v323, 32
    %v326 = vpop.permute.xlu0 %325
    %327 = vrot.lane.b32.xlu0 %v324, 32
    %v328 = vpop.permute.xlu0 %327
    %v331 = vsel %vm86, %v299, %v312
    %v334 = vsel %vm86, %v300, %v314
    %v336 = vsel %vm175, %v331, %v326
    %v338 = vsel %vm175, %v334, %v328
    %v339 = vld [vmem:[#allocation2 + $0x20] sm:$0xf]
    %v340 = vld [vmem:[#allocation2 + $0x30] sm:$0xf]
    %v341 = vld [vmem:[#allocation2 + $0x40] sm:$0xf]
    %v342 = vld [vmem:[#allocation2 + $0x50] sm:$0xf]
    %v343 = vld [vmem:[#allocation2 + $0x60] sm:$0xf]
    %v344 = vld [vmem:[#allocation2 + $0x70] sm:$0xf]
    %v351 = vunpack.c.l.b16 %v339
    %v352 = vunpack.c.l.b16 %v340
    %v353 = vunpack.c.l.b16 %v341
    %v354 = vunpack.c.l.b16 %v342
    %v355 = vunpack.c.l.b16 %v343
    %v356 = vunpack.c.l.b16 %v344
    %v357 = vpack.c.b16 %v352, %v351
    %v358 = vpack.c.b16 %v354, %v353
    %v359 = vpack.c.b16 %v356, %v355
    %vm363 = vcmask 392192
    %v364 = vsel %vm363, %v336, 0
    %v366 = vsel %vm363, %v338, 0
    %368 = vmatpush.bf16.msra.mxu0 0
    %369 = vmatpush.bf16.msra.mxu0 0
    %370 = vmatpush.bf16.msra.mxu0 0
    %371 = vmatpush.bf16.msra.mxu0 0
    %372 = vmatpush.bf16.msra.mxu0 0
    %373 = vmatpush.bf16.msra.mxu0 %v359
    %374 = vmatpush.bf16.msra.mxu0 %v358
    %375 = vmatpush.bf16.msra.mxu0 %v357
    %376 = vmatmul.bf16.gmra.mxu0 %v364
    %v377 = vpop.f32.mrf.mxu0
    %v378 = vadd.f32 0.0, %v377
    %v379 = vpop.f32.mrf.mxu0
    %v380 = vadd.f32 0.0, %v379
    %381 = vmatmul.bf16.gmra.mxu0 %v366
    %v382 = vpop.f32.mrf.mxu0
    %v383 = vadd.f32 0.0, %v382
    %v384 = vpop.f32.mrf.mxu0
    %v385 = vadd.f32 0.0, %v384
    %386 = vdwg.mxu0
    %v387 = vld [vmem:[#allocation5 + $0x20] sm:$0x3]
    %v388 = vsel %vm86, %v378, 0.0
    %v389 = vsel %vm86, %v380, 0.0
    %v390 = vadd.f32 %v388, %v389
    %v391 = vsel %vm86, %v383, 0.0
    %v392 = vadd.f32 %v390, %v391
    %v393 = vsel %vm86, %v385, 0.0
    %v394 = vadd.f32 %v392, %v393
    %v395 = vrot.slane %v394, 4
    %v396 = vadd.f32 %v394, %v395
    %v397 = vrot.slane %v396, 2
    %v398 = vadd.f32 %v396, %v397
    %v399 = vrot.slane %v398, 1
    %v400 = vadd.f32 %v398, %v399
    %v401 = vmul.f32 %v400, %v106
    %v402 = vsub.f32 %v378, %v401
    %v403 = vsub.f32 %v380, %v401
    %v404 = vsub.f32 %v383, %v401
    %v405 = vsub.f32 %v385, %v401
    %v406 = vmul.f32 %v402, %v402
    %v407 = vmul.f32 %v403, %v403
    %v408 = vmul.f32 %v404, %v404
    %v409 = vmul.f32 %v405, %v405
    %v410 = vsel %vm86, %v406, 0.0
    %v411 = vsel %vm86, %v407, 0.0
    %v412 = vadd.f32 %v410, %v411
    %v413 = vsel %vm86, %v408, 0.0
    %v414 = vadd.f32 %v412, %v413
    %v415 = vsel %vm86, %v409, 0.0
    %v416 = vadd.f32 %v414, %v415
    %v417 = vrot.slane %v416, 4
    %v418 = vadd.f32 %v416, %v417
    %v419 = vrot.slane %v418, 2
    %v420 = vadd.f32 %v418, %v419
    %v421 = vrot.slane %v420, 1
    %v422 = vadd.f32 %v420, %v421
    %v423 = vmul.f32 %v422, %v106
    %v424 = vadd.f32 %v423, 1e-05
    %v425 = vrsqrt.pop %v424
    %v426 = vmul.f32 %v425, %v424
    %v427 = vmul.f32 %v426, %v425
    %v428 = vmul.f32 0.5, %v427
    %v429 = vsub.f32 1.5, %v428
    %v430 = vmul.f32 %v425, %v429
    %vm431 = vweird.f32 %v424
    %vm432 = vweird.f32 %v425
    %vm433 = vmor %vm431, %vm432
    %v434 = vsel %vm433, %v425, %v430
    %v435 = vmul.f32 %v402, %v434
    %v436 = vmul.f32 %v403, %v434
    %v437 = vmul.f32 %v404, %v434
    %v438 = vmul.f32 %v405, %v434
    %v439 = vperm.slane %v387, 0
    %v440 = vmul.f32 %v435, %v439
    %v441 = vmul.f32 %v436, %v439
    %v442 = vmul.f32 %v437, %v439
    %v443 = vmul.f32 %v438, %v439
    %v444 = vperm.slane %v387, 1
    %v445 = vadd.f32 %v440, %v444
    %v446 = vadd.f32 %v441, %v444
    %v447 = vadd.f32 %v442, %v444
    %v448 = vadd.f32 %v443, %v444
    %v449 = vtanh.pop %v445
    %v450 = vtanh.pop %v446
    %v451 = vtanh.pop %v447
    %v452 = vtanh.pop %v448
    %v453 = vpack.c.bf16 %v450, %v449
    %v454 = vpack.c.bf16 %v452, %v451
    %v455 = vld [vmem:[#allocation2 + $0x220] sm:$0xf]
    %v456 = vld [vmem:[#allocation2 + $0x230] sm:$0xf]
    %v459 = vunpack.c.l.b16 %v455
    %v460 = vunpack.c.l.b16 %v456
    %v461 = vpack.c.b16 %v460, %v459
    %v463 = vsel %vm175, %v461, 0
    %465 = vmatpush.bf16.msra.mxu0 0
    %466 = vmatpush.bf16.msra.mxu0 0
    %467 = vmatpush.bf16.msra.mxu0 0
    %468 = vmatpush.bf16.msra.mxu0 0
    %469 = vmatpush.bf16.msra.mxu0 0
    %470 = vmatpush.bf16.msra.mxu0 0
    %471 = vmatpush.bf16.msra.mxu0 %v454
    %472 = vmatpush.bf16.msra.mxu0 %v453
    %473 = vmatmul.bf16.gmra.mxu0 %v463
    %v474 = vpop.f32.mrf.mxu0
    %v475 = vadd.f32 0.0, %v474
    %v476 = vpop.f32.mrf.mxu0
    %v477 = vadd.f32 0.0, %v476
    %478 = vdwg.mxu0
    %v479 = vpack.c.bf16 %v475, %v475
    %v480 = vpack.c.bf16 %v477, %v477
    %v481 = vld [vmem:[#allocation2 + $0x240] sm:$0xf]
    %v482 = vld [vmem:[#allocation2 + $0x250] sm:$0xf]
    %v485 = vunpack.c.l.b16 %v481
    %v486 = vunpack.c.l.b16 %v482
    %v487 = vpack.c.b16 %v486, %v485
    %v489 = vsel %vm175, %v487, 0
    %491 = vmatpush.bf16.msra.mxu0 0
    %492 = vmatpush.bf16.msra.mxu0 0
    %493 = vmatpush.bf16.msra.mxu0 0
    %494 = vmatpush.bf16.msra.mxu0 0
    %495 = vmatpush.bf16.msra.mxu0 0
    %496 = vmatpush.bf16.msra.mxu0 0
    %497 = vmatpush.bf16.msra.mxu0 %v454
    %498 = vmatpush.bf16.msra.mxu0 %v453
    %499 = vmatmul.bf16.gmra.mxu0 %v489
    %v500 = vpop.f32.mrf.mxu0
    %v501 = vadd.f32 0.0, %v500
    %v502 = vpop.f32.mrf.mxu0
    %v503 = vadd.f32 0.0, %v502
    %504 = vdwg.mxu0
    %v505 = vpack.c.bf16 %v501, %v501
    %v506 = vpack.c.bf16 %v503, %v503
    %v507 = vld [vmem:[#allocation2 + $0x260] sm:$0xf]
    %v508 = vld [vmem:[#allocation2 + $0x270] sm:$0xf]
    %v511 = vunpack.c.l.b16 %v507
    %v512 = vunpack.c.l.b16 %v508
    %v513 = vpack.c.b16 %v512, %v511
    %v515 = vsel %vm175, %v513, 0
    %517 = vmatpush.bf16.msra.mxu0 0
    %518 = vmatpush.bf16.msra.mxu0 0
    %519 = vmatpush.bf16.msra.mxu0 0
    %520 = vmatpush.bf16.msra.mxu0 0
    %521 = vmatpush.bf16.msra.mxu0 0
    %522 = vmatpush.bf16.msra.mxu0 0
    %523 = vmatpush.bf16.msra.mxu0 %v454
    %524 = vmatpush.bf16.msra.mxu0 %v453
    %525 = vmatmul.bf16.gmra.mxu0 %v515
    %v526 = vpop.f32.mrf.mxu0
    %v527 = vadd.f32 0.0, %v526
    %v528 = vpop.f32.mrf.mxu0
    %v529 = vadd.f32 0.0, %v528
    %530 = vdwg.mxu0
    %v531 = vpack.c.bf16 %v527, %v527
    %v532 = vpack.c.bf16 %v529, %v529
    %v533 = vld [vmem:[#allocation2 + $0x280] sm:$0xf]
    %v534 = vld [vmem:[#allocation2 + $0x290] sm:$0xf]
    %v537 = vunpack.c.l.b16 %v533
    %v538 = vunpack.c.l.b16 %v534
    %v539 = vpack.c.b16 %v538, %v537
    %v541 = vsel %vm175, %v539, 0
    %543 = vmatpush.bf16.msra.mxu0 0
    %544 = vmatpush.bf16.msra.mxu0 0
    %545 = vmatpush.bf16.msra.mxu0 0
    %546 = vmatpush.bf16.msra.mxu0 0
    %547 = vmatpush.bf16.msra.mxu0 0
    %548 = vmatpush.bf16.msra.mxu0 0
    %549 = vmatpush.bf16.msra.mxu0 %v454
    %550 = vmatpush.bf16.msra.mxu0 %v453
    %551 = vmatmul.bf16.gmra.mxu0 %v541
    %v552 = vpop.f32.mrf.mxu0
    %v553 = vadd.f32 0.0, %v552
    %v554 = vpop.f32.mrf.mxu0
    %v555 = vadd.f32 0.0, %v554
    %556 = vdwg.mxu0
    %v557 = vpack.c.bf16 %v553, %v553
    %v558 = vpack.c.bf16 %v555, %v555
    %v559 = vld [vmem:[#allocation2 + $0x2a0] sm:$0xf]
    %v560 = vld [vmem:[#allocation2 + $0x2b0] sm:$0xf]
    %v563 = vunpack.c.l.b16 %v559
    %v564 = vunpack.c.l.b16 %v560
    %v565 = vpack.c.b16 %v564, %v563
    %v567 = vsel %vm175, %v565, 0
    %569 = vmatpush.bf16.msra.mxu0 0
    %570 = vmatpush.bf16.msra.mxu0 0
    %571 = vmatpush.bf16.msra.mxu0 0
    %572 = vmatpush.bf16.msra.mxu0 0
    %573 = vmatpush.bf16.msra.mxu0 0
    %574 = vmatpush.bf16.msra.mxu0 0
    %575 = vmatpush.bf16.msra.mxu0 %v454
    %576 = vmatpush.bf16.msra.mxu0 %v453
    %577 = vmatmul.bf16.gmra.mxu0 %v567
    %v578 = vpop.f32.mrf.mxu0
    %v579 = vadd.f32 0.0, %v578
    %v580 = vpop.f32.mrf.mxu0
    %v581 = vadd.f32 0.0, %v580
    %582 = vdwg.mxu0
    %v583 = vpack.c.bf16 %v579, %v579
    %v584 = vpack.c.bf16 %v581, %v581
    %v585 = vld [vmem:[#allocation2 + $0x2c0] sm:$0xf]
    %v586 = vld [vmem:[#allocation2 + $0x2d0] sm:$0xf]
    %v589 = vunpack.c.l.b16 %v585
    %v590 = vunpack.c.l.b16 %v586
    %v591 = vpack.c.b16 %v590, %v589
    %v593 = vsel %vm175, %v591, 0
    %595 = vmatpush.bf16.msra.mxu0 0
    %596 = vmatpush.bf16.msra.mxu0 0
    %597 = vmatpush.bf16.msra.mxu0 0
    %598 = vmatpush.bf16.msra.mxu0 0
    %599 = vmatpush.bf16.msra.mxu0 0
    %600 = vmatpush.bf16.msra.mxu0 0
    %601 = vmatpush.bf16.msra.mxu0 %v454
    %602 = vmatpush.bf16.msra.mxu0 %v453
    %603 = vmatmul.bf16.gmra.mxu0 %v593
    %v604 = vpop.f32.mrf.mxu0
    %v605 = vadd.f32 0.0, %v604
    %v606 = vpop.f32.mrf.mxu0
    %v607 = vadd.f32 0.0, %v606
    %608 = vdwg.mxu0
    %v609 = vpack.c.bf16 %v605, %v605
    %v610 = vpack.c.bf16 %v607, %v607
    %v611 = vld [vmem:[#allocation2 + $0x2e0] sm:$0xf]
    %v612 = vld [vmem:[#allocation2 + $0x2f0] sm:$0xf]
    %v615 = vunpack.c.l.b16 %v611
    %v616 = vunpack.c.l.b16 %v612
    %v617 = vpack.c.b16 %v616, %v615
    %v619 = vsel %vm175, %v617, 0
    %621 = vmatpush.bf16.msra.mxu0 0
    %622 = vmatpush.bf16.msra.mxu0 0
    %623 = vmatpush.bf16.msra.mxu0 0
    %624 = vmatpush.bf16.msra.mxu0 0
    %625 = vmatpush.bf16.msra.mxu0 0
    %626 = vmatpush.bf16.msra.mxu0 0
    %627 = vmatpush.bf16.msra.mxu0 %v454
    %628 = vmatpush.bf16.msra.mxu0 %v453
    %629 = vmatmul.bf16.gmra.mxu0 %v619
    %v630 = vpop.f32.mrf.mxu0
    %v631 = vadd.f32 0.0, %v630
    %v632 = vpop.f32.mrf.mxu0
    %v633 = vadd.f32 0.0, %v632
    %634 = vdwg.mxu0
    %v635 = vpack.c.bf16 %v631, %v631
    %v636 = vpack.c.bf16 %v633, %v633
    %v639 = vunpack.c.l.b16 %v479
    %v640 = vunpack.c.l.b16 %v480
    %v641 = vpack.c.b16 %v640, %v639
    %v644 = vunpack.c.l.b16 %v505
    %v645 = vunpack.c.l.b16 %v506
    %v646 = vpack.c.b16 %v645, %v644
    %647 = vrot.lane.b32.xlu0 %v646, 16
    %v648 = vpop.permute.xlu0 %647
    %v651 = vunpack.c.l.b16 %v531
    %v652 = vunpack.c.l.b16 %v532
    %v653 = vpack.c.b16 %v652, %v651
    %654 = vrot.lane.b32.xlu0 %v653, 32
    %v655 = vpop.permute.xlu0 %654
    %v658 = vunpack.c.l.b16 %v557
    %v659 = vunpack.c.l.b16 %v558
    %v660 = vpack.c.b16 %v659, %v658
    %661 = vrot.lane.b32.xlu0 %v660, 48
    %v662 = vpop.permute.xlu0 %661
    %v665 = vunpack.c.l.b16 %v583
    %v666 = vunpack.c.l.b16 %v584
    %v667 = vpack.c.b16 %v666, %v665
    %668 = vrot.lane.b32.xlu0 %v667, 64
    %v669 = vpop.permute.xlu0 %668
    %v672 = vunpack.c.l.b16 %v609
    %v673 = vunpack.c.l.b16 %v610
    %v674 = vpack.c.b16 %v673, %v672
    %675 = vrot.lane.b32.xlu0 %v674, 80
    %v676 = vpop.permute.xlu0 %675
    %v679 = vunpack.c.l.b16 %v635
    %v680 = vunpack.c.l.b16 %v636
    %v681 = vpack.c.b16 %v680, %v679
    %682 = vrot.lane.b32.xlu0 %v681, 96
    %v683 = vpop.permute.xlu0 %682
    %v686 = vsel %vm86, %v641, %v648
    %v688 = vsel %vm175, %v686, %v655
    %v690 = vsel %vm363, %v688, %v662
    %vm691 = vcmask 523264
    %v693 = vsel %vm691, %v690, %v669
    %vm694 = vcmask 654336
    %v696 = vsel %vm694, %v693, %v676
    %vm697 = vcmask 785408
    %v699 = vsel %vm697, %v696, %v683
    %v700 = vld [vmem:[#allocation2 + $0x140] sm:$0xf]
    %v701 = vld [vmem:[#allocation2 + $0x150] sm:$0xf]
    %v702 = vld [vmem:[#allocation2 + $0x160] sm:$0xf]
    %v703 = vld [vmem:[#allocation2 + $0x170] sm:$0xf]
    %v704 = vld [vmem:[#allocation2 + $0x180] sm:$0xf]
    %v705 = vld [vmem:[#allocation2 + $0x190] sm:$0xf]
    %v706 = vld [vmem:[#allocation2 + $0x1a0] sm:$0xf]
    %v707 = vld [vmem:[#allocation2 + $0x1b0] sm:$0xf]
    %v708 = vld [vmem:[#allocation2 + $0x1c0] sm:$0xf]
    %v709 = vld [vmem:[#allocation2 + $0x1d0] sm:$0xf]
    %v710 = vld [vmem:[#allocation2 + $0x1e0] sm:$0xf]
    %v711 = vld [vmem:[#allocation2 + $0x1f0] sm:$0xf]
    %v712 = vld [vmem:[#allocation2 + $0x200] sm:$0xf]
    %v713 = vld [vmem:[#allocation2 + $0x210] sm:$0xf]
    %v728 = vunpack.c.l.b16 %v700
    %v729 = vunpack.c.l.b16 %v701
    %v730 = vunpack.c.l.b16 %v702
    %v731 = vunpack.c.l.b16 %v703
    %v732 = vunpack.c.l.b16 %v704
    %v733 = vunpack.c.l.b16 %v705
    %v734 = vunpack.c.l.b16 %v706
    %v735 = vunpack.c.l.b16 %v707
    %v736 = vunpack.c.l.b16 %v708
    %v737 = vunpack.c.l.b16 %v709
    %v738 = vunpack.c.l.b16 %v710
    %v739 = vunpack.c.l.b16 %v711
    %v740 = vunpack.c.l.b16 %v712
    %v741 = vunpack.c.l.b16 %v713
    %v742 = vpack.c.b16 %v729, %v728
    %v743 = vpack.c.b16 %v731, %v730
    %v744 = vpack.c.b16 %v733, %v732
    %v745 = vpack.c.b16 %v735, %v734
    %v746 = vpack.c.b16 %v737, %v736
    %v747 = vpack.c.b16 %v739, %v738
    %v748 = vpack.c.b16 %v741, %v740
    %vm756 = vcmask 916480
    %v757 = vsel %vm756, %v699, 0
    %759 = vmatpush.bf16.msra.mxu0 0
    %760 = vmatpush.bf16.msra.mxu0 %v748
    %761 = vmatpush.bf16.msra.mxu0 %v747
    %762 = vmatpush.bf16.msra.mxu0 %v746
    %763 = vmatpush.bf16.msra.mxu0 %v745
    %764 = vmatpush.bf16.msra.mxu0 %v744
    %765 = vmatpush.bf16.msra.mxu0 %v743
    %766 = vmatpush.bf16.msra.mxu0 %v742
    %767 = vmatmul.bf16.gmra.mxu0 %v757
    %v768 = vpop.f32.mrf.mxu0
    %v769 = vadd.f32 0.0, %v768
    %v770 = vpop.f32.mrf.mxu0
    %v771 = vadd.f32 0.0, %v770
    %772 = vdwg.mxu0
    %v773 = vld [vmem:[#allocation5 + $0x40] sm:$0x3]
    %v774 = vsel %vm86, %v769, 0.0
    %v775 = vsel %vm86, %v771, 0.0
    %v776 = vadd.f32 %v774, %v775
    %v777 = vrot.slane %v776, 4
    %v778 = vadd.f32 %v776, %v777
    %v779 = vrot.slane %v778, 2
    %v780 = vadd.f32 %v778, %v779
    %v781 = vrot.slane %v780, 1
    %v782 = vadd.f32 %v780, %v781
    %v783 = vrcp.pop 16.0
    %v784 = vmul.f32 16.0, %v783
    %v785 = vsub.f32 1.0, %v784
    %v786 = vmul.f32 %v783, %v785
    %v787 = vadd.f32 %v783, %v786
    %vm788 = vweird.f32 %v783
    %v789 = vsel %vm788, %v783, %v787
    %v790 = vmul.f32 %v782, %v789
    %v791 = vsub.f32 %v769, %v790
    %v792 = vsub.f32 %v771, %v790
    %v793 = vmul.f32 %v791, %v791
    %v794 = vmul.f32 %v792, %v792
    %v795 = vsel %vm86, %v793, 0.0
    %v796 = vsel %vm86, %v794, 0.0
    %v797 = vadd.f32 %v795, %v796
    %v798 = vrot.slane %v797, 4
    %v799 = vadd.f32 %v797, %v798
    %v800 = vrot.slane %v799, 2
    %v801 = vadd.f32 %v799, %v800
    %v802 = vrot.slane %v801, 1
    %v803 = vadd.f32 %v801, %v802
    %v804 = vmul.f32 %v803, %v789
    %v805 = vadd.f32 %v804, 1e-05
    %v806 = vrsqrt.pop %v805
    %v807 = vmul.f32 %v806, %v805
    %v808 = vmul.f32 %v807, %v806
    %v809 = vmul.f32 0.5, %v808
    %v810 = vsub.f32 1.5, %v809
    %v811 = vmul.f32 %v806, %v810
    %vm812 = vweird.f32 %v805
    %vm813 = vweird.f32 %v806
    %vm814 = vmor %vm812, %vm813
    %v815 = vsel %vm814, %v806, %v811
    %v816 = vmul.f32 %v791, %v815
    %v817 = vmul.f32 %v792, %v815
    %v818 = vperm.slane %v773, 0
    %v819 = vmul.f32 %v816, %v818
    %v820 = vmul.f32 %v817, %v818
    %v821 = vperm.slane %v773, 1
    %v822 = vadd.f32 %v819, %v821
    %v823 = vadd.f32 %v820, %v821
    %v824 = vtanh.pop %v822
    %v825 = vtanh.pop %v823
    %v826 = vpack.c.bf16 %v825, %v824
    %v827 = vld [vmem:[#allocation5 + $0x60] sm:$0xff]
    %v828 = vld [vmem:[#allocation2 + $0x300] sm:$0xf]
    %830 = vset.pattern.permute.xlu0 0
    %831 = vperm.xlu0 %830, %v827
    %v832 = vpop.permute.xlu0 %831
    %v835 = vsel %vm86, %v828, 0
    %837 = vmatpush.bf16.msra.mxu0 0
    %838 = vmatpush.bf16.msra.mxu0 0
    %839 = vmatpush.bf16.msra.mxu0 0
    %840 = vmatpush.bf16.msra.mxu0 0
    %841 = vmatpush.bf16.msra.mxu0 0
    %842 = vmatpush.bf16.msra.mxu0 0
    %843 = vmatpush.bf16.msra.mxu0 0
    %844 = vmatpush.bf16.msra.mxu0 %v826
    %845 = vmatmul.bf16.gmra.mxu0 %v835
    %v846 = vpop.f32.mrf.mxu0
    %v847 = vadd.f32 %v832, %v846
    %v848 = vpop.f32.mrf.mxu0
    %849 = vdwg.mxu0
    %v850 = vld [vmem:[#allocation2 + $0x320] sm:$0xf]
    %851 = vset.pattern.permute.xlu0 1
    %852 = vperm.xlu0 %851, %v827
    %v853 = vpop.permute.xlu0 %852
    %v856 = vsel %vm86, %v850, 0
    %858 = vmatpush.bf16.msra.mxu0 0
    %859 = vmatpush.bf16.msra.mxu0 0
    %860 = vmatpush.bf16.msra.mxu0 0
    %861 = vmatpush.bf16.msra.mxu0 0
    %862 = vmatpush.bf16.msra.mxu0 0
    %863 = vmatpush.bf16.msra.mxu0 0
    %864 = vmatpush.bf16.msra.mxu0 0
    %865 = vmatpush.bf16.msra.mxu0 %v826
    %866 = vmatmul.bf16.gmra.mxu0 %v856
    %v867 = vpop.f32.mrf.mxu0
    %v868 = vadd.f32 %v853, %v867
    %v869 = vpop.f32.mrf.mxu0
    %870 = vdwg.mxu0
    %v871 = vmax.f32 %v847, %v868
    %v872 = vld [vmem:[#allocation2 + $0x340] sm:$0xf]
    %873 = vset.pattern.permute.xlu0 2
    %874 = vperm.xlu0 %873, %v827
    %v875 = vpop.permute.xlu0 %874
    %v878 = vsel %vm86, %v872, 0
    %880 = vmatpush.bf16.msra.mxu0 0
    %881 = vmatpush.bf16.msra.mxu0 0
    %882 = vmatpush.bf16.msra.mxu0 0
    %883 = vmatpush.bf16.msra.mxu0 0
    %884 = vmatpush.bf16.msra.mxu0 0
    %885 = vmatpush.bf16.msra.mxu0 0
    %886 = vmatpush.bf16.msra.mxu0 0
    %887 = vmatpush.bf16.msra.mxu0 %v826
    %888 = vmatmul.bf16.gmra.mxu0 %v878
    %v889 = vpop.f32.mrf.mxu0
    %v890 = vadd.f32 %v875, %v889
    %v891 = vpop.f32.mrf.mxu0
    %892 = vdwg.mxu0
    %v893 = vmax.f32 %v871, %v890
    %v894 = vpack.c.bf16 %v893, %v893
    %v895 = vld [vmem:[#allocation2 + $0x380] sm:$0x3]
    %vm896 = vcmask 64512
    %v898 = vsel %vm896, %v895, 0
    %vm900 = vcmask 1043456
    %v902 = vsel %vm900, %v894, 0
    %904 = vmatpush.bf16.msra.mxu0 0
    %905 = vmatpush.bf16.msra.mxu0 0
    %906 = vmatpush.bf16.msra.mxu0 0
    %907 = vmatpush.bf16.msra.mxu0 0
    %908 = vmatpush.bf16.msra.mxu0 0
    %909 = vmatpush.bf16.msra.mxu0 0
    %910 = vmatpush.bf16.msra.mxu0 0
    %911 = vmatpush.bf16.msra.mxu0 %v902
    %912 = vmatmul.bf16.gmra.mxu0 %v898
    %v913 = vpop.f32.mrf.mxu0
    %v914 = vadd.f32 0.0, %v913
    %v915 = vpop.f32.mrf.mxu0
    %916 = vdwg.mxu0
    %v917 = vpack.c.bf16 %v914, %v914
    %v918 = vld [vmem:[#allocation2 + $0x360] sm:$0xff]
    %v919 = vld [vmem:[#allocation2 + $0x370] sm:$0xff]
    %v922 = vunpack.c.l.b16 %v918
    %v923 = vunpack.c.h.b16 %v918
    %v924 = vunpack.c.l.b16 %v919
    %v925 = vunpack.c.h.b16 %v919
    %v926 = vpack.c.b16 %v924, %v922
    %v927 = vpack.c.b16 %v925, %v923
    %v931 = vsel %vm86, %v917, 0
    %933 = vmatpush.bf16.msra.mxu0 0
    %934 = vmatpush.bf16.msra.mxu0 0
    %935 = vmatpush.bf16.msra.mxu0 0
    %936 = vmatpush.bf16.msra.mxu0 0
    %937 = vmatpush.bf16.msra.mxu0 0
    %938 = vmatpush.bf16.msra.mxu0 0
    %939 = vmatpush.bf16.msra.mxu0 0
    %940 = vmatpush.bf16.msra.mxu0 %v926
    %941 = vmatmul.bf16.gmra.mxu0 %v931
    %v942 = vpop.f32.mrf.mxu0
    %v943 = vadd.f32 0.0, %v942
    %v944 = vpop.f32.mrf.mxu0
    %945 = vdwg.mxu0
    %946 = vmatpush.bf16.msra.mxu0 0
    %947 = vmatpush.bf16.msra.mxu0 0
    %948 = vmatpush.bf16.msra.mxu0 0
    %949 = vmatpush.bf16.msra.mxu0 0
    %950 = vmatpush.bf16.msra.mxu0 0
    %951 = vmatpush.bf16.msra.mxu0 0
    %952 = vmatpush.bf16.msra.mxu0 0
    %953 = vmatpush.bf16.msra.mxu0 %v927
    %954 = vmatmul.bf16.gmra.mxu0 %v931
    %v955 = vpop.f32.mrf.mxu0
    %v956 = vadd.f32 0.0, %v955
    %v957 = vpop.f32.mrf.mxu0
    %958 = vdwg.mxu0
    %v959 = vld [vmem:[#allocation5 + $0x80] sm:$0x3]
    %v960 = vld [vmem:[#allocation5 + $0x88] sm:$0x3]
    %v961 = vsel %vm900, %v943, 0.0
    %v962 = vrot.slane %v961, 4
    %v963 = vadd.f32 %v961, %v962
    %v964 = vrot.slane %v963, 2
    %v965 = vadd.f32 %v963, %v964
    %v966 = vrot.slane %v965, 1
    %v967 = vadd.f32 %v965, %v966
    %v968 = vsel %vm900, %v956, 0.0
    %v969 = vrot.slane %v968, 4
    %v970 = vadd.f32 %v968, %v969
    %v971 = vrot.slane %v970, 2
    %v972 = vadd.f32 %v970, %v971
    %v973 = vrot.slane %v972, 1
    %v974 = vadd.f32 %v972, %v973
    %v975 = vrcp.pop 4.0
    %v976 = vmul.f32 4.0, %v975
    %v977 = vsub.f32 1.0, %v976
    %v978 = vmul.f32 %v975, %v977
    %v979 = vadd.f32 %v975, %v978
    %vm980 = vweird.f32 %v975
    %v981 = vsel %vm980, %v975, %v979
    %v982 = vmul.f32 %v967, %v981
    %v983 = vmul.f32 %v974, %v981
    %v984 = vsub.f32 %v943, %v982
    %v985 = vsub.f32 %v956, %v983
    %v986 = vmul.f32 %v984, %v984
    %v987 = vmul.f32 %v985, %v985
    %v988 = vsel %vm900, %v986, 0.0
    %v989 = vrot.slane %v988, 4
    %v990 = vadd.f32 %v988, %v989
    %v991 = vrot.slane %v990, 2
    %v992 = vadd.f32 %v990, %v991
    %v993 = vrot.slane %v992, 1
    %v994 = vadd.f32 %v992, %v993
    %v995 = vsel %vm900, %v987, 0.0
    %v996 = vrot.slane %v995, 4
    %v997 = vadd.f32 %v995, %v996
    %v998 = vrot.slane %v997, 2
    %v999 = vadd.f32 %v997, %v998
    %v1000 = vrot.slane %v999, 1
    %v1001 = vadd.f32 %v999, %v1000
    %v1002 = vmul.f32 %v994, %v981
    %v1003 = vmul.f32 %v1001, %v981
    %v1004 = vadd.f32 %v1002, 1e-05
    %v1005 = vadd.f32 %v1003, 1e-05
    %v1006 = vrsqrt.pop %v1004
    %v1007 = vmul.f32 %v1006, %v1004
    %v1008 = vmul.f32 %v1007, %v1006
    %v1009 = vmul.f32 0.5, %v1008
    %v1010 = vsub.f32 1.5, %v1009
    %v1011 = vmul.f32 %v1006, %v1010
    %vm1012 = vweird.f32 %v1004
    %vm1013 = vweird.f32 %v1006
    %vm1014 = vmor %vm1012, %vm1013
    %v1015 = vsel %vm1014, %v1006, %v1011
    %v1016 = vrsqrt.pop %v1005
    %v1017 = vmul.f32 %v1016, %v1005
    %v1018 = vmul.f32 %v1017, %v1016
    %v1019 = vmul.f32 0.5, %v1018
    %v1020 = vsub.f32 1.5, %v1019
    %v1021 = vmul.f32 %v1016, %v1020
    %vm1022 = vweird.f32 %v1005
    %vm1023 = vweird.f32 %v1016
    %vm1024 = vmor %vm1022, %vm1023
    %v1025 = vsel %vm1024, %v1016, %v1021
    %v1026 = vmul.f32 %v984, %v1015
    %v1027 = vmul.f32 %v985, %v1025
    %v1028 = vperm.slane %v959, 0
    %v1029 = vperm.slane %v960, 0
    %v1030 = vmul.f32 %v1026, %v1028
    %v1031 = vmul.f32 %v1027, %v1029
    %v1032 = vperm.slane %v959, 1
    %v1033 = vperm.slane %v960, 1
    %v1034 = vadd.f32 %v1030, %v1032
    %v1035 = vadd.f32 %v1031, %v1033
    %v1036 = vld [vmem:[#allocation2 + $0x3a0] sm:$0xf]
    %v1037 = vld [vmem:[#allocation2 + $0x3b0] sm:$0xf]
    %v1040 = vunpack.c.l.b16 %v1036
    %v1041 = vunpack.c.l.b16 %v1037
    %v1042 = vpack.c.b16 %v1041, %v1040
    %v1044 = vsel %vm86, %v894, 0
    %1046 = vmatpush.bf16.msra.mxu0 0
    %1047 = vmatpush.bf16.msra.mxu0 0
    %1048 = vmatpush.bf16.msra.mxu0 0
    %1049 = vmatpush.bf16.msra.mxu0 0
    %1050 = vmatpush.bf16.msra.mxu0 0
    %1051 = vmatpush.bf16.msra.mxu0 0
    %1052 = vmatpush.bf16.msra.mxu0 0
    %1053 = vmatpush.bf16.msra.mxu0 %v1042
    %1054 = vmatmul.bf16.gmra.mxu0 %v1044
    %v1055 = vpop.f32.mrf.mxu0
    %v1056 = vadd.f32 0.0, %v1055
    %v1057 = vpop.f32.mrf.mxu0
    %1058 = vdwg.mxu0
    %v1059 = vld [vmem:[#allocation5 + $0xa0] sm:$0x3]
    %v1060 = vsel %vm691, %v1056, 0.0
    %v1061 = vrot.slane %v1060, 4
    %v1062 = vadd.f32 %v1060, %v1061
    %v1063 = vrot.slane %v1062, 2
    %v1064 = vadd.f32 %v1062, %v1063
    %v1065 = vrot.slane %v1064, 1
    %v1066 = vadd.f32 %v1064, %v1065
    %v1067 = vrcp.pop 8.0
    %v1068 = vmul.f32 8.0, %v1067
    %v1069 = vsub.f32 1.0, %v1068
    %v1070 = vmul.f32 %v1067, %v1069
    %v1071 = vadd.f32 %v1067, %v1070
    %vm1072 = vweird.f32 %v1067
    %v1073 = vsel %vm1072, %v1067, %v1071
    %v1074 = vmul.f32 %v1066, %v1073
    %v1075 = vsub.f32 %v1056, %v1074
    %v1076 = vmul.f32 %v1075, %v1075
    %v1077 = vsel %vm691, %v1076, 0.0
    %v1078 = vrot.slane %v1077, 4
    %v1079 = vadd.f32 %v1077, %v1078
    %v1080 = vrot.slane %v1079, 2
    %v1081 = vadd.f32 %v1079, %v1080
    %v1082 = vrot.slane %v1081, 1
    %v1083 = vadd.f32 %v1081, %v1082
    %v1084 = vmul.f32 %v1083, %v1073
    %v1085 = vadd.f32 %v1084, 1e-05
    %v1086 = vrsqrt.pop %v1085
    %v1087 = vmul.f32 %v1086, %v1085
    %v1088 = vmul.f32 %v1087, %v1086
    %v1089 = vmul.f32 0.5, %v1088
    %v1090 = vsub.f32 1.5, %v1089
    %v1091 = vmul.f32 %v1086, %v1090
    %vm1092 = vweird.f32 %v1085
    %vm1093 = vweird.f32 %v1086
    %vm1094 = vmor %vm1092, %vm1093
    %v1095 = vsel %vm1094, %v1086, %v1091
    %v1096 = vmul.f32 %v1075, %v1095
    %v1097 = vperm.slane %v1059, 0
    %v1098 = vmul.f32 %v1096, %v1097
    %v1099 = vperm.slane %v1059, 1
    %v1100 = vadd.f32 %v1098, %v1099
    %v1101 = vtanh.pop %v1100
    %v1102 = vpack.c.bf16 %v1101, %v1101
    %v1103 = vld [vmem:[#allocation2 + $0x540] sm:$0x3]
    %v1105 = vsel %vm896, %v1103, 0
    %v1108 = vsel %vm900, %v1102, 0
    %1110 = vmatpush.bf16.msra.mxu0 0
    %1111 = vmatpush.bf16.msra.mxu0 0
    %1112 = vmatpush.bf16.msra.mxu0 0
    %1113 = vmatpush.bf16.msra.mxu0 0
    %1114 = vmatpush.bf16.msra.mxu0 0
    %1115 = vmatpush.bf16.msra.mxu0 0
    %1116 = vmatpush.bf16.msra.mxu0 0
    %1117 = vmatpush.bf16.msra.mxu0 %v1108
    %1118 = vmatmul.bf16.gmra.mxu0 %v1105
    %v1119 = vpop.f32.mrf.mxu0
    %v1120 = vadd.f32 0.0, %v1119
    %v1121 = vpop.f32.mrf.mxu0
    %1122 = vdwg.mxu0
    %v1123 = vpack.c.bf16 %v1120, %v1120
    %v1124 = vld [vmem:[#allocation2 + $0x560] sm:$0x3]
    %v1126 = vsel %vm896, %v1124, 0
    %1128 = vmatpush.bf16.msra.mxu0 0
    %1129 = vmatpush.bf16.msra.mxu0 0
    %1130 = vmatpush.bf16.msra.mxu0 0
    %1131 = vmatpush.bf16.msra.mxu0 0
    %1132 = vmatpush.bf16.msra.mxu0 0
    %1133 = vmatpush.bf16.msra.mxu0 0
    %1134 = vmatpush.bf16.msra.mxu0 0
    %1135 = vmatpush.bf16.msra.mxu0 %v1108
    %1136 = vmatmul.bf16.gmra.mxu0 %v1126
    %v1137 = vpop.f32.mrf.mxu0
    %v1138 = vadd.f32 0.0, %v1137
    %v1139 = vpop.f32.mrf.mxu0
    %1140 = vdwg.mxu0
    %v1141 = vpack.c.bf16 %v1138, %v1138
    %v1142 = vld [vmem:[#allocation2 + $0x580] sm:$0x3]
    %v1144 = vsel %vm896, %v1142, 0
    %1146 = vmatpush.bf16.msra.mxu0 0
    %1147 = vmatpush.bf16.msra.mxu0 0
    %1148 = vmatpush.bf16.msra.mxu0 0
    %1149 = vmatpush.bf16.msra.mxu0 0
    %1150 = vmatpush.bf16.msra.mxu0 0
    %1151 = vmatpush.bf16.msra.mxu0 0
    %1152 = vmatpush.bf16.msra.mxu0 0
    %1153 = vmatpush.bf16.msra.mxu0 %v1108
    %1154 = vmatmul.bf16.gmra.mxu0 %v1144
    %v1155 = vpop.f32.mrf.mxu0
    %v1156 = vadd.f32 0.0, %v1155
    %v1157 = vpop.f32.mrf.mxu0
    %1158 = vdwg.mxu0
    %v1159 = vpack.c.bf16 %v1156, %v1156
    %v1161 = vunpack.c.l.b16 %v1141
    %v1162 = vpack.c.b16 %v1161, %v1161
    %1163 = vrot.lane.b32.xlu0 %v1162, 64
    %v1164 = vpop.permute.xlu0 %1163
    %v1167 = vsel %vm691, %v1123, %v1164
    %v1169 = vld [vmem:[#allocation2 + $0x3c0] sm:$0xf]
    %v1170 = vld [vmem:[#allocation2 + $0x3d0] sm:$0xf]
    %v1171 = vld [vmem:[#allocation2 + $0x3e0] sm:$0xf]
    %v1172 = vld [vmem:[#allocation2 + $0x3f0] sm:$0xf]
    %v1173 = vld [vmem:[#allocation2 + $0x400] sm:$0xf]
    %v1174 = vld [vmem:[#allocation2 + $0x410] sm:$0xf]
    %v1175 = vld [vmem:[#allocation2 + $0x420] sm:$0xf]
    %v1176 = vld [vmem:[#allocation2 + $0x430] sm:$0xf]
    %v1177 = vld [vmem:[#allocation2 + $0x440] sm:$0xf]
    %v1178 = vld [vmem:[#allocation2 + $0x450] sm:$0xf]
    %v1179 = vld [vmem:[#allocation2 + $0x460] sm:$0xf]
    %v1180 = vld [vmem:[#allocation2 + $0x470] sm:$0xf]
    %v1181 = vld [vmem:[#allocation2 + $0x480] sm:$0xf]
    %v1182 = vld [vmem:[#allocation2 + $0x490] sm:$0xf]
    %v1183 = vld [vmem:[#allocation2 + $0x4a0] sm:$0xf]
    %v1184 = vld [vmem:[#allocation2 + $0x4b0] sm:$0xf]
    %v1185 = vld [vmem:[#allocation2 + $0x4c0] sm:$0xf]
    %v1186 = vld [vmem:[#allocation2 + $0x4d0] sm:$0xf]
    %v1187 = vld [vmem:[#allocation2 + $0x4e0] sm:$0xf]
    %v1188 = vld [vmem:[#allocation2 + $0x4f0] sm:$0xf]
    %v1189 = vld [vmem:[#allocation2 + $0x500] sm:$0xf]
    %v1190 = vld [vmem:[#allocation2 + $0x510] sm:$0xf]
    %v1191 = vld [vmem:[#allocation2 + $0x520] sm:$0xf]
    %v1192 = vld [vmem:[#allocation2 + $0x530] sm:$0xf]
    %v1217 = vunpack.c.l.b16 %v1169
    %v1218 = vunpack.c.l.b16 %v1170
    %v1219 = vunpack.c.l.b16 %v1171
    %v1220 = vunpack.c.l.b16 %v1172
    %v1221 = vunpack.c.l.b16 %v1173
    %v1222 = vunpack.c.l.b16 %v1174
    %v1223 = vunpack.c.l.b16 %v1175
    %v1224 = vunpack.c.l.b16 %v1176
    %v1225 = vunpack.c.l.b16 %v1177
    %v1226 = vunpack.c.l.b16 %v1178
    %v1227 = vunpack.c.l.b16 %v1179
    %v1228 = vunpack.c.l.b16 %v1180
    %v1229 = vunpack.c.l.b16 %v1181
    %v1230 = vunpack.c.l.b16 %v1182
    %v1231 = vunpack.c.l.b16 %v1183
    %v1232 = vunpack.c.l.b16 %v1184
    %v1233 = vunpack.c.l.b16 %v1185
    %v1234 = vunpack.c.l.b16 %v1186
    %v1235 = vunpack.c.l.b16 %v1187
    %v1236 = vunpack.c.l.b16 %v1188
    %v1237 = vunpack.c.l.b16 %v1189
    %v1238 = vunpack.c.l.b16 %v1190
    %v1239 = vunpack.c.l.b16 %v1191
    %v1240 = vunpack.c.l.b16 %v1192
    %v1241 = vpack.c.b16 %v1218, %v1217
    %v1242 = vpack.c.b16 %v1220, %v1219
    %v1243 = vpack.c.b16 %v1222, %v1221
    %v1244 = vpack.c.b16 %v1224, %v1223
    %v1245 = vpack.c.b16 %v1226, %v1225
    %v1246 = vpack.c.b16 %v1228, %v1227
    %v1247 = vpack.c.b16 %v1230, %v1229
    %v1248 = vpack.c.b16 %v1232, %v1231
    %v1249 = vpack.c.b16 %v1234, %v1233
    %v1250 = vpack.c.b16 %v1236, %v1235
    %v1251 = vpack.c.b16 %v1238, %v1237
    %v1252 = vpack.c.b16 %v1240, %v1239
    %v1266 = vsel %vm691, %v1159, 0
    %1268 = vmatpush.bf16.msra.mxu0 %v1248
    %1269 = vmatpush.bf16.msra.mxu0 %v1247
    %1270 = vmatpush.bf16.msra.mxu0 %v1246
    %1271 = vmatpush.bf16.msra.mxu0 %v1245
    %1272 = vmatpush.bf16.msra.mxu0 %v1244
    %1273 = vmatpush.bf16.msra.mxu0 %v1243
    %1274 = vmatpush.bf16.msra.mxu0 %v1242
    %1275 = vmatpush.bf16.msra.mxu0 %v1241
    %1276 = vmatmul.bf16.gmra.mxu0 %v1167
    %v1277 = vpop.f32.mrf.mxu0
    %v1278 = vadd.f32 0.0, %v1277
    %v1279 = vpop.f32.mrf.mxu0
    %1280 = vdwg.mxu0
    %1281 = vmatpush.bf16.msra.mxu0 0
    %1282 = vmatpush.bf16.msra.mxu0 0
    %1283 = vmatpush.bf16.msra.mxu0 0
    %1284 = vmatpush.bf16.msra.mxu0 0
    %1285 = vmatpush.bf16.msra.mxu0 %v1252
    %1286 = vmatpush.bf16.msra.mxu0 %v1251
    %1287 = vmatpush.bf16.msra.mxu0 %v1250
    %1288 = vmatpush.bf16.msra.mxu0 %v1249
    %1289 = vmatmul.bf16.gmra.mxu0 %v1266
    %v1290 = vpop.f32.mrf.mxu0
    %v1291 = vadd.f32 %v1278, %v1290
    %v1292 = vpop.f32.mrf.mxu0
    %1293 = vdwg.mxu0
    %v1294 = vld [vmem:[#allocation5 + $0xc0] sm:$0x3]
    %vm1295 = vcmask 519168
    %v1296 = vsel %vm1295, %v1291, 0.0
    %v1297 = vrot.slane %v1296, 4
    %v1298 = vadd.f32 %v1296, %v1297
    %v1299 = vrot.slane %v1298, 2
    %v1300 = vadd.f32 %v1298, %v1299
    %v1301 = vrot.slane %v1300, 1
    %v1302 = vadd.f32 %v1300, %v1301
    %v1303 = vmul.f32 %v1302, %v981
    %v1304 = vsub.f32 %v1291, %v1303
    %v1305 = vmul.f32 %v1304, %v1304
    %v1306 = vsel %vm1295, %v1305, 0.0
    %v1307 = vrot.slane %v1306, 4
    %v1308 = vadd.f32 %v1306, %v1307
    %v1309 = vrot.slane %v1308, 2
    %v1310 = vadd.f32 %v1308, %v1309
    %v1311 = vrot.slane %v1310, 1
    %v1312 = vadd.f32 %v1310, %v1311
    %v1313 = vmul.f32 %v1312, %v981
    %v1314 = vadd.f32 %v1313, 1e-05
    %v1315 = vrsqrt.pop %v1314
    %v1316 = vmul.f32 %v1315, %v1314
    %v1317 = vmul.f32 %v1316, %v1315
    %v1318 = vmul.f32 0.5, %v1317
    %v1319 = vsub.f32 1.5, %v1318
    %v1320 = vmul.f32 %v1315, %v1319
    %vm1321 = vweird.f32 %v1314
    %vm1322 = vweird.f32 %v1315
    %vm1323 = vmor %vm1321, %vm1322
    %v1324 = vsel %vm1323, %v1315, %v1320
    %v1325 = vmul.f32 %v1304, %v1324
    %v1326 = vperm.slane %v1294, 0
    %v1327 = vmul.f32 %v1325, %v1326
    %v1328 = vperm.slane %v1294, 1
    %v1329 = vadd.f32 %v1327, %v1328
    %v1330 = vtanh.pop %v1329
    %v1331 = vpack.c.bf16 %v1330, %v1330
    %v1332 = vld [vmem:[#allocation2 + $0x5a0] sm:$0xff]
    %v1333 = vld [vmem:[#allocation2 + $0x5b0] sm:$0xff]
    %v1334 = vld [vmem:[#allocation2 + $0x5c0] sm:$0xff]
    %v1335 = vld [vmem:[#allocation2 + $0x5d0] sm:$0xff]
    %v1336 = vld [vmem:[#allocation2 + $0x5e0] sm:$0xff]
    %v1337 = vld [vmem:[#allocation2 + $0x5f0] sm:$0xff]
    %v1338 = vld [vmem:[#allocation2 + $0x600] sm:$0xff]
    %v1339 = vld [vmem:[#allocation2 + $0x610] sm:$0xff]
    %v1348 = vunpack.c.l.b16 %v1332
    %v1349 = vunpack.c.h.b16 %v1332
    %v1350 = vunpack.c.l.b16 %v1333
    %v1351 = vunpack.c.h.b16 %v1333
    %v1352 = vunpack.c.l.b16 %v1334
    %v1353 = vunpack.c.h.b16 %v1334
    %v1354 = vunpack.c.l.b16 %v1335
    %v1355 = vunpack.c.h.b16 %v1335
    %v1356 = vunpack.c.l.b16 %v1336
    %v1357 = vunpack.c.h.b16 %v1336
    %v1358 = vunpack.c.l.b16 %v1337
    %v1359 = vunpack.c.h.b16 %v1337
    %v1360 = vunpack.c.l.b16 %v1338
    %v1361 = vunpack.c.h.b16 %v1338
    %v1362 = vunpack.c.l.b16 %v1339
    %v1363 = vunpack.c.h.b16 %v1339
    %v1364 = vpack.c.b16 %v1350, %v1348
    %v1365 = vpack.c.b16 %v1351, %v1349
    %v1366 = vpack.c.b16 %v1354, %v1352
    %v1367 = vpack.c.b16 %v1355, %v1353
    %v1368 = vpack.c.b16 %v1358, %v1356
    %v1369 = vpack.c.b16 %v1359, %v1357
    %v1370 = vpack.c.b16 %v1362, %v1360
    %v1371 = vpack.c.b16 %v1363, %v1361
    %v1381 = vsel %vm691, %v1331, 0
    %1383 = vmatpush.bf16.msra.mxu0 0
    %1384 = vmatpush.bf16.msra.mxu0 0
    %1385 = vmatpush.bf16.msra.mxu0 0
    %1386 = vmatpush.bf16.msra.mxu0 0
    %1387 = vmatpush.bf16.msra.mxu0 %v1370
    %1388 = vmatpush.bf16.msra.mxu0 %v1368
    %1389 = vmatpush.bf16.msra.mxu0 %v1366
    %1390 = vmatpush.bf16.msra.mxu0 %v1364
    %1391 = vmatmul.bf16.gmra.mxu0 %v1381
    %v1392 = vpop.f32.mrf.mxu0
    %v1393 = vadd.f32 0.0, %v1392
    %v1394 = vpop.f32.mrf.mxu0
    %1395 = vdwg.mxu0
    %1396 = vmatpush.bf16.msra.mxu0 0
    %1397 = vmatpush.bf16.msra.mxu0 0
    %1398 = vmatpush.bf16.msra.mxu0 0
    %1399 = vmatpush.bf16.msra.mxu0 0
    %1400 = vmatpush.bf16.msra.mxu0 %v1371
    %1401 = vmatpush.bf16.msra.mxu0 %v1369
    %1402 = vmatpush.bf16.msra.mxu0 %v1367
    %1403 = vmatpush.bf16.msra.mxu0 %v1365
    %1404 = vmatmul.bf16.gmra.mxu0 %v1381
    %v1405 = vpop.f32.mrf.mxu0
    %v1406 = vadd.f32 0.0, %v1405
    %v1407 = vpop.f32.mrf.mxu0
    %1408 = vdwg.mxu0
    %v1409 = vld [vmem:[#allocation5 + $0xe0] sm:$0x3]
    %v1410 = vld [vmem:[#allocation5 + $0xe8] sm:$0x3]
    %v1411 = vsel %vm900, %v1393, 0.0
    %v1412 = vrot.slane %v1411, 4
    %v1413 = vadd.f32 %v1411, %v1412
    %v1414 = vrot.slane %v1413, 2
    %v1415 = vadd.f32 %v1413, %v1414
    %v1416 = vrot.slane %v1415, 1
    %v1417 = vadd.f32 %v1415, %v1416
    %v1418 = vsel %vm900, %v1406, 0.0
    %v1419 = vrot.slane %v1418, 4
    %v1420 = vadd.f32 %v1418, %v1419
    %v1421 = vrot.slane %v1420, 2
    %v1422 = vadd.f32 %v1420, %v1421
    %v1423 = vrot.slane %v1422, 1
    %v1424 = vadd.f32 %v1422, %v1423
    %v1425 = vmul.f32 %v1417, %v981
    %v1426 = vmul.f32 %v1424, %v981
    %v1427 = vsub.f32 %v1393, %v1425
    %v1428 = vsub.f32 %v1406, %v1426
    %v1429 = vmul.f32 %v1427, %v1427
    %v1430 = vmul.f32 %v1428, %v1428
    %v1431 = vsel %vm900, %v1429, 0.0
    %v1432 = vrot.slane %v1431, 4
    %v1433 = vadd.f32 %v1431, %v1432
    %v1434 = vrot.slane %v1433, 2
    %v1435 = vadd.f32 %v1433, %v1434
    %v1436 = vrot.slane %v1435, 1
    %v1437 = vadd.f32 %v1435, %v1436
    %v1438 = vsel %vm900, %v1430, 0.0
    %v1439 = vrot.slane %v1438, 4
    %v1440 = vadd.f32 %v1438, %v1439
    %v1441 = vrot.slane %v1440, 2
    %v1442 = vadd.f32 %v1440, %v1441
    %v1443 = vrot.slane %v1442, 1
    %v1444 = vadd.f32 %v1442, %v1443
    %v1445 = vmul.f32 %v1437, %v981
    %v1446 = vmul.f32 %v1444, %v981
    %v1447 = vadd.f32 %v1445, 1e-05
    %v1448 = vadd.f32 %v1446, 1e-05
    %v1449 = vrsqrt.pop %v1447
    %v1450 = vmul.f32 %v1449, %v1447
    %v1451 = vmul.f32 %v1450, %v1449
    %v1452 = vmul.f32 0.5, %v1451
    %v1453 = vsub.f32 1.5, %v1452
    %v1454 = vmul.f32 %v1449, %v1453
    %vm1455 = vweird.f32 %v1447
    %vm1456 = vweird.f32 %v1449
    %vm1457 = vmor %vm1455, %vm1456
    %v1458 = vsel %vm1457, %v1449, %v1454
    %v1459 = vrsqrt.pop %v1448
    %v1460 = vmul.f32 %v1459, %v1448
    %v1461 = vmul.f32 %v1460, %v1459
    %v1462 = vmul.f32 0.5, %v1461
    %v1463 = vsub.f32 1.5, %v1462
    %v1464 = vmul.f32 %v1459, %v1463
    %vm1465 = vweird.f32 %v1448
    %vm1466 = vweird.f32 %v1459
    %vm1467 = vmor %vm1465, %vm1466
    %v1468 = vsel %vm1467, %v1459, %v1464
    %v1469 = vmul.f32 %v1427, %v1458
    %v1470 = vmul.f32 %v1428, %v1468
    %v1471 = vperm.slane %v1409, 0
    %v1472 = vperm.slane %v1410, 0
    %v1473 = vmul.f32 %v1469, %v1471
    %v1474 = vmul.f32 %v1470, %v1472
    %v1475 = vperm.slane %v1409, 1
    %v1476 = vperm.slane %v1410, 1
    %v1477 = vadd.f32 %v1473, %v1475
    %v1478 = vadd.f32 %v1474, %v1476
    %v1479 = vadd.f32 %v1477, %v1034
    %v1480 = vadd.f32 %v1478, %v1035
    %v1481 = vtanh.pop %v1479
    %v1482 = vtanh.pop %v1480
    %v1483 = vpack.c.bf16 %v1481, %v1481
    %v1484 = vpack.c.bf16 %v1482, %v1482
    %v1485 = vld [vmem:[#allocation2 + $0x820] sm:$0x1]
    %v1487 = vsel %vm55, %v1485, 0
    %v1490 = vsel %vm62, %v1483, 0
    %v1493 = vsel %vm62, %v1484, 0
    %1495 = vmatpush.bf16.msra.mxu0 0
    %1496 = vmatpush.bf16.msra.mxu0 0
    %1497 = vmatpush.bf16.msra.mxu0 0
    %1498 = vmatpush.bf16.msra.mxu0 0
    %1499 = vmatpush.bf16.msra.mxu0 0
    %1500 = vmatpush.bf16.msra.mxu0 0
    %1501 = vmatpush.bf16.msra.mxu0 0
    %1502 = vmatpush.bf16.msra.mxu0 %v1490
    %1503 = vmatmul.bf16.gmra.mxu0 %v1487
    %v1504 = vpop.f32.mrf.mxu0
    %v1505 = vadd.f32 0.0, %v1504
    %v1506 = vpop.f32.mrf.mxu0
    %1507 = vdwg.mxu0
    %1508 = vmatpush.bf16.msra.mxu0 0
    %1509 = vmatpush.bf16.msra.mxu0 0
    %1510 = vmatpush.bf16.msra.mxu0 0
    %1511 = vmatpush.bf16.msra.mxu0 0
    %1512 = vmatpush.bf16.msra.mxu0 0
    %1513 = vmatpush.bf16.msra.mxu0 0
    %1514 = vmatpush.bf16.msra.mxu0 0
    %1515 = vmatpush.bf16.msra.mxu0 %v1493
    %1516 = vmatmul.bf16.gmra.mxu0 %v1487
    %v1517 = vpop.f32.mrf.mxu0
    %v1518 = vadd.f32 0.0, %v1517
    %v1519 = vpop.f32.mrf.mxu0
    %1520 = vdwg.mxu0
    %v1521 = vpack.c.bf16 %v1505, %v1505
    %v1522 = vpack.c.bf16 %v1518, %v1518
    %v1523 = vld [vmem:[#allocation2 + $0x620] sm:$0xff]
    %v1524 = vld [vmem:[#allocation2 + $0x628] sm:$0xff]
    %v1525 = vld [vmem:[#allocation2 + $0x630] sm:$0xff]
    %v1526 = vld [vmem:[#allocation2 + $0x638] sm:$0xff]
    %v1527 = vld [vmem:[#allocation2 + $0x640] sm:$0xff]
    %v1528 = vld [vmem:[#allocation2 + $0x648] sm:$0xff]
    %v1529 = vld [vmem:[#allocation2 + $0x650] sm:$0xff]
    %v1530 = vld [vmem:[#allocation2 + $0x658] sm:$0xff]
    %v1531 = vld [vmem:[#allocation2 + $0x660] sm:$0xff]
    %v1532 = vld [vmem:[#allocation2 + $0x668] sm:$0xff]
    %v1533 = vld [vmem:[#allocation2 + $0x670] sm:$0xff]
    %v1534 = vld [vmem:[#allocation2 + $0x678] sm:$0xff]
    %v1535 = vld [vmem:[#allocation2 + $0x680] sm:$0xff]
    %v1536 = vld [vmem:[#allocation2 + $0x688] sm:$0xff]
    %v1537 = vld [vmem:[#allocation2 + $0x690] sm:$0xff]
    %v1538 = vld [vmem:[#allocation2 + $0x698] sm:$0xff]
    %v1539 = vld [vmem:[#allocation2 + $0x6a0] sm:$0xff]
    %v1540 = vld [vmem:[#allocation2 + $0x6a8] sm:$0xff]
    %v1541 = vld [vmem:[#allocation2 + $0x6b0] sm:$0xff]
    %v1542 = vld [vmem:[#allocation2 + $0x6b8] sm:$0xff]
    %v1543 = vld [vmem:[#allocation2 + $0x6c0] sm:$0xff]
    %v1544 = vld [vmem:[#allocation2 + $0x6c8] sm:$0xff]
    %v1545 = vld [vmem:[#allocation2 + $0x6d0] sm:$0xff]
    %v1546 = vld [vmem:[#allocation2 + $0x6d8] sm:$0xff]
    %v1547 = vld [vmem:[#allocation2 + $0x6e0] sm:$0xff]
    %v1548 = vld [vmem:[#allocation2 + $0x6e8] sm:$0xff]
    %v1549 = vld [vmem:[#allocation2 + $0x6f0] sm:$0xff]
    %v1550 = vld [vmem:[#allocation2 + $0x6f8] sm:$0xff]
    %v1551 = vld [vmem:[#allocation2 + $0x700] sm:$0xff]
    %v1552 = vld [vmem:[#allocation2 + $0x708] sm:$0xff]
    %v1553 = vld [vmem:[#allocation2 + $0x710] sm:$0xff]
    %v1554 = vld [vmem:[#allocation2 + $0x718] sm:$0xff]
    %v1555 = vld [vmem:[#allocation2 + $0x720] sm:$0xff]
    %v1556 = vld [vmem:[#allocation2 + $0x728] sm:$0xff]
    %v1557 = vld [vmem:[#allocation2 + $0x730] sm:$0xff]
    %v1558 = vld [vmem:[#allocation2 + $0x738] sm:$0xff]
    %v1559 = vld [vmem:[#allocation2 + $0x740] sm:$0xff]
    %v1560 = vld [vmem:[#allocation2 + $0x748] sm:$0xff]
    %v1561 = vld [vmem:[#allocation2 + $0x750] sm:$0xff]
    %v1562 = vld [vmem:[#allocation2 + $0x758] sm:$0xff]
    %v1563 = vld [vmem:[#allocation2 + $0x760] sm:$0xff]
    %v1564 = vld [vmem:[#allocation2 + $0x768] sm:$0xff]
    %v1565 = vld [vmem:[#allocation2 + $0x770] sm:$0xff]
    %v1566 = vld [vmem:[#allocation2 + $0x778] sm:$0xff]
    %v1567 = vld [vmem:[#allocation2 + $0x780] sm:$0xff]
    %v1568 = vld [vmem:[#allocation2 + $0x788] sm:$0xff]
    %v1569 = vld [vmem:[#allocation2 + $0x790] sm:$0xff]
    %v1570 = vld [vmem:[#allocation2 + $0x798] sm:$0xff]
    %v1571 = vld [vmem:[#allocation2 + $0x7a0] sm:$0xff]
    %v1572 = vld [vmem:[#allocation2 + $0x7a8] sm:$0xff]
    %v1573 = vld [vmem:[#allocation2 + $0x7b0] sm:$0xff]
    %v1574 = vld [vmem:[#allocation2 + $0x7b8] sm:$0xff]
    %v1575 = vld [vmem:[#allocation2 + $0x7c0] sm:$0xff]
    %v1576 = vld [vmem:[#allocation2 + $0x7c8] sm:$0xff]
    %v1577 = vld [vmem:[#allocation2 + $0x7d0] sm:$0xff]
    %v1578 = vld [vmem:[#allocation2 + $0x7d8] sm:$0xff]
    %v1579 = vld [vmem:[#allocation2 + $0x7e0] sm:$0xff]
    %v1580 = vld [vmem:[#allocation2 + $0x7e8] sm:$0xff]
    %v1581 = vld [vmem:[#allocation2 + $0x7f0] sm:$0xff]
    %v1582 = vld [vmem:[#allocation2 + $0x7f8] sm:$0xff]
    %v1583 = vld [vmem:[#allocation2 + $0x800] sm:$0xff]
    %v1584 = vld [vmem:[#allocation2 + $0x808] sm:$0xff]
    %v1585 = vld [vmem:[#allocation2 + $0x810] sm:$0xff]
    %v1586 = vld [vmem:[#allocation2 + $0x818] sm:$0xff]
    %v1651 = vunpack.c.l.b16 %v1523
    %v1652 = vunpack.c.h.b16 %v1523
    %v1653 = vunpack.c.l.b16 %v1524
    %v1654 = vunpack.c.h.b16 %v1524
    %v1655 = vunpack.c.l.b16 %v1525
    %v1656 = vunpack.c.h.b16 %v1525
    %v1657 = vunpack.c.l.b16 %v1526
    %v1658 = vunpack.c.h.b16 %v1526
    %v1659 = vunpack.c.l.b16 %v1527
    %v1660 = vunpack.c.h.b16 %v1527
    %v1661 = vunpack.c.l.b16 %v1528
    %v1662 = vunpack.c.h.b16 %v1528
    %v1663 = vunpack.c.l.b16 %v1529
    %v1664 = vunpack.c.h.b16 %v1529
    %v1665 = vunpack.c.l.b16 %v1530
    %v1666 = vunpack.c.h.b16 %v1530
    %v1667 = vunpack.c.l.b16 %v1531
    %v1668 = vunpack.c.h.b16 %v1531
    %v1669 = vunpack.c.l.b16 %v1532
    %v1670 = vunpack.c.h.b16 %v1532
    %v1671 = vunpack.c.l.b16 %v1533
    %v1672 = vunpack.c.h.b16 %v1533
    %v1673 = vunpack.c.l.b16 %v1534
    %v1674 = vunpack.c.h.b16 %v1534
    %v1675 = vunpack.c.l.b16 %v1535
    %v1676 = vunpack.c.h.b16 %v1535
    %v1677 = vunpack.c.l.b16 %v1536
    %v1678 = vunpack.c.h.b16 %v1536
    %v1679 = vunpack.c.l.b16 %v1537
    %v1680 = vunpack.c.h.b16 %v1537
    %v1681 = vunpack.c.l.b16 %v1538
    %v1682 = vunpack.c.h.b16 %v1538
    %v1683 = vunpack.c.l.b16 %v1539
    %v1684 = vunpack.c.h.b16 %v1539
    %v1685 = vunpack.c.l.b16 %v1540
    %v1686 = vunpack.c.h.b16 %v1540
    %v1687 = vunpack.c.l.b16 %v1541
    %v1688 = vunpack.c.h.b16 %v1541
    %v1689 = vunpack.c.l.b16 %v1542
    %v1690 = vunpack.c.h.b16 %v1542
    %v1691 = vunpack.c.l.b16 %v1543
    %v1692 = vunpack.c.h.b16 %v1543
    %v1693 = vunpack.c.l.b16 %v1544
    %v1694 = vunpack.c.h.b16 %v1544
    %v1695 = vunpack.c.l.b16 %v1545
    %v1696 = vunpack.c.h.b16 %v1545
    %v1697 = vunpack.c.l.b16 %v1546
    %v1698 = vunpack.c.h.b16 %v1546
    %v1699 = vunpack.c.l.b16 %v1547
    %v1700 = vunpack.c.h.b16 %v1547
    %v1701 = vunpack.c.l.b16 %v1548
    %v1702 = vunpack.c.h.b16 %v1548
    %v1703 = vunpack.c.l.b16 %v1549
    %v1704 = vunpack.c.h.b16 %v1549
    %v1705 = vunpack.c.l.b16 %v1550
    %v1706 = vunpack.c.h.b16 %v1550
    %v1707 = vunpack.c.l.b16 %v1551
    %v1708 = vunpack.c.h.b16 %v1551
    %v1709 = vunpack.c.l.b16 %v1552
    %v1710 = vunpack.c.h.b16 %v1552
    %v1711 = vunpack.c.l.b16 %v1553
    %v1712 = vunpack.c.h.b16 %v1553
    %v1713 = vunpack.c.l.b16 %v1554
    %v1714 = vunpack.c.h.b16 %v1554
    %v1715 = vunpack.c.l.b16 %v1555
    %v1716 = vunpack.c.h.b16 %v1555
    %v1717 = vunpack.c.l.b16 %v1556
    %v1718 = vunpack.c.h.b16 %v1556
    %v1719 = vunpack.c.l.b16 %v1557
    %v1720 = vunpack.c.h.b16 %v1557
    %v1721 = vunpack.c.l.b16 %v1558
    %v1722 = vunpack.c.h.b16 %v1558
    %v1723 = vunpack.c.l.b16 %v1559
    %v1724 = vunpack.c.h.b16 %v1559
    %v1725 = vunpack.c.l.b16 %v1560
    %v1726 = vunpack.c.h.b16 %v1560
    %v1727 = vunpack.c.l.b16 %v1561
    %v1728 = vunpack.c.h.b16 %v1561
    %v1729 = vunpack.c.l.b16 %v1562
    %v1730 = vunpack.c.h.b16 %v1562
    %v1731 = vunpack.c.l.b16 %v1563
    %v1732 = vunpack.c.h.b16 %v1563
    %v1733 = vunpack.c.l.b16 %v1564
    %v1734 = vunpack.c.h.b16 %v1564
    %v1735 = vunpack.c.l.b16 %v1565
    %v1736 = vunpack.c.h.b16 %v1565
    %v1737 = vunpack.c.l.b16 %v1566
    %v1738 = vunpack.c.h.b16 %v1566
    %v1739 = vunpack.c.l.b16 %v1567
    %v1740 = vunpack.c.h.b16 %v1567
    %v1741 = vunpack.c.l.b16 %v1568
    %v1742 = vunpack.c.h.b16 %v1568
    %v1743 = vunpack.c.l.b16 %v1569
    %v1744 = vunpack.c.h.b16 %v1569
    %v1745 = vunpack.c.l.b16 %v1570
    %v1746 = vunpack.c.h.b16 %v1570
    %v1747 = vunpack.c.l.b16 %v1571
    %v1748 = vunpack.c.h.b16 %v1571
    %v1749 = vunpack.c.l.b16 %v1572
    %v1750 = vunpack.c.h.b16 %v1572
    %v1751 = vunpack.c.l.b16 %v1573
    %v1752 = vunpack.c.h.b16 %v1573
    %v1753 = vunpack.c.l.b16 %v1574
    %v1754 = vunpack.c.h.b16 %v1574
    %v1755 = vunpack.c.l.b16 %v1575
    %v1756 = vunpack.c.h.b16 %v1575
    %v1757 = vunpack.c.l.b16 %v1576
    %v1758 = vunpack.c.h.b16 %v1576
    %v1759 = vunpack.c.l.b16 %v1577
    %v1760 = vunpack.c.h.b16 %v1577
    %v1761 = vunpack.c.l.b16 %v1578
    %v1762 = vunpack.c.h.b16 %v1578
    %v1763 = vunpack.c.l.b16 %v1579
    %v1764 = vunpack.c.h.b16 %v1579
    %v1765 = vunpack.c.l.b16 %v1580
    %v1766 = vunpack.c.h.b16 %v1580
    %v1767 = vunpack.c.l.b16 %v1581
    %v1768 = vunpack.c.h.b16 %v1581
    %v1769 = vunpack.c.l.b16 %v1582
    %v1770 = vunpack.c.h.b16 %v1582
    %v1771 = vunpack.c.l.b16 %v1583
    %v1772 = vunpack.c.h.b16 %v1583
    %v1773 = vunpack.c.l.b16 %v1584
    %v1774 = vunpack.c.h.b16 %v1584
    %v1775 = vunpack.c.l.b16 %v1585
    %v1776 = vunpack.c.h.b16 %v1585
    %v1777 = vunpack.c.l.b16 %v1586
    %v1778 = vunpack.c.h.b16 %v1586
    %v1779 = vpack.c.b16 %v1655, %v1651
    %v1780 = vpack.c.b16 %v1656, %v1652
    %v1781 = vpack.c.b16 %v1657, %v1653
    %v1782 = vpack.c.b16 %v1658, %v1654
    %v1783 = vpack.c.b16 %v1663, %v1659
    %v1784 = vpack.c.b16 %v1664, %v1660
    %v1785 = vpack.c.b16 %v1665, %v1661
    %v1786 = vpack.c.b16 %v1666, %v1662
    %v1787 = vpack.c.b16 %v1671, %v1667
    %v1788 = vpack.c.b16 %v1672, %v1668
    %v1789 = vpack.c.b16 %v1673, %v1669
    %v1790 = vpack.c.b16 %v1674, %v1670
    %v1791 = vpack.c.b16 %v1679, %v1675
    %v1792 = vpack.c.b16 %v1680, %v1676
    %v1793 = vpack.c.b16 %v1681, %v1677
    %v1794 = vpack.c.b16 %v1682, %v1678
    %v1795 = vpack.c.b16 %v1687, %v1683
    %v1796 = vpack.c.b16 %v1688, %v1684
    %v1797 = vpack.c.b16 %v1689, %v1685
    %v1798 = vpack.c.b16 %v1690, %v1686
    %v1799 = vpack.c.b16 %v1695, %v1691
    %v1800 = vpack.c.b16 %v1696, %v1692
    %v1801 = vpack.c.b16 %v1697, %v1693
    %v1802 = vpack.c.b16 %v1698, %v1694
    %v1803 = vpack.c.b16 %v1703, %v1699
    %v1804 = vpack.c.b16 %v1704, %v1700
    %v1805 = vpack.c.b16 %v1705, %v1701
    %v1806 = vpack.c.b16 %v1706, %v1702
    %v1807 = vpack.c.b16 %v1711, %v1707
    %v1808 = vpack.c.b16 %v1712, %v1708
    %v1809 = vpack.c.b16 %v1713, %v1709
    %v1810 = vpack.c.b16 %v1714, %v1710
    %v1811 = vpack.c.b16 %v1719, %v1715
    %v1812 = vpack.c.b16 %v1720, %v1716
    %v1813 = vpack.c.b16 %v1721, %v1717
    %v1814 = vpack.c.b16 %v1722, %v1718
    %v1815 = vpack.c.b16 %v1727, %v1723
    %v1816 = vpack.c.b16 %v1728, %v1724
    %v1817 = vpack.c.b16 %v1729, %v1725
    %v1818 = vpack.c.b16 %v1730, %v1726
    %v1819 = vpack.c.b16 %v1735, %v1731
    %v1820 = vpack.c.b16 %v1736, %v1732
    %v1821 = vpack.c.b16 %v1737, %v1733
    %v1822 = vpack.c.b16 %v1738, %v1734
    %v1823 = vpack.c.b16 %v1743, %v1739
    %v1824 = vpack.c.b16 %v1744, %v1740
    %v1825 = vpack.c.b16 %v1745, %v1741
    %v1826 = vpack.c.b16 %v1746, %v1742
    %v1827 = vpack.c.b16 %v1751, %v1747
    %v1828 = vpack.c.b16 %v1752, %v1748
    %v1829 = vpack.c.b16 %v1753, %v1749
    %v1830 = vpack.c.b16 %v1754, %v1750
    %v1831 = vpack.c.b16 %v1759, %v1755
    %v1832 = vpack.c.b16 %v1760, %v1756
    %v1833 = vpack.c.b16 %v1761, %v1757
    %v1834 = vpack.c.b16 %v1762, %v1758
    %v1835 = vpack.c.b16 %v1767, %v1763
    %v1836 = vpack.c.b16 %v1768, %v1764
    %v1837 = vpack.c.b16 %v1769, %v1765
    %v1838 = vpack.c.b16 %v1770, %v1766
    %v1839 = vpack.c.b16 %v1775, %v1771
    %v1840 = vpack.c.b16 %v1776, %v1772
    %v1841 = vpack.c.b16 %v1777, %v1773
    %v1842 = vpack.c.b16 %v1778, %v1774
    %1907 = vmatpush.bf16.msra.mxu0 %v1807
    %1908 = vmatpush.bf16.msra.mxu0 %v1803
    %1909 = vmatpush.bf16.msra.mxu0 %v1799
    %1910 = vmatpush.bf16.msra.mxu0 %v1795
    %1911 = vmatpush.bf16.msra.mxu0 %v1791
    %1912 = vmatpush.bf16.msra.mxu0 %v1787
    %1913 = vmatpush.bf16.msra.mxu0 %v1783
    %1914 = vmatpush.bf16.msra.mxu0 %v1779
    %1915 = vmatmul.bf16.gmra.mxu0 %v1521
    %v1916 = vpop.f32.mrf.mxu0
    %v1917 = vadd.f32 0.0, %v1916
    %v1918 = vpop.f32.mrf.mxu0
    %1919 = vdwg.mxu0
    %1920 = vmatpush.bf16.msra.mxu0 %v1839
    %1921 = vmatpush.bf16.msra.mxu0 %v1835
    %1922 = vmatpush.bf16.msra.mxu0 %v1831
    %1923 = vmatpush.bf16.msra.mxu0 %v1827
    %1924 = vmatpush.bf16.msra.mxu0 %v1823
    %1925 = vmatpush.bf16.msra.mxu0 %v1819
    %1926 = vmatpush.bf16.msra.mxu0 %v1815
    %1927 = vmatpush.bf16.msra.mxu0 %v1811
    %1928 = vmatmul.bf16.gmra.mxu0 %v1522
    %v1929 = vpop.f32.mrf.mxu0
    %v1930 = vadd.f32 %v1917, %v1929
    %v1931 = vpop.f32.mrf.mxu0
    %1932 = vdwg.mxu0
    %1933 = vmatpush.bf16.msra.mxu0 %v1808
    %1934 = vmatpush.bf16.msra.mxu0 %v1804
    %1935 = vmatpush.bf16.msra.mxu0 %v1800
    %1936 = vmatpush.bf16.msra.mxu0 %v1796
    %1937 = vmatpush.bf16.msra.mxu0 %v1792
    %1938 = vmatpush.bf16.msra.mxu0 %v1788
    %1939 = vmatpush.bf16.msra.mxu0 %v1784
    %1940 = vmatpush.bf16.msra.mxu0 %v1780
    %1941 = vmatmul.bf16.gmra.mxu0 %v1521
    %v1942 = vpop.f32.mrf.mxu0
    %v1943 = vadd.f32 0.0, %v1942
    %v1944 = vpop.f32.mrf.mxu0
    %1945 = vdwg.mxu0
    %1946 = vmatpush.bf16.msra.mxu0 %v1840
    %1947 = vmatpush.bf16.msra.mxu0 %v1836
    %1948 = vmatpush.bf16.msra.mxu0 %v1832
    %1949 = vmatpush.bf16.msra.mxu0 %v1828
    %1950 = vmatpush.bf16.msra.mxu0 %v1824
    %1951 = vmatpush.bf16.msra.mxu0 %v1820
    %1952 = vmatpush.bf16.msra.mxu0 %v1816
    %1953 = vmatpush.bf16.msra.mxu0 %v1812
    %1954 = vmatmul.bf16.gmra.mxu0 %v1522
    %v1955 = vpop.f32.mrf.mxu0
    %v1956 = vadd.f32 %v1943, %v1955
    %v1957 = vpop.f32.mrf.mxu0
    %1958 = vdwg.mxu0
    %1959 = vmatpush.bf16.msra.mxu0 %v1809
    %1960 = vmatpush.bf16.msra.mxu0 %v1805
    %1961 = vmatpush.bf16.msra.mxu0 %v1801
    %1962 = vmatpush.bf16.msra.mxu0 %v1797
    %1963 = vmatpush.bf16.msra.mxu0 %v1793
    %1964 = vmatpush.bf16.msra.mxu0 %v1789
    %1965 = vmatpush.bf16.msra.mxu0 %v1785
    %1966 = vmatpush.bf16.msra.mxu0 %v1781
    %1967 = vmatmul.bf16.gmra.mxu0 %v1521
    %v1968 = vpop.f32.mrf.mxu0
    %v1969 = vadd.f32 0.0, %v1968
    %v1970 = vpop.f32.mrf.mxu0
    %1971 = vdwg.mxu0
    %1972 = vmatpush.bf16.msra.mxu0 %v1841
    %1973 = vmatpush.bf16.msra.mxu0 %v1837
    %1974 = vmatpush.bf16.msra.mxu0 %v1833
    %1975 = vmatpush.bf16.msra.mxu0 %v1829
    %1976 = vmatpush.bf16.msra.mxu0 %v1825
    %1977 = vmatpush.bf16.msra.mxu0 %v1821
    %1978 = vmatpush.bf16.msra.mxu0 %v1817
    %1979 = vmatpush.bf16.msra.mxu0 %v1813
    %1980 = vmatmul.bf16.gmra.mxu0 %v1522
    %v1981 = vpop.f32.mrf.mxu0
    %v1982 = vadd.f32 %v1969, %v1981
    %v1983 = vpop.f32.mrf.mxu0
    %1984 = vdwg.mxu0
    %1985 = vmatpush.bf16.msra.mxu0 %v1810
    %1986 = vmatpush.bf16.msra.mxu0 %v1806
    %1987 = vmatpush.bf16.msra.mxu0 %v1802
    %1988 = vmatpush.bf16.msra.mxu0 %v1798
    %1989 = vmatpush.bf16.msra.mxu0 %v1794
    %1990 = vmatpush.bf16.msra.mxu0 %v1790
    %1991 = vmatpush.bf16.msra.mxu0 %v1786
    %1992 = vmatpush.bf16.msra.mxu0 %v1782
    %1993 = vmatmul.bf16.gmra.mxu0 %v1521
    %v1994 = vpop.f32.mrf.mxu0
    %v1995 = vadd.f32 0.0, %v1994
    %v1996 = vpop.f32.mrf.mxu0
    %1997 = vdwg.mxu0
    %1998 = vmatpush.bf16.msra.mxu0 %v1842
    %1999 = vmatpush.bf16.msra.mxu0 %v1838
    %2000 = vmatpush.bf16.msra.mxu0 %v1834
    %2001 = vmatpush.bf16.msra.mxu0 %v1830
    %2002 = vmatpush.bf16.msra.mxu0 %v1826
    %2003 = vmatpush.bf16.msra.mxu0 %v1822
    %2004 = vmatpush.bf16.msra.mxu0 %v1818
    %2005 = vmatpush.bf16.msra.mxu0 %v1814
    %2006 = vmatmul.bf16.gmra.mxu0 %v1522
    %v2007 = vpop.f32.mrf.mxu0
    %v2008 = vadd.f32 %v1995, %v2007
    %v2009 = vpop.f32.mrf.mxu0
    %2010 = vdwg.mxu0
    %v2011 = vld [vmem:[#allocation5 + $0x100] sm:$0x3]
    %v2012 = vld [vmem:[#allocation5 + $0x108] sm:$0x3]
    %v2013 = vld [vmem:[#allocation5 + $0x110] sm:$0x3]
    %v2014 = vld [vmem:[#allocation5 + $0x118] sm:$0x3]
    %v2015 = vsel %vm62, %v1930, 0.0
    %v2016 = vrot.slane %v2015, 4
    %v2017 = vadd.f32 %v2015, %v2016
    %v2018 = vrot.slane %v2017, 2
    %v2019 = vadd.f32 %v2017, %v2018
    %v2020 = vrot.slane %v2019, 1
    %v2021 = vadd.f32 %v2019, %v2020
    %v2022 = vsel %vm62, %v1956, 0.0
    %v2023 = vrot.slane %v2022, 4
    %v2024 = vadd.f32 %v2022, %v2023
    %v2025 = vrot.slane %v2024, 2
    %v2026 = vadd.f32 %v2024, %v2025
    %v2027 = vrot.slane %v2026, 1
    %v2028 = vadd.f32 %v2026, %v2027
    %v2029 = vsel %vm62, %v1982, 0.0
    %v2030 = vrot.slane %v2029, 4
    %v2031 = vadd.f32 %v2029, %v2030
    %v2032 = vrot.slane %v2031, 2
    %v2033 = vadd.f32 %v2031, %v2032
    %v2034 = vrot.slane %v2033, 1
    %v2035 = vadd.f32 %v2033, %v2034
    %v2036 = vsel %vm62, %v2008, 0.0
    %v2037 = vrot.slane %v2036, 4
    %v2038 = vadd.f32 %v2036, %v2037
    %v2039 = vrot.slane %v2038, 2
    %v2040 = vadd.f32 %v2038, %v2039
    %v2041 = vrot.slane %v2040, 1
    %v2042 = vadd.f32 %v2040, %v2041
    %v2043 = vrcp.pop 2.0
    %v2044 = vmul.f32 2.0, %v2043
    %v2045 = vsub.f32 1.0, %v2044
    %v2046 = vmul.f32 %v2043, %v2045
    %v2047 = vadd.f32 %v2043, %v2046
    %vm2048 = vweird.f32 %v2043
    %v2049 = vsel %vm2048, %v2043, %v2047
    %v2050 = vmul.f32 %v2021, %v2049
    %v2051 = vmul.f32 %v2028, %v2049
    %v2052 = vmul.f32 %v2035, %v2049
    %v2053 = vmul.f32 %v2042, %v2049
    %v2054 = vsub.f32 %v1930, %v2050
    %v2055 = vsub.f32 %v1956, %v2051
    %v2056 = vsub.f32 %v1982, %v2052
    %v2057 = vsub.f32 %v2008, %v2053
    %v2058 = vmul.f32 %v2054, %v2054
    %v2059 = vmul.f32 %v2055, %v2055
    %v2060 = vmul.f32 %v2056, %v2056
    %v2061 = vmul.f32 %v2057, %v2057
    %v2062 = vsel %vm62, %v2058, 0.0
    %v2063 = vrot.slane %v2062, 4
    %v2064 = vadd.f32 %v2062, %v2063
    %v2065 = vrot.slane %v2064, 2
    %v2066 = vadd.f32 %v2064, %v2065
    %v2067 = vrot.slane %v2066, 1
    %v2068 = vadd.f32 %v2066, %v2067
    %v2069 = vsel %vm62, %v2059, 0.0
    %v2070 = vrot.slane %v2069, 4
    %v2071 = vadd.f32 %v2069, %v2070
    %v2072 = vrot.slane %v2071, 2
    %v2073 = vadd.f32 %v2071, %v2072
    %v2074 = vrot.slane %v2073, 1
    %v2075 = vadd.f32 %v2073, %v2074
    %v2076 = vsel %vm62, %v2060, 0.0
    %v2077 = vrot.slane %v2076, 4
    %v2078 = vadd.f32 %v2076, %v2077
    %v2079 = vrot.slane %v2078, 2
    %v2080 = vadd.f32 %v2078, %v2079
    %v2081 = vrot.slane %v2080, 1
    %v2082 = vadd.f32 %v2080, %v2081
    %v2083 = vsel %vm62, %v2061, 0.0
    %v2084 = vrot.slane %v2083, 4
    %v2085 = vadd.f32 %v2083, %v2084
    %v2086 = vrot.slane %v2085, 2
    %v2087 = vadd.f32 %v2085, %v2086
    %v2088 = vrot.slane %v2087, 1
    %v2089 = vadd.f32 %v2087, %v2088
    %v2090 = vmul.f32 %v2068, %v2049
    %v2091 = vmul.f32 %v2075, %v2049
    %v2092 = vmul.f32 %v2082, %v2049
    %v2093 = vmul.f32 %v2089, %v2049
    %v2094 = vadd.f32 %v2090, 1e-05
    %v2095 = vadd.f32 %v2091, 1e-05
    %v2096 = vadd.f32 %v2092, 1e-05
    %v2097 = vadd.f32 %v2093, 1e-05
    %v2098 = vrsqrt.pop %v2094
    %v2099 = vmul.f32 %v2098, %v2094
    %v2100 = vmul.f32 %v2099, %v2098
    %v2101 = vmul.f32 0.5, %v2100
    %v2102 = vsub.f32 1.5, %v2101
    %v2103 = vmul.f32 %v2098, %v2102
    %vm2104 = vweird.f32 %v2094
    %vm2105 = vweird.f32 %v2098
    %vm2106 = vmor %vm2104, %vm2105
    %v2107 = vsel %vm2106, %v2098, %v2103
    %v2108 = vrsqrt.pop %v2095
    %v2109 = vmul.f32 %v2108, %v2095
    %v2110 = vmul.f32 %v2109, %v2108
    %v2111 = vmul.f32 0.5, %v2110
    %v2112 = vsub.f32 1.5, %v2111
    %v2113 = vmul.f32 %v2108, %v2112
    %vm2114 = vweird.f32 %v2095
    %vm2115 = vweird.f32 %v2108
    %vm2116 = vmor %vm2114, %vm2115
    %v2117 = vsel %vm2116, %v2108, %v2113
    %v2118 = vrsqrt.pop %v2096
    %v2119 = vmul.f32 %v2118, %v2096
    %v2120 = vmul.f32 %v2119, %v2118
    %v2121 = vmul.f32 0.5, %v2120
    %v2122 = vsub.f32 1.5, %v2121
    %v2123 = vmul.f32 %v2118, %v2122
    %vm2124 = vweird.f32 %v2096
    %vm2125 = vweird.f32 %v2118
    %vm2126 = vmor %vm2124, %vm2125
    %v2127 = vsel %vm2126, %v2118, %v2123
    %v2128 = vrsqrt.pop %v2097
    %v2129 = vmul.f32 %v2128, %v2097
    %v2130 = vmul.f32 %v2129, %v2128
    %v2131 = vmul.f32 0.5, %v2130
    %v2132 = vsub.f32 1.5, %v2131
    %v2133 = vmul.f32 %v2128, %v2132
    %vm2134 = vweird.f32 %v2097
    %vm2135 = vweird.f32 %v2128
    %vm2136 = vmor %vm2134, %vm2135
    %v2137 = vsel %vm2136, %v2128, %v2133
    %v2138 = vmul.f32 %v2054, %v2107
    %v2139 = vmul.f32 %v2055, %v2117
    %v2140 = vmul.f32 %v2056, %v2127
    %v2141 = vmul.f32 %v2057, %v2137
    %v2142 = vperm.slane %v2011, 0
    %v2143 = vperm.slane %v2012, 0
    %v2144 = vperm.slane %v2013, 0
    %v2145 = vperm.slane %v2014, 0
    %v2146 = vmul.f32 %v2138, %v2142
    %v2147 = vmul.f32 %v2139, %v2143
    %v2148 = vmul.f32 %v2140, %v2144
    %v2149 = vmul.f32 %v2141, %v2145
    %v2150 = vperm.slane %v2011, 1
    %v2151 = vperm.slane %v2012, 1
    %v2152 = vperm.slane %v2013, 1
    %v2153 = vperm.slane %v2014, 1
    %v2154 = vadd.f32 %v2146, %v2150
    %v2155 = vadd.f32 %v2147, %v2151
    %v2156 = vadd.f32 %v2148, %v2152
    %v2157 = vadd.f32 %v2149, %v2153
    %v2158 = vld [vmem:[#allocation2 + $0x840] sm:$0xf]
    %v2159 = vld [vmem:[#allocation2 + $0x850] sm:$0xf]
    %v2160 = vld [vmem:[#allocation2 + $0x860] sm:$0xf]
    %v2161 = vld [vmem:[#allocation2 + $0x870] sm:$0xf]
    %v2162 = vld [vmem:[#allocation2 + $0x880] sm:$0xf]
    %v2163 = vld [vmem:[#allocation2 + $0x890] sm:$0xf]
    %v2164 = vld [vmem:[#allocation2 + $0x8a0] sm:$0xf]
    %v2165 = vld [vmem:[#allocation2 + $0x8b0] sm:$0xf]
    %v2166 = vld [vmem:[#allocation2 + $0x8c0] sm:$0xf]
    %v2167 = vld [vmem:[#allocation2 + $0x8d0] sm:$0xf]
    %v2168 = vld [vmem:[#allocation2 + $0x8e0] sm:$0xf]
    %v2169 = vld [vmem:[#allocation2 + $0x8f0] sm:$0xf]
    %v2170 = vld [vmem:[#allocation2 + $0x900] sm:$0xf]
    %v2171 = vld [vmem:[#allocation2 + $0x910] sm:$0xf]
    %v2172 = vld [vmem:[#allocation2 + $0x920] sm:$0xf]
    %v2173 = vld [vmem:[#allocation2 + $0x930] sm:$0xf]
    %v2174 = vld [vmem:[#allocation2 + $0x940] sm:$0xf]
    %v2175 = vld [vmem:[#allocation2 + $0x950] sm:$0xf]
    %v2176 = vld [vmem:[#allocation2 + $0x960] sm:$0xf]
    %v2177 = vld [vmem:[#allocation2 + $0x970] sm:$0xf]
    %v2178 = vld [vmem:[#allocation2 + $0x980] sm:$0xf]
    %v2179 = vld [vmem:[#allocation2 + $0x990] sm:$0xf]
    %v2180 = vld [vmem:[#allocation2 + $0x9a0] sm:$0xf]
    %v2181 = vld [vmem:[#allocation2 + $0x9b0] sm:$0xf]
    %v2182 = vld [vmem:[#allocation2 + $0x9c0] sm:$0xf]
    %v2183 = vld [vmem:[#allocation2 + $0x9d0] sm:$0xf]
    %v2184 = vld [vmem:[#allocation2 + $0x9e0] sm:$0xf]
    %v2185 = vld [vmem:[#allocation2 + $0x9f0] sm:$0xf]
    %v2186 = vld [vmem:[#allocation2 + $0xa00] sm:$0xf]
    %v2187 = vld [vmem:[#allocation2 + $0xa10] sm:$0xf]
    %v2188 = vld [vmem:[#allocation2 + $0xa20] sm:$0xf]
    %v2189 = vld [vmem:[#allocation2 + $0xa30] sm:$0xf]
    %v2222 = vunpack.c.l.b16 %v2158
    %v2223 = vunpack.c.l.b16 %v2159
    %v2224 = vunpack.c.l.b16 %v2160
    %v2225 = vunpack.c.l.b16 %v2161
    %v2226 = vunpack.c.l.b16 %v2162
    %v2227 = vunpack.c.l.b16 %v2163
    %v2228 = vunpack.c.l.b16 %v2164
    %v2229 = vunpack.c.l.b16 %v2165
    %v2230 = vunpack.c.l.b16 %v2166
    %v2231 = vunpack.c.l.b16 %v2167
    %v2232 = vunpack.c.l.b16 %v2168
    %v2233 = vunpack.c.l.b16 %v2169
    %v2234 = vunpack.c.l.b16 %v2170
    %v2235 = vunpack.c.l.b16 %v2171
    %v2236 = vunpack.c.l.b16 %v2172
    %v2237 = vunpack.c.l.b16 %v2173
    %v2238 = vunpack.c.l.b16 %v2174
    %v2239 = vunpack.c.l.b16 %v2175
    %v2240 = vunpack.c.l.b16 %v2176
    %v2241 = vunpack.c.l.b16 %v2177
    %v2242 = vunpack.c.l.b16 %v2178
    %v2243 = vunpack.c.l.b16 %v2179
    %v2244 = vunpack.c.l.b16 %v2180
    %v2245 = vunpack.c.l.b16 %v2181
    %v2246 = vunpack.c.l.b16 %v2182
    %v2247 = vunpack.c.l.b16 %v2183
    %v2248 = vunpack.c.l.b16 %v2184
    %v2249 = vunpack.c.l.b16 %v2185
    %v2250 = vunpack.c.l.b16 %v2186
    %v2251 = vunpack.c.l.b16 %v2187
    %v2252 = vunpack.c.l.b16 %v2188
    %v2253 = vunpack.c.l.b16 %v2189
    %v2254 = vpack.c.b16 %v2223, %v2222
    %v2255 = vpack.c.b16 %v2225, %v2224
    %v2256 = vpack.c.b16 %v2227, %v2226
    %v2257 = vpack.c.b16 %v2229, %v2228
    %v2258 = vpack.c.b16 %v2231, %v2230
    %v2259 = vpack.c.b16 %v2233, %v2232
    %v2260 = vpack.c.b16 %v2235, %v2234
    %v2261 = vpack.c.b16 %v2237, %v2236
    %v2262 = vpack.c.b16 %v2239, %v2238
    %v2263 = vpack.c.b16 %v2241, %v2240
    %v2264 = vpack.c.b16 %v2243, %v2242
    %v2265 = vpack.c.b16 %v2245, %v2244
    %v2266 = vpack.c.b16 %v2247, %v2246
    %v2267 = vpack.c.b16 %v2249, %v2248
    %v2268 = vpack.c.b16 %v2251, %v2250
    %v2269 = vpack.c.b16 %v2253, %v2252
    %2286 = vmatpush.bf16.msra.mxu0 %v2261
    %2287 = vmatpush.bf16.msra.mxu0 %v2260
    %2288 = vmatpush.bf16.msra.mxu0 %v2259
    %2289 = vmatpush.bf16.msra.mxu0 %v2258
    %2290 = vmatpush.bf16.msra.mxu0 %v2257
    %2291 = vmatpush.bf16.msra.mxu0 %v2256
    %2292 = vmatpush.bf16.msra.mxu0 %v2255
    %2293 = vmatpush.bf16.msra.mxu0 %v2254
    %2294 = vmatmul.bf16.gmra.mxu0 %v1483
    %v2295 = vpop.f32.mrf.mxu0
    %v2296 = vadd.f32 0.0, %v2295
    %v2297 = vpop.f32.mrf.mxu0
    %2298 = vdwg.mxu0
    %2299 = vmatpush.bf16.msra.mxu0 %v2269
    %2300 = vmatpush.bf16.msra.mxu0 %v2268
    %2301 = vmatpush.bf16.msra.mxu0 %v2267
    %2302 = vmatpush.bf16.msra.mxu0 %v2266
    %2303 = vmatpush.bf16.msra.mxu0 %v2265
    %2304 = vmatpush.bf16.msra.mxu0 %v2264
    %2305 = vmatpush.bf16.msra.mxu0 %v2263
    %2306 = vmatpush.bf16.msra.mxu0 %v2262
    %2307 = vmatmul.bf16.gmra.mxu0 %v1484
    %v2308 = vpop.f32.mrf.mxu0
    %v2309 = vadd.f32 %v2296, %v2308
    %v2310 = vpop.f32.mrf.mxu0
    %2311 = vdwg.mxu0
    %v2312 = vld [vmem:[#allocation5 + $0x120] sm:$0x3]
    %v2313 = vsel %vm900, %v2309, 0.0
    %v2314 = vrot.slane %v2313, 4
    %v2315 = vadd.f32 %v2313, %v2314
    %v2316 = vrot.slane %v2315, 2
    %v2317 = vadd.f32 %v2315, %v2316
    %v2318 = vrot.slane %v2317, 1
    %v2319 = vadd.f32 %v2317, %v2318
    %v2320 = vmul.f32 %v2319, %v981
    %v2321 = vsub.f32 %v2309, %v2320
    %v2322 = vmul.f32 %v2321, %v2321
    %v2323 = vsel %vm900, %v2322, 0.0
    %v2324 = vrot.slane %v2323, 4
    %v2325 = vadd.f32 %v2323, %v2324
    %v2326 = vrot.slane %v2325, 2
    %v2327 = vadd.f32 %v2325, %v2326
    %v2328 = vrot.slane %v2327, 1
    %v2329 = vadd.f32 %v2327, %v2328
    %v2330 = vmul.f32 %v2329, %v981
    %v2331 = vadd.f32 %v2330, 1e-05
    %v2332 = vrsqrt.pop %v2331
    %v2333 = vmul.f32 %v2332, %v2331
    %v2334 = vmul.f32 %v2333, %v2332
    %v2335 = vmul.f32 0.5, %v2334
    %v2336 = vsub.f32 1.5, %v2335
    %v2337 = vmul.f32 %v2332, %v2336
    %vm2338 = vweird.f32 %v2331
    %vm2339 = vweird.f32 %v2332
    %vm2340 = vmor %vm2338, %vm2339
    %v2341 = vsel %vm2340, %v2332, %v2337
    %v2342 = vmul.f32 %v2321, %v2341
    %v2343 = vperm.slane %v2312, 0
    %v2344 = vmul.f32 %v2342, %v2343
    %v2345 = vperm.slane %v2312, 1
    %v2346 = vadd.f32 %v2344, %v2345
    %v2347 = vtanh.pop %v2346
    %v2348 = vpack.c.bf16 %v2347, %v2347
    %v2349 = vld [vmem:[#allocation2 + $0xd40] sm:$0x1]
    %v2351 = vsel %vm55, %v2349, 0
    %v2354 = vsel %vm62, %v2348, 0
    %2356 = vmatpush.bf16.msra.mxu0 0
    %2357 = vmatpush.bf16.msra.mxu0 0
    %2358 = vmatpush.bf16.msra.mxu0 0
    %2359 = vmatpush.bf16.msra.mxu0 0
    %2360 = vmatpush.bf16.msra.mxu0 0
    %2361 = vmatpush.bf16.msra.mxu0 0
    %2362 = vmatpush.bf16.msra.mxu0 0
    %2363 = vmatpush.bf16.msra.mxu0 %v2354
    %2364 = vmatmul.bf16.gmra.mxu0 %v2351
    %v2365 = vpop.f32.mrf.mxu0
    %v2366 = vadd.f32 0.0, %v2365
    %v2367 = vpop.f32.mrf.mxu0
    %2368 = vdwg.mxu0
    %v2369 = vpack.c.bf16 %v2366, %v2366
    %v2370 = vld [vmem:[#allocation2 + $0xd60] sm:$0x1]
    %v2372 = vsel %vm55, %v2370, 0
    %2374 = vmatpush.bf16.msra.mxu0 0
    %2375 = vmatpush.bf16.msra.mxu0 0
    %2376 = vmatpush.bf16.msra.mxu0 0
    %2377 = vmatpush.bf16.msra.mxu0 0
    %2378 = vmatpush.bf16.msra.mxu0 0
    %2379 = vmatpush.bf16.msra.mxu0 0
    %2380 = vmatpush.bf16.msra.mxu0 0
    %2381 = vmatpush.bf16.msra.mxu0 %v2354
    %2382 = vmatmul.bf16.gmra.mxu0 %v2372
    %v2383 = vpop.f32.mrf.mxu0
    %v2384 = vadd.f32 0.0, %v2383
    %v2385 = vpop.f32.mrf.mxu0
    %2386 = vdwg.mxu0
    %v2387 = vpack.c.bf16 %v2384, %v2384
    %v2388 = vld [vmem:[#allocation2 + $0xd80] sm:$0x1]
    %v2390 = vsel %vm55, %v2388, 0
    %2392 = vmatpush.bf16.msra.mxu0 0
    %2393 = vmatpush.bf16.msra.mxu0 0
    %2394 = vmatpush.bf16.msra.mxu0 0
    %2395 = vmatpush.bf16.msra.mxu0 0
    %2396 = vmatpush.bf16.msra.mxu0 0
    %2397 = vmatpush.bf16.msra.mxu0 0
    %2398 = vmatpush.bf16.msra.mxu0 0
    %2399 = vmatpush.bf16.msra.mxu0 %v2354
    %2400 = vmatmul.bf16.gmra.mxu0 %v2390
    %v2401 = vpop.f32.mrf.mxu0
    %v2402 = vadd.f32 0.0, %v2401
    %v2403 = vpop.f32.mrf.mxu0
    %2404 = vdwg.mxu0
    %v2405 = vpack.c.bf16 %v2402, %v2402
    %v2406 = vld [vmem:[#allocation2 + $0xa40] sm:$0xf]
    %v2407 = vld [vmem:[#allocation2 + $0xa50] sm:$0xf]
    %v2408 = vld [vmem:[#allocation2 + $0xa60] sm:$0xf]
    %v2409 = vld [vmem:[#allocation2 + $0xa70] sm:$0xf]
    %v2410 = vld [vmem:[#allocation2 + $0xa80] sm:$0xf]
    %v2411 = vld [vmem:[#allocation2 + $0xa90] sm:$0xf]
    %v2412 = vld [vmem:[#allocation2 + $0xaa0] sm:$0xf]
    %v2413 = vld [vmem:[#allocation2 + $0xab0] sm:$0xf]
    %v2414 = vld [vmem:[#allocation2 + $0xac0] sm:$0xf]
    %v2415 = vld [vmem:[#allocation2 + $0xad0] sm:$0xf]
    %v2416 = vld [vmem:[#allocation2 + $0xae0] sm:$0xf]
    %v2417 = vld [vmem:[#allocation2 + $0xaf0] sm:$0xf]
    %v2418 = vld [vmem:[#allocation2 + $0xb00] sm:$0xf]
    %v2419 = vld [vmem:[#allocation2 + $0xb10] sm:$0xf]
    %v2420 = vld [vmem:[#allocation2 + $0xb20] sm:$0xf]
    %v2421 = vld [vmem:[#allocation2 + $0xb30] sm:$0xf]
    %v2422 = vld [vmem:[#allocation2 + $0xb40] sm:$0xf]
    %v2423 = vld [vmem:[#allocation2 + $0xb50] sm:$0xf]
    %v2424 = vld [vmem:[#allocation2 + $0xb60] sm:$0xf]
    %v2425 = vld [vmem:[#allocation2 + $0xb70] sm:$0xf]
    %v2426 = vld [vmem:[#allocation2 + $0xb80] sm:$0xf]
    %v2427 = vld [vmem:[#allocation2 + $0xb90] sm:$0xf]
    %v2428 = vld [vmem:[#allocation2 + $0xba0] sm:$0xf]
    %v2429 = vld [vmem:[#allocation2 + $0xbb0] sm:$0xf]
    %v2430 = vld [vmem:[#allocation2 + $0xbc0] sm:$0xf]
    %v2431 = vld [vmem:[#allocation2 + $0xbd0] sm:$0xf]
    %v2432 = vld [vmem:[#allocation2 + $0xbe0] sm:$0xf]
    %v2433 = vld [vmem:[#allocation2 + $0xbf0] sm:$0xf]
    %v2434 = vld [vmem:[#allocation2 + $0xc00] sm:$0xf]
    %v2435 = vld [vmem:[#allocation2 + $0xc10] sm:$0xf]
    %v2436 = vld [vmem:[#allocation2 + $0xc20] sm:$0xf]
    %v2437 = vld [vmem:[#allocation2 + $0xc30] sm:$0xf]
    %v2438 = vld [vmem:[#allocation2 + $0xc40] sm:$0xf]
    %v2439 = vld [vmem:[#allocation2 + $0xc50] sm:$0xf]
    %v2440 = vld [vmem:[#allocation2 + $0xc60] sm:$0xf]
    %v2441 = vld [vmem:[#allocation2 + $0xc70] sm:$0xf]
    %v2442 = vld [vmem:[#allocation2 + $0xc80] sm:$0xf]
    %v2443 = vld [vmem:[#allocation2 + $0xc90] sm:$0xf]
    %v2444 = vld [vmem:[#allocation2 + $0xca0] sm:$0xf]
    %v2445 = vld [vmem:[#allocation2 + $0xcb0] sm:$0xf]
    %v2446 = vld [vmem:[#allocation2 + $0xcc0] sm:$0xf]
    %v2447 = vld [vmem:[#allocation2 + $0xcd0] sm:$0xf]
    %v2448 = vld [vmem:[#allocation2 + $0xce0] sm:$0xf]
    %v2449 = vld [vmem:[#allocation2 + $0xcf0] sm:$0xf]
    %v2450 = vld [vmem:[#allocation2 + $0xd00] sm:$0xf]
    %v2451 = vld [vmem:[#allocation2 + $0xd10] sm:$0xf]
    %v2452 = vld [vmem:[#allocation2 + $0xd20] sm:$0xf]
    %v2453 = vld [vmem:[#allocation2 + $0xd30] sm:$0xf]
    %v2502 = vunpack.c.l.b16 %v2406
    %v2503 = vunpack.c.l.b16 %v2407
    %v2504 = vunpack.c.l.b16 %v2408
    %v2505 = vunpack.c.l.b16 %v2409
    %v2506 = vunpack.c.l.b16 %v2410
    %v2507 = vunpack.c.l.b16 %v2411
    %v2508 = vunpack.c.l.b16 %v2412
    %v2509 = vunpack.c.l.b16 %v2413
    %v2510 = vunpack.c.l.b16 %v2414
    %v2511 = vunpack.c.l.b16 %v2415
    %v2512 = vunpack.c.l.b16 %v2416
    %v2513 = vunpack.c.l.b16 %v2417
    %v2514 = vunpack.c.l.b16 %v2418
    %v2515 = vunpack.c.l.b16 %v2419
    %v2516 = vunpack.c.l.b16 %v2420
    %v2517 = vunpack.c.l.b16 %v2421
    %v2518 = vunpack.c.l.b16 %v2422
    %v2519 = vunpack.c.l.b16 %v2423
    %v2520 = vunpack.c.l.b16 %v2424
    %v2521 = vunpack.c.l.b16 %v2425
    %v2522 = vunpack.c.l.b16 %v2426
    %v2523 = vunpack.c.l.b16 %v2427
    %v2524 = vunpack.c.l.b16 %v2428
    %v2525 = vunpack.c.l.b16 %v2429
    %v2526 = vunpack.c.l.b16 %v2430
    %v2527 = vunpack.c.l.b16 %v2431
    %v2528 = vunpack.c.l.b16 %v2432
    %v2529 = vunpack.c.l.b16 %v2433
    %v2530 = vunpack.c.l.b16 %v2434
    %v2531 = vunpack.c.l.b16 %v2435
    %v2532 = vunpack.c.l.b16 %v2436
    %v2533 = vunpack.c.l.b16 %v2437
    %v2534 = vunpack.c.l.b16 %v2438
    %v2535 = vunpack.c.l.b16 %v2439
    %v2536 = vunpack.c.l.b16 %v2440
    %v2537 = vunpack.c.l.b16 %v2441
    %v2538 = vunpack.c.l.b16 %v2442
    %v2539 = vunpack.c.l.b16 %v2443
    %v2540 = vunpack.c.l.b16 %v2444
    %v2541 = vunpack.c.l.b16 %v2445
    %v2542 = vunpack.c.l.b16 %v2446
    %v2543 = vunpack.c.l.b16 %v2447
    %v2544 = vunpack.c.l.b16 %v2448
    %v2545 = vunpack.c.l.b16 %v2449
    %v2546 = vunpack.c.l.b16 %v2450
    %v2547 = vunpack.c.l.b16 %v2451
    %v2548 = vunpack.c.l.b16 %v2452
    %v2549 = vunpack.c.l.b16 %v2453
    %v2550 = vpack.c.b16 %v2503, %v2502
    %v2551 = vpack.c.b16 %v2505, %v2504
    %v2552 = vpack.c.b16 %v2507, %v2506
    %v2553 = vpack.c.b16 %v2509, %v2508
    %v2554 = vpack.c.b16 %v2511, %v2510
    %v2555 = vpack.c.b16 %v2513, %v2512
    %v2556 = vpack.c.b16 %v2515, %v2514
    %v2557 = vpack.c.b16 %v2517, %v2516
    %v2558 = vpack.c.b16 %v2519, %v2518
    %v2559 = vpack.c.b16 %v2521, %v2520
    %v2560 = vpack.c.b16 %v2523, %v2522
    %v2561 = vpack.c.b16 %v2525, %v2524
    %v2562 = vpack.c.b16 %v2527, %v2526
    %v2563 = vpack.c.b16 %v2529, %v2528
    %v2564 = vpack.c.b16 %v2531, %v2530
    %v2565 = vpack.c.b16 %v2533, %v2532
    %v2566 = vpack.c.b16 %v2535, %v2534
    %v2567 = vpack.c.b16 %v2537, %v2536
    %v2568 = vpack.c.b16 %v2539, %v2538
    %v2569 = vpack.c.b16 %v2541, %v2540
    %v2570 = vpack.c.b16 %v2543, %v2542
    %v2571 = vpack.c.b16 %v2545, %v2544
    %v2572 = vpack.c.b16 %v2547, %v2546
    %v2573 = vpack.c.b16 %v2549, %v2548
    %2598 = vmatpush.bf16.msra.mxu0 %v2557
    %2599 = vmatpush.bf16.msra.mxu0 %v2556
    %2600 = vmatpush.bf16.msra.mxu0 %v2555
    %2601 = vmatpush.bf16.msra.mxu0 %v2554
    %2602 = vmatpush.bf16.msra.mxu0 %v2553
    %2603 = vmatpush.bf16.msra.mxu0 %v2552
    %2604 = vmatpush.bf16.msra.mxu0 %v2551
    %2605 = vmatpush.bf16.msra.mxu0 %v2550
    %2606 = vmatmul.bf16.gmra.mxu0 %v2369
    %v2607 = vpop.f32.mrf.mxu0
    %v2608 = vadd.f32 0.0, %v2607
    %v2609 = vpop.f32.mrf.mxu0
    %2610 = vdwg.mxu0
    %2611 = vmatpush.bf16.msra.mxu0 %v2565
    %2612 = vmatpush.bf16.msra.mxu0 %v2564
    %2613 = vmatpush.bf16.msra.mxu0 %v2563
    %2614 = vmatpush.bf16.msra.mxu0 %v2562
    %2615 = vmatpush.bf16.msra.mxu0 %v2561
    %2616 = vmatpush.bf16.msra.mxu0 %v2560
    %2617 = vmatpush.bf16.msra.mxu0 %v2559
    %2618 = vmatpush.bf16.msra.mxu0 %v2558
    %2619 = vmatmul.bf16.gmra.mxu0 %v2387
    %v2620 = vpop.f32.mrf.mxu0
    %v2621 = vadd.f32 %v2608, %v2620
    %v2622 = vpop.f32.mrf.mxu0
    %2623 = vdwg.mxu0
    %2624 = vmatpush.bf16.msra.mxu0 %v2573
    %2625 = vmatpush.bf16.msra.mxu0 %v2572
    %2626 = vmatpush.bf16.msra.mxu0 %v2571
    %2627 = vmatpush.bf16.msra.mxu0 %v2570
    %2628 = vmatpush.bf16.msra.mxu0 %v2569
    %2629 = vmatpush.bf16.msra.mxu0 %v2568
    %2630 = vmatpush.bf16.msra.mxu0 %v2567
    %2631 = vmatpush.bf16.msra.mxu0 %v2566
    %2632 = vmatmul.bf16.gmra.mxu0 %v2405
    %v2633 = vpop.f32.mrf.mxu0
    %v2634 = vadd.f32 %v2621, %v2633
    %v2635 = vpop.f32.mrf.mxu0
    %2636 = vdwg.mxu0
    %v2637 = vld [vmem:[#allocation5 + $0x140] sm:$0x3]
    %v2638 = vsel %vm62, %v2634, 0.0
    %v2639 = vrot.slane %v2638, 4
    %v2640 = vadd.f32 %v2638, %v2639
    %v2641 = vrot.slane %v2640, 2
    %v2642 = vadd.f32 %v2640, %v2641
    %v2643 = vrot.slane %v2642, 1
    %v2644 = vadd.f32 %v2642, %v2643
    %v2645 = vmul.f32 %v2644, %v2049
    %v2646 = vsub.f32 %v2634, %v2645
    %v2647 = vmul.f32 %v2646, %v2646
    %v2648 = vsel %vm62, %v2647, 0.0
    %v2649 = vrot.slane %v2648, 4
    %v2650 = vadd.f32 %v2648, %v2649
    %v2651 = vrot.slane %v2650, 2
    %v2652 = vadd.f32 %v2650, %v2651
    %v2653 = vrot.slane %v2652, 1
    %v2654 = vadd.f32 %v2652, %v2653
    %v2655 = vmul.f32 %v2654, %v2049
    %v2656 = vadd.f32 %v2655, 1e-05
    %v2657 = vrsqrt.pop %v2656
    %v2658 = vmul.f32 %v2657, %v2656
    %v2659 = vmul.f32 %v2658, %v2657
    %v2660 = vmul.f32 0.5, %v2659
    %v2661 = vsub.f32 1.5, %v2660
    %v2662 = vmul.f32 %v2657, %v2661
    %vm2663 = vweird.f32 %v2656
    %vm2664 = vweird.f32 %v2657
    %vm2665 = vmor %vm2663, %vm2664
    %v2666 = vsel %vm2665, %v2657, %v2662
    %v2667 = vmul.f32 %v2646, %v2666
    %v2668 = vperm.slane %v2637, 0
    %v2669 = vmul.f32 %v2667, %v2668
    %v2670 = vperm.slane %v2637, 1
    %v2671 = vadd.f32 %v2669, %v2670
    %v2672 = vtanh.pop %v2671
    %v2673 = vpack.c.bf16 %v2672, %v2672
    %v2674 = vld [vmem:[#allocation2 + $0xda0] sm:$0xff]
    %v2675 = vld [vmem:[#allocation2 + $0xda8] sm:$0xff]
    %v2676 = vld [vmem:[#allocation2 + $0xdb0] sm:$0xff]
    %v2677 = vld [vmem:[#allocation2 + $0xdb8] sm:$0xff]
    %v2678 = vld [vmem:[#allocation2 + $0xdc0] sm:$0xff]
    %v2679 = vld [vmem:[#allocation2 + $0xdc8] sm:$0xff]
    %v2680 = vld [vmem:[#allocation2 + $0xdd0] sm:$0xff]
    %v2681 = vld [vmem:[#allocation2 + $0xdd8] sm:$0xff]
    %v2682 = vld [vmem:[#allocation2 + $0xde0] sm:$0xff]
    %v2683 = vld [vmem:[#allocation2 + $0xde8] sm:$0xff]
    %v2684 = vld [vmem:[#allocation2 + $0xdf0] sm:$0xff]
    %v2685 = vld [vmem:[#allocation2 + $0xdf8] sm:$0xff]
    %v2686 = vld [vmem:[#allocation2 + $0xe00] sm:$0xff]
    %v2687 = vld [vmem:[#allocation2 + $0xe08] sm:$0xff]
    %v2688 = vld [vmem:[#allocation2 + $0xe10] sm:$0xff]
    %v2689 = vld [vmem:[#allocation2 + $0xe18] sm:$0xff]
    %v2690 = vld [vmem:[#allocation2 + $0xe20] sm:$0xff]
    %v2691 = vld [vmem:[#allocation2 + $0xe28] sm:$0xff]
    %v2692 = vld [vmem:[#allocation2 + $0xe30] sm:$0xff]
    %v2693 = vld [vmem:[#allocation2 + $0xe38] sm:$0xff]
    %v2694 = vld [vmem:[#allocation2 + $0xe40] sm:$0xff]
    %v2695 = vld [vmem:[#allocation2 + $0xe48] sm:$0xff]
    %v2696 = vld [vmem:[#allocation2 + $0xe50] sm:$0xff]
    %v2697 = vld [vmem:[#allocation2 + $0xe58] sm:$0xff]
    %v2698 = vld [vmem:[#allocation2 + $0xe60] sm:$0xff]
    %v2699 = vld [vmem:[#allocation2 + $0xe68] sm:$0xff]
    %v2700 = vld [vmem:[#allocation2 + $0xe70] sm:$0xff]
    %v2701 = vld [vmem:[#allocation2 + $0xe78] sm:$0xff]
    %v2702 = vld [vmem:[#allocation2 + $0xe80] sm:$0xff]
    %v2703 = vld [vmem:[#allocation2 + $0xe88] sm:$0xff]
    %v2704 = vld [vmem:[#allocation2 + $0xe90] sm:$0xff]
    %v2705 = vld [vmem:[#allocation2 + $0xe98] sm:$0xff]
    %v2738 = vunpack.c.l.b16 %v2674
    %v2739 = vunpack.c.h.b16 %v2674
    %v2740 = vunpack.c.l.b16 %v2675
    %v2741 = vunpack.c.h.b16 %v2675
    %v2742 = vunpack.c.l.b16 %v2676
    %v2743 = vunpack.c.h.b16 %v2676
    %v2744 = vunpack.c.l.b16 %v2677
    %v2745 = vunpack.c.h.b16 %v2677
    %v2746 = vunpack.c.l.b16 %v2678
    %v2747 = vunpack.c.h.b16 %v2678
    %v2748 = vunpack.c.l.b16 %v2679
    %v2749 = vunpack.c.h.b16 %v2679
    %v2750 = vunpack.c.l.b16 %v2680
    %v2751 = vunpack.c.h.b16 %v2680
    %v2752 = vunpack.c.l.b16 %v2681
    %v2753 = vunpack.c.h.b16 %v2681
    %v2754 = vunpack.c.l.b16 %v2682
    %v2755 = vunpack.c.h.b16 %v2682
    %v2756 = vunpack.c.l.b16 %v2683
    %v2757 = vunpack.c.h.b16 %v2683
    %v2758 = vunpack.c.l.b16 %v2684
    %v2759 = vunpack.c.h.b16 %v2684
    %v2760 = vunpack.c.l.b16 %v2685
    %v2761 = vunpack.c.h.b16 %v2685
    %v2762 = vunpack.c.l.b16 %v2686
    %v2763 = vunpack.c.h.b16 %v2686
    %v2764 = vunpack.c.l.b16 %v2687
    %v2765 = vunpack.c.h.b16 %v2687
    %v2766 = vunpack.c.l.b16 %v2688
    %v2767 = vunpack.c.h.b16 %v2688
    %v2768 = vunpack.c.l.b16 %v2689
    %v2769 = vunpack.c.h.b16 %v2689
    %v2770 = vunpack.c.l.b16 %v2690
    %v2771 = vunpack.c.h.b16 %v2690
    %v2772 = vunpack.c.l.b16 %v2691
    %v2773 = vunpack.c.h.b16 %v2691
    %v2774 = vunpack.c.l.b16 %v2692
    %v2775 = vunpack.c.h.b16 %v2692
    %v2776 = vunpack.c.l.b16 %v2693
    %v2777 = vunpack.c.h.b16 %v2693
    %v2778 = vunpack.c.l.b16 %v2694
    %v2779 = vunpack.c.h.b16 %v2694
    %v2780 = vunpack.c.l.b16 %v2695
    %v2781 = vunpack.c.h.b16 %v2695
    %v2782 = vunpack.c.l.b16 %v2696
    %v2783 = vunpack.c.h.b16 %v2696
    %v2784 = vunpack.c.l.b16 %v2697
    %v2785 = vunpack.c.h.b16 %v2697
    %v2786 = vunpack.c.l.b16 %v2698
    %v2787 = vunpack.c.h.b16 %v2698
    %v2788 = vunpack.c.l.b16 %v2699
    %v2789 = vunpack.c.h.b16 %v2699
    %v2790 = vunpack.c.l.b16 %v2700
    %v2791 = vunpack.c.h.b16 %v2700
    %v2792 = vunpack.c.l.b16 %v2701
    %v2793 = vunpack.c.h.b16 %v2701
    %v2794 = vunpack.c.l.b16 %v2702
    %v2795 = vunpack.c.h.b16 %v2702
    %v2796 = vunpack.c.l.b16 %v2703
    %v2797 = vunpack.c.h.b16 %v2703
    %v2798 = vunpack.c.l.b16 %v2704
    %v2799 = vunpack.c.h.b16 %v2704
    %v2800 = vunpack.c.l.b16 %v2705
    %v2801 = vunpack.c.h.b16 %v2705
    %v2802 = vpack.c.b16 %v2742, %v2738
    %v2803 = vpack.c.b16 %v2743, %v2739
    %v2804 = vpack.c.b16 %v2744, %v2740
    %v2805 = vpack.c.b16 %v2745, %v2741
    %v2806 = vpack.c.b16 %v2750, %v2746
    %v2807 = vpack.c.b16 %v2751, %v2747
    %v2808 = vpack.c.b16 %v2752, %v2748
    %v2809 = vpack.c.b16 %v2753, %v2749
    %v2810 = vpack.c.b16 %v2758, %v2754
    %v2811 = vpack.c.b16 %v2759, %v2755
    %v2812 = vpack.c.b16 %v2760, %v2756
    %v2813 = vpack.c.b16 %v2761, %v2757
    %v2814 = vpack.c.b16 %v2766, %v2762
    %v2815 = vpack.c.b16 %v2767, %v2763
    %v2816 = vpack.c.b16 %v2768, %v2764
    %v2817 = vpack.c.b16 %v2769, %v2765
    %v2818 = vpack.c.b16 %v2774, %v2770
    %v2819 = vpack.c.b16 %v2775, %v2771
    %v2820 = vpack.c.b16 %v2776, %v2772
    %v2821 = vpack.c.b16 %v2777, %v2773
    %v2822 = vpack.c.b16 %v2782, %v2778
    %v2823 = vpack.c.b16 %v2783, %v2779
    %v2824 = vpack.c.b16 %v2784, %v2780
    %v2825 = vpack.c.b16 %v2785, %v2781
    %v2826 = vpack.c.b16 %v2790, %v2786
    %v2827 = vpack.c.b16 %v2791, %v2787
    %v2828 = vpack.c.b16 %v2792, %v2788
    %v2829 = vpack.c.b16 %v2793, %v2789
    %v2830 = vpack.c.b16 %v2798, %v2794
    %v2831 = vpack.c.b16 %v2799, %v2795
    %v2832 = vpack.c.b16 %v2800, %v2796
    %v2833 = vpack.c.b16 %v2801, %v2797
    %2866 = vmatpush.bf16.msra.mxu0 %v2830
    %2867 = vmatpush.bf16.msra.mxu0 %v2826
    %2868 = vmatpush.bf16.msra.mxu0 %v2822
    %2869 = vmatpush.bf16.msra.mxu0 %v2818
    %2870 = vmatpush.bf16.msra.mxu0 %v2814
    %2871 = vmatpush.bf16.msra.mxu0 %v2810
    %2872 = vmatpush.bf16.msra.mxu0 %v2806
    %2873 = vmatpush.bf16.msra.mxu0 %v2802
    %2874 = vmatmul.bf16.gmra.mxu0 %v2673
    %v2875 = vpop.f32.mrf.mxu0
    %v2876 = vadd.f32 0.0, %v2875
    %v2877 = vpop.f32.mrf.mxu0
    %2878 = vdwg.mxu0
    %2879 = vmatpush.bf16.msra.mxu0 %v2831
    %2880 = vmatpush.bf16.msra.mxu0 %v2827
    %2881 = vmatpush.bf16.msra.mxu0 %v2823
    %2882 = vmatpush.bf16.msra.mxu0 %v2819
    %2883 = vmatpush.bf16.msra.mxu0 %v2815
    %2884 = vmatpush.bf16.msra.mxu0 %v2811
    %2885 = vmatpush.bf16.msra.mxu0 %v2807
    %2886 = vmatpush.bf16.msra.mxu0 %v2803
    %2887 = vmatmul.bf16.gmra.mxu0 %v2673
    %v2888 = vpop.f32.mrf.mxu0
    %v2889 = vadd.f32 0.0, %v2888
    %v2890 = vpop.f32.mrf.mxu0
    %2891 = vdwg.mxu0
    %2892 = vmatpush.bf16.msra.mxu0 %v2832
    %2893 = vmatpush.bf16.msra.mxu0 %v2828
    %2894 = vmatpush.bf16.msra.mxu0 %v2824
    %2895 = vmatpush.bf16.msra.mxu0 %v2820
    %2896 = vmatpush.bf16.msra.mxu0 %v2816
    %2897 = vmatpush.bf16.msra.mxu0 %v2812
    %2898 = vmatpush.bf16.msra.mxu0 %v2808
    %2899 = vmatpush.bf16.msra.mxu0 %v2804
    %2900 = vmatmul.bf16.gmra.mxu0 %v2673
    %v2901 = vpop.f32.mrf.mxu0
    %v2902 = vadd.f32 0.0, %v2901
    %v2903 = vpop.f32.mrf.mxu0
    %2904 = vdwg.mxu0
    %2905 = vmatpush.bf16.msra.mxu0 %v2833
    %2906 = vmatpush.bf16.msra.mxu0 %v2829
    %2907 = vmatpush.bf16.msra.mxu0 %v2825
    %2908 = vmatpush.bf16.msra.mxu0 %v2821
    %2909 = vmatpush.bf16.msra.mxu0 %v2817
    %2910 = vmatpush.bf16.msra.mxu0 %v2813
    %2911 = vmatpush.bf16.msra.mxu0 %v2809
    %2912 = vmatpush.bf16.msra.mxu0 %v2805
    %2913 = vmatmul.bf16.gmra.mxu0 %v2673
    %v2914 = vpop.f32.mrf.mxu0
    %v2915 = vadd.f32 0.0, %v2914
    %v2916 = vpop.f32.mrf.mxu0
    %2917 = vdwg.mxu0
    %v2918 = vld [vmem:[#allocation5 + $0x160] sm:$0x3]
    %v2919 = vld [vmem:[#allocation5 + $0x168] sm:$0x3]
    %v2920 = vld [vmem:[#allocation5 + $0x170] sm:$0x3]
    %v2921 = vld [vmem:[#allocation5 + $0x178] sm:$0x3]
    %v2922 = vsel %vm62, %v2876, 0.0
    %v2923 = vrot.slane %v2922, 4
    %v2924 = vadd.f32 %v2922, %v2923
    %v2925 = vrot.slane %v2924, 2
    %v2926 = vadd.f32 %v2924, %v2925
    %v2927 = vrot.slane %v2926, 1
    %v2928 = vadd.f32 %v2926, %v2927
    %v2929 = vsel %vm62, %v2889, 0.0
    %v2930 = vrot.slane %v2929, 4
    %v2931 = vadd.f32 %v2929, %v2930
    %v2932 = vrot.slane %v2931, 2
    %v2933 = vadd.f32 %v2931, %v2932
    %v2934 = vrot.slane %v2933, 1
    %v2935 = vadd.f32 %v2933, %v2934
    %v2936 = vsel %vm62, %v2902, 0.0
    %v2937 = vrot.slane %v2936, 4
    %v2938 = vadd.f32 %v2936, %v2937
    %v2939 = vrot.slane %v2938, 2
    %v2940 = vadd.f32 %v2938, %v2939
    %v2941 = vrot.slane %v2940, 1
    %v2942 = vadd.f32 %v2940, %v2941
    %v2943 = vsel %vm62, %v2915, 0.0
    %v2944 = vrot.slane %v2943, 4
    %v2945 = vadd.f32 %v2943, %v2944
    %v2946 = vrot.slane %v2945, 2
    %v2947 = vadd.f32 %v2945, %v2946
    %v2948 = vrot.slane %v2947, 1
    %v2949 = vadd.f32 %v2947, %v2948
    %v2950 = vmul.f32 %v2928, %v2049
    %v2951 = vmul.f32 %v2935, %v2049
    %v2952 = vmul.f32 %v2942, %v2049
    %v2953 = vmul.f32 %v2949, %v2049
    %v2954 = vsub.f32 %v2876, %v2950
    %v2955 = vsub.f32 %v2889, %v2951
    %v2956 = vsub.f32 %v2902, %v2952
    %v2957 = vsub.f32 %v2915, %v2953
    %v2958 = vmul.f32 %v2954, %v2954
    %v2959 = vmul.f32 %v2955, %v2955
    %v2960 = vmul.f32 %v2956, %v2956
    %v2961 = vmul.f32 %v2957, %v2957
    %v2962 = vsel %vm62, %v2958, 0.0
    %v2963 = vrot.slane %v2962, 4
    %v2964 = vadd.f32 %v2962, %v2963
    %v2965 = vrot.slane %v2964, 2
    %v2966 = vadd.f32 %v2964, %v2965
    %v2967 = vrot.slane %v2966, 1
    %v2968 = vadd.f32 %v2966, %v2967
    %v2969 = vsel %vm62, %v2959, 0.0
    %v2970 = vrot.slane %v2969, 4
    %v2971 = vadd.f32 %v2969, %v2970
    %v2972 = vrot.slane %v2971, 2
    %v2973 = vadd.f32 %v2971, %v2972
    %v2974 = vrot.slane %v2973, 1
    %v2975 = vadd.f32 %v2973, %v2974
    %v2976 = vsel %vm62, %v2960, 0.0
    %v2977 = vrot.slane %v2976, 4
    %v2978 = vadd.f32 %v2976, %v2977
    %v2979 = vrot.slane %v2978, 2
    %v2980 = vadd.f32 %v2978, %v2979
    %v2981 = vrot.slane %v2980, 1
    %v2982 = vadd.f32 %v2980, %v2981
    %v2983 = vsel %vm62, %v2961, 0.0
    %v2984 = vrot.slane %v2983, 4
    %v2985 = vadd.f32 %v2983, %v2984
    %v2986 = vrot.slane %v2985, 2
    %v2987 = vadd.f32 %v2985, %v2986
    %v2988 = vrot.slane %v2987, 1
    %v2989 = vadd.f32 %v2987, %v2988
    %v2990 = vmul.f32 %v2968, %v2049
    %v2991 = vmul.f32 %v2975, %v2049
    %v2992 = vmul.f32 %v2982, %v2049
    %v2993 = vmul.f32 %v2989, %v2049
    %v2994 = vadd.f32 %v2990, 1e-05
    %v2995 = vadd.f32 %v2991, 1e-05
    %v2996 = vadd.f32 %v2992, 1e-05
    %v2997 = vadd.f32 %v2993, 1e-05
    %v2998 = vrsqrt.pop %v2994
    %v2999 = vmul.f32 %v2998, %v2994
    %v3000 = vmul.f32 %v2999, %v2998
    %v3001 = vmul.f32 0.5, %v3000
    %v3002 = vsub.f32 1.5, %v3001
    %v3003 = vmul.f32 %v2998, %v3002
    %vm3004 = vweird.f32 %v2994
    %vm3005 = vweird.f32 %v2998
    %vm3006 = vmor %vm3004, %vm3005
    %v3007 = vsel %vm3006, %v2998, %v3003
    %v3008 = vrsqrt.pop %v2995
    %v3009 = vmul.f32 %v3008, %v2995
    %v3010 = vmul.f32 %v3009, %v3008
    %v3011 = vmul.f32 0.5, %v3010
    %v3012 = vsub.f32 1.5, %v3011
    %v3013 = vmul.f32 %v3008, %v3012
    %vm3014 = vweird.f32 %v2995
    %vm3015 = vweird.f32 %v3008
    %vm3016 = vmor %vm3014, %vm3015
    %v3017 = vsel %vm3016, %v3008, %v3013
    %v3018 = vrsqrt.pop %v2996
    %v3019 = vmul.f32 %v3018, %v2996
    %v3020 = vmul.f32 %v3019, %v3018
    %v3021 = vmul.f32 0.5, %v3020
    %v3022 = vsub.f32 1.5, %v3021
    %v3023 = vmul.f32 %v3018, %v3022
    %vm3024 = vweird.f32 %v2996
    %vm3025 = vweird.f32 %v3018
    %vm3026 = vmor %vm3024, %vm3025
    %v3027 = vsel %vm3026, %v3018, %v3023
    %v3028 = vrsqrt.pop %v2997
    %v3029 = vmul.f32 %v3028, %v2997
    %v3030 = vmul.f32 %v3029, %v3028
    %v3031 = vmul.f32 0.5, %v3030
    %v3032 = vsub.f32 1.5, %v3031
    %v3033 = vmul.f32 %v3028, %v3032
    %vm3034 = vweird.f32 %v2997
    %vm3035 = vweird.f32 %v3028
    %vm3036 = vmor %vm3034, %vm3035
    %v3037 = vsel %vm3036, %v3028, %v3033
    %v3038 = vmul.f32 %v2954, %v3007
    %v3039 = vmul.f32 %v2955, %v3017
    %v3040 = vmul.f32 %v2956, %v3027
    %v3041 = vmul.f32 %v2957, %v3037
    %v3042 = vperm.slane %v2918, 0
    %v3043 = vperm.slane %v2919, 0
    %v3044 = vperm.slane %v2920, 0
    %v3045 = vperm.slane %v2921, 0
    %v3046 = vmul.f32 %v3038, %v3042
    %v3047 = vmul.f32 %v3039, %v3043
    %v3048 = vmul.f32 %v3040, %v3044
    %v3049 = vmul.f32 %v3041, %v3045
    %v3050 = vperm.slane %v2918, 1
    %v3051 = vperm.slane %v2919, 1
    %v3052 = vperm.slane %v2920, 1
    %v3053 = vperm.slane %v2921, 1
    %v3054 = vadd.f32 %v3046, %v3050
    %v3055 = vadd.f32 %v3047, %v3051
    %v3056 = vadd.f32 %v3048, %v3052
    %v3057 = vadd.f32 %v3049, %v3053
    %v3058 = vadd.f32 %v3054, %v2154
    %v3059 = vadd.f32 %v3055, %v2155
    %v3060 = vadd.f32 %v3056, %v2156
    %v3061 = vadd.f32 %v3057, %v2157
    %v3062 = vtanh.pop %v3058
    %v3063 = vtanh.pop %v3059
    %v3064 = vtanh.pop %v3060
    %v3065 = vtanh.pop %v3061
    %v3066 = vld [vmem:[#allocation2 + $0xea0] sm:$0xf]
    %v3067 = vld [vmem:[#allocation2 + $0xeb0] sm:$0xf]
    %v3068 = vld [vmem:[#allocation2 + $0xec0] sm:$0xf]
    %v3069 = vld [vmem:[#allocation2 + $0xed0] sm:$0xf]
    %v3070 = vld [vmem:[#allocation2 + $0xee0] sm:$0xf]
    %v3071 = vld [vmem:[#allocation2 + $0xef0] sm:$0xf]
    %v3072 = vld [vmem:[#allocation2 + $0xf00] sm:$0xf]
    %v3073 = vld [vmem:[#allocation2 + $0xf10] sm:$0xf]
    %v3074 = vld [vmem:[#allocation2 + $0xf20] sm:$0xf]
    %v3075 = vld [vmem:[#allocation2 + $0xf30] sm:$0xf]
    %v3076 = vld [vmem:[#allocation2 + $0xf40] sm:$0xf]
    %v3077 = vld [vmem:[#allocation2 + $0xf50] sm:$0xf]
    %v3078 = vld [vmem:[#allocation2 + $0xf60] sm:$0xf]
    %v3079 = vld [vmem:[#allocation2 + $0xf70] sm:$0xf]
    %v3080 = vld [vmem:[#allocation2 + $0xf80] sm:$0xf]
    %v3081 = vld [vmem:[#allocation2 + $0xf90] sm:$0xf]
    %v3082 = vld [vmem:[#allocation2 + $0xfa0] sm:$0xf]
    %v3083 = vld [vmem:[#allocation2 + $0xfb0] sm:$0xf]
    %v3084 = vld [vmem:[#allocation2 + $0xfc0] sm:$0xf]
    %v3085 = vld [vmem:[#allocation2 + $0xfd0] sm:$0xf]
    %v3086 = vld [vmem:[#allocation2 + $0xfe0] sm:$0xf]
    %v3087 = vld [vmem:[#allocation2 + $0xff0] sm:$0xf]
    %v3088 = vld [vmem:[#allocation2 + $0x1000] sm:$0xf]
    %v3089 = vld [vmem:[#allocation2 + $0x1010] sm:$0xf]
    %v3090 = vld [vmem:[#allocation2 + $0x1020] sm:$0xf]
    %v3091 = vld [vmem:[#allocation2 + $0x1030] sm:$0xf]
    %v3092 = vld [vmem:[#allocation2 + $0x1040] sm:$0xf]
    %v3093 = vld [vmem:[#allocation2 + $0x1050] sm:$0xf]
    %v3094 = vld [vmem:[#allocation2 + $0x1060] sm:$0xf]
    %v3095 = vld [vmem:[#allocation2 + $0x1070] sm:$0xf]
    %v3096 = vld [vmem:[#allocation2 + $0x1080] sm:$0xf]
    %v3097 = vld [vmem:[#allocation2 + $0x1090] sm:$0xf]
    %v3098 = vld [vmem:[#allocation2 + $0x10a0] sm:$0xf]
    %v3099 = vld [vmem:[#allocation2 + $0x10b0] sm:$0xf]
    %v3100 = vld [vmem:[#allocation2 + $0x10c0] sm:$0xf]
    %v3101 = vld [vmem:[#allocation2 + $0x10d0] sm:$0xf]
    %v3102 = vld [vmem:[#allocation2 + $0x10e0] sm:$0xf]
    %v3103 = vld [vmem:[#allocation2 + $0x10f0] sm:$0xf]
    %v3104 = vld [vmem:[#allocation2 + $0x1100] sm:$0xf]
    %v3105 = vld [vmem:[#allocation2 + $0x1110] sm:$0xf]
    %v3106 = vld [vmem:[#allocation2 + $0x1120] sm:$0xf]
    %v3107 = vld [vmem:[#allocation2 + $0x1130] sm:$0xf]
    %v3108 = vld [vmem:[#allocation2 + $0x1140] sm:$0xf]
    %v3109 = vld [vmem:[#allocation2 + $0x1150] sm:$0xf]
    %v3110 = vld [vmem:[#allocation2 + $0x1160] sm:$0xf]
    %v3111 = vld [vmem:[#allocation2 + $0x1170] sm:$0xf]
    %v3112 = vld [vmem:[#allocation2 + $0x1180] sm:$0xf]
    %v3113 = vld [vmem:[#allocation2 + $0x1190] sm:$0xf]
    %v3114 = vld [vmem:[#allocation2 + $0x11a0] sm:$0xf]
    %v3115 = vld [vmem:[#allocation2 + $0x11b0] sm:$0xf]
    %v3116 = vld [vmem:[#allocation2 + $0x11c0] sm:$0xf]
    %v3117 = vld [vmem:[#allocation2 + $0x11d0] sm:$0xf]
    %v3118 = vld [vmem:[#allocation2 + $0x11e0] sm:$0xf]
    %v3119 = vld [vmem:[#allocation2 + $0x11f0] sm:$0xf]
    %v3120 = vld [vmem:[#allocation2 + $0x1200] sm:$0xf]
    %v3121 = vld [vmem:[#allocation2 + $0x1210] sm:$0xf]
    %v3122 = vld [vmem:[#allocation2 + $0x1220] sm:$0xf]
    %v3123 = vld [vmem:[#allocation2 + $0x1230] sm:$0xf]
    %v3124 = vld [vmem:[#allocation2 + $0x1240] sm:$0xf]
    %v3125 = vld [vmem:[#allocation2 + $0x1250] sm:$0xf]
    %v3126 = vld [vmem:[#allocation2 + $0x1260] sm:$0xf]
    %v3127 = vld [vmem:[#allocation2 + $0x1270] sm:$0xf]
    %v3128 = vld [vmem:[#allocation2 + $0x1280] sm:$0xf]
    %v3129 = vld [vmem:[#allocation2 + $0x1290] sm:$0xf]
    %v3130 = vld [vmem:[#allocation5 + $0x180] ss:$0 sm:$0xff]
    %v3131 = vpack.c.bf16 %v3062, %v3062
    %v3132 = vpack.c.bf16 %v3063, %v3063
    %v3133 = vpack.c.bf16 %v3064, %v3064
    %v3134 = vpack.c.bf16 %v3065, %v3065
    %v3199 = vunpack.c.l.b16 %v3066
    %v3200 = vunpack.c.l.b16 %v3067
    %v3201 = vunpack.c.l.b16 %v3068
    %v3202 = vunpack.c.l.b16 %v3069
    %v3203 = vunpack.c.l.b16 %v3070
    %v3204 = vunpack.c.l.b16 %v3071
    %v3205 = vunpack.c.l.b16 %v3072
    %v3206 = vunpack.c.l.b16 %v3073
    %v3207 = vunpack.c.l.b16 %v3074
    %v3208 = vunpack.c.l.b16 %v3075
    %v3209 = vunpack.c.l.b16 %v3076
    %v3210 = vunpack.c.l.b16 %v3077
    %v3211 = vunpack.c.l.b16 %v3078
    %v3212 = vunpack.c.l.b16 %v3079
    %v3213 = vunpack.c.l.b16 %v3080
    %v3214 = vunpack.c.l.b16 %v3081
    %v3215 = vunpack.c.l.b16 %v3082
    %v3216 = vunpack.c.l.b16 %v3083
    %v3217 = vunpack.c.l.b16 %v3084
    %v3218 = vunpack.c.l.b16 %v3085
    %v3219 = vunpack.c.l.b16 %v3086
    %v3220 = vunpack.c.l.b16 %v3087
    %v3221 = vunpack.c.l.b16 %v3088
    %v3222 = vunpack.c.l.b16 %v3089
    %v3223 = vunpack.c.l.b16 %v3090
    %v3224 = vunpack.c.l.b16 %v3091
    %v3225 = vunpack.c.l.b16 %v3092
    %v3226 = vunpack.c.l.b16 %v3093
    %v3227 = vunpack.c.l.b16 %v3094
    %v3228 = vunpack.c.l.b16 %v3095
    %v3229 = vunpack.c.l.b16 %v3096
    %v3230 = vunpack.c.l.b16 %v3097
    %v3231 = vunpack.c.l.b16 %v3098
    %v3232 = vunpack.c.l.b16 %v3099
    %v3233 = vunpack.c.l.b16 %v3100
    %v3234 = vunpack.c.l.b16 %v3101
    %v3235 = vunpack.c.l.b16 %v3102
    %v3236 = vunpack.c.l.b16 %v3103
    %v3237 = vunpack.c.l.b16 %v3104
    %v3238 = vunpack.c.l.b16 %v3105
    %v3239 = vunpack.c.l.b16 %v3106
    %v3240 = vunpack.c.l.b16 %v3107
    %v3241 = vunpack.c.l.b16 %v3108
    %v3242 = vunpack.c.l.b16 %v3109
    %v3243 = vunpack.c.l.b16 %v3110
    %v3244 = vunpack.c.l.b16 %v3111
    %v3245 = vunpack.c.l.b16 %v3112
    %v3246 = vunpack.c.l.b16 %v3113
    %v3247 = vunpack.c.l.b16 %v3114
    %v3248 = vunpack.c.l.b16 %v3115
    %v3249 = vunpack.c.l.b16 %v3116
    %v3250 = vunpack.c.l.b16 %v3117
    %v3251 = vunpack.c.l.b16 %v3118
    %v3252 = vunpack.c.l.b16 %v3119
    %v3253 = vunpack.c.l.b16 %v3120
    %v3254 = vunpack.c.l.b16 %v3121
    %v3255 = vunpack.c.l.b16 %v3122
    %v3256 = vunpack.c.l.b16 %v3123
    %v3257 = vunpack.c.l.b16 %v3124
    %v3258 = vunpack.c.l.b16 %v3125
    %v3259 = vunpack.c.l.b16 %v3126
    %v3260 = vunpack.c.l.b16 %v3127
    %v3261 = vunpack.c.l.b16 %v3128
    %v3262 = vunpack.c.l.b16 %v3129
    %v3263 = vpack.c.b16 %v3200, %v3199
    %v3264 = vpack.c.b16 %v3202, %v3201
    %v3265 = vpack.c.b16 %v3204, %v3203
    %v3266 = vpack.c.b16 %v3206, %v3205
    %v3267 = vpack.c.b16 %v3208, %v3207
    %v3268 = vpack.c.b16 %v3210, %v3209
    %v3269 = vpack.c.b16 %v3212, %v3211
    %v3270 = vpack.c.b16 %v3214, %v3213
    %v3271 = vpack.c.b16 %v3216, %v3215
    %v3272 = vpack.c.b16 %v3218, %v3217
    %v3273 = vpack.c.b16 %v3220, %v3219
    %v3274 = vpack.c.b16 %v3222, %v3221
    %v3275 = vpack.c.b16 %v3224, %v3223
    %v3276 = vpack.c.b16 %v3226, %v3225
    %v3277 = vpack.c.b16 %v3228, %v3227
    %v3278 = vpack.c.b16 %v3230, %v3229
    %v3279 = vpack.c.b16 %v3232, %v3231
    %v3280 = vpack.c.b16 %v3234, %v3233
    %v3281 = vpack.c.b16 %v3236, %v3235
    %v3282 = vpack.c.b16 %v3238, %v3237
    %v3283 = vpack.c.b16 %v3240, %v3239
    %v3284 = vpack.c.b16 %v3242, %v3241
    %v3285 = vpack.c.b16 %v3244, %v3243
    %v3286 = vpack.c.b16 %v3246, %v3245
    %v3287 = vpack.c.b16 %v3248, %v3247
    %v3288 = vpack.c.b16 %v3250, %v3249
    %v3289 = vpack.c.b16 %v3252, %v3251
    %v3290 = vpack.c.b16 %v3254, %v3253
    %v3291 = vpack.c.b16 %v3256, %v3255
    %v3292 = vpack.c.b16 %v3258, %v3257
    %v3293 = vpack.c.b16 %v3260, %v3259
    %v3294 = vpack.c.b16 %v3262, %v3261
    %3327 = vmatpush.bf16.msra.mxu0 %v3270
    %3328 = vmatpush.bf16.msra.mxu0 %v3269
    %3329 = vmatpush.bf16.msra.mxu0 %v3268
    %3330 = vmatpush.bf16.msra.mxu0 %v3267
    %3331 = vmatpush.bf16.msra.mxu0 %v3266
    %3332 = vmatpush.bf16.msra.mxu0 %v3265
    %3333 = vmatpush.bf16.msra.mxu0 %v3264
    %3334 = vmatpush.bf16.msra.mxu0 %v3263
    %3335 = vmatmul.bf16.gmra.mxu0 %v3131
    %v3336 = vpop.f32.mrf.mxu0
    %v3337 = vadd.f32 %v3130, %v3336
    %v3338 = vpop.f32.mrf.mxu0
    %3339 = vdwg.mxu0
    %3340 = vmatpush.bf16.msra.mxu0 %v3278
    %3341 = vmatpush.bf16.msra.mxu0 %v3277
    %3342 = vmatpush.bf16.msra.mxu0 %v3276
    %3343 = vmatpush.bf16.msra.mxu0 %v3275
    %3344 = vmatpush.bf16.msra.mxu0 %v3274
    %3345 = vmatpush.bf16.msra.mxu0 %v3273
    %3346 = vmatpush.bf16.msra.mxu0 %v3272
    %3347 = vmatpush.bf16.msra.mxu0 %v3271
    %3348 = vmatmul.bf16.gmra.mxu0 %v3132
    %v3349 = vpop.f32.mrf.mxu0
    %v3350 = vadd.f32 %v3337, %v3349
    %v3351 = vpop.f32.mrf.mxu0
    %3352 = vdwg.mxu0
    %3353 = vmatpush.bf16.msra.mxu0 %v3286
    %3354 = vmatpush.bf16.msra.mxu0 %v3285
    %3355 = vmatpush.bf16.msra.mxu0 %v3284
    %3356 = vmatpush.bf16.msra.mxu0 %v3283
    %3357 = vmatpush.bf16.msra.mxu0 %v3282
    %3358 = vmatpush.bf16.msra.mxu0 %v3281
    %3359 = vmatpush.bf16.msra.mxu0 %v3280
    %3360 = vmatpush.bf16.msra.mxu0 %v3279
    %3361 = vmatmul.bf16.gmra.mxu0 %v3133
    %v3362 = vpop.f32.mrf.mxu0
    %v3363 = vadd.f32 %v3350, %v3362
    %v3364 = vpop.f32.mrf.mxu0
    %3365 = vdwg.mxu0
    %3366 = vmatpush.bf16.msra.mxu0 %v3294
    %3367 = vmatpush.bf16.msra.mxu0 %v3293
    %3368 = vmatpush.bf16.msra.mxu0 %v3292
    %3369 = vmatpush.bf16.msra.mxu0 %v3291
    %3370 = vmatpush.bf16.msra.mxu0 %v3290
    %3371 = vmatpush.bf16.msra.mxu0 %v3289
    %3372 = vmatpush.bf16.msra.mxu0 %v3288
    %3373 = vmatpush.bf16.msra.mxu0 %v3287
    %3374 = vmatmul.bf16.gmra.mxu0 %v3134
    %v3375 = vpop.f32.mrf.mxu0
    %v3376 = vadd.f32 %v3363, %v3375
    %v3377 = vpop.f32.mrf.mxu0
    %3378 = vdwg.mxu0
    %v3379 = vtanh.pop %v3376
    %3380 = vst [vmem:[#allocation7] sm:$0x3] %v3379
    // Predicated region
    $region22: #{forward.1} parent=1 // pred_check
      _
    $region23: #{forward.1} parent=1 // pred_check_branch
      %3382 = sbr.rel (0) target = $region25
    $region24: #{forward.1} parent=1 // pred_region
      %3384 = vsyncadd [#allocation4], 0
      %s3386 = sshll.u32 [#allocation7], 4
      %s3387 = int_to_ptr.vmem [resolvable:$true] %s3386
      %s3388 = sshll.u32 %s3, 4
      %s3389 = int_to_ptr.hbm [resolvable:$true] %s3388
      %3391 = dma.vmem_to_hbm [thread:$0]  %s3387, 32, %s3389, [#allocation4]
    $region25: #{forward.1} parent=1 // pred_fallthru
      _
    // Predicated region
    $region26: #{forward.1} parent=1 // pred_check
      _
    $region27: #{forward.1} parent=1 // pred_check_branch
      %3393 = sbr.rel (0) target = $region29
    $region28: #{forward.1} parent=1 // pred_region
      %3395 = dma.done [#allocation4], 32
    $region29: #{forward.1} parent=1 // pred_fallthru
      _
    %3396 = vsyncpa [#allocation3], 1
    %3397 = vsyncpa [#allocation6], 1
    %3398 = vsyncpa [#allocation4], 1

</llo_original>
